<compile_context>
chip_gen: v6e
topology: v6e:2x2x1
jax: 0.10.0
libtpu: 0.0.40
codegen_flags: <defaults>
</compile_context>

<pallas_src>
import functools

import jax
import jax.numpy as jnp
from jax import lax
from jax.experimental import pallas as pl
from jax.experimental.pallas import tpu as pltpu

ALPHA_LEAKY = 0.2
NEG_BIG = -9000000000000000.0
EPS_PROJ = 0.1


def _round8(n):
    return ((n + 7) // 8) * 8


def _mm(a, b):
    """a @ b on the MXU, default precision (1 bf16 pass), f32 accumulation."""
    return lax.dot_general(a, b, (((1,), (0,)), ((), ())),
                           preferred_element_type=jnp.float32)


def _vmem():
    return pl.BlockSpec(memory_space=pltpu.MemorySpace.VMEM)


# ----------------------------- fused SAN kernel ----------------------------- #

def _san_kernel(z_ref, b_ref, w_ref, av_ref, out_ref, *,
                n0, n1, n2, in_size, out_size, k, alpha,
                z_off, b_off, w_off):
    del out_size  # implicit in the weight slab width
    # ---- unpack the packed slabs (static, 8-aligned row offsets) ----
    z0 = z_ref[z_off[0]:z_off[0] + n0, :]
    z1 = z_ref[z_off[1]:z_off[1] + n1, :]
    z2 = z_ref[z_off[2]:z_off[2] + n2, :]

    b1 = b_ref[b_off[0]:b_off[0] + n0, 0:n1]
    b1t = b_ref[b_off[1]:b_off[1] + n1, 0:n0]
    b2 = b_ref[b_off[2]:b_off[2] + n1, 0:n2]
    b2t = b_ref[b_off[3]:b_off[3] + n2, 0:n1]

    wstk0 = w_ref[w_off[0]:w_off[0] + (2 * k + 1) * in_size, :]
    wstk1 = w_ref[w_off[1]:w_off[1] + (3 * k + 1) * in_size, :]
    wstk2 = w_ref[w_off[2]:w_off[2] + (2 * k + 1) * in_size, :]

    av = av_ref[...]          # (14, in): rows 0..6 = v1 per map, rows 7..13 = v2

    # ---- Hodge Laplacians, all resident in VMEM ----
    l0 = _mm(b1, b1t)         # (n0, n0)
    l1d = _mm(b1t, b1)        # (n1, n1)
    l1u = _mm(b2, b2t)        # (n1, n1)
    l1 = l1d + l1u
    l2 = _mm(b2t, b2)         # (n2, n2)

    b1t_z0 = _mm(b1t, z0)     # shared by l1_2 attention and z1 second term
    b2t_z1 = _mm(b2t, z1)     # shared by l2_2 attention and z2 second term

    def attention(idx, x, L):
        # folded score: e = x@v1 + (x@v2)^T with v = W_flat @ att precomputed
        v1 = av[idx:idx + 1, :]                                 # (1, in)
        v2 = av[7 + idx:8 + idx, :]                             # (1, in)
        e1 = jnp.sum(x * v1, axis=1, keepdims=True)             # (N, 1)  VPU
        e2t = lax.dot_general(v2, x, (((1,), (1,)), ((), ())),
                              preferred_element_type=jnp.float32)  # (1, N)
        e = e1 + e2t                                            # (N, N)
        e = jnp.where(e > 0, e, alpha * e)                      # leaky relu
        e = jnp.where(L != 0, e, jnp.float32(NEG_BIG))          # support mask
        m = jnp.max(e, axis=1, keepdims=True)
        p = jnp.exp(e - m)
        den = jnp.sum(p, axis=1, keepdims=True)
        return p * pl.reciprocal(den, approx=True)              # EUP divide
        # TODO(synk): training-mode F.dropout on the attention map (eval: identity)

    a01 = attention(0, z0, l0)
    a02 = attention(1, z0, l0)
    a11 = attention(2, z1, l1d)
    a12 = attention(3, b1t_z0, l1d)
    a13 = attention(4, z1, l1u)
    # att_l1_4 skipped: it only feeds compute_z1's fourth_term, which the
    # reference computes but never adds to the output.
    a21 = attention(5, z2, l2)
    a22 = attention(6, b2t_z1, l2)

    def hops(A, x0, n):
        """[x0, A@x0, A^2@x0, ...] (n blocks), each (N, in), carried incrementally."""
        out = [x0]
        for _ in range(n - 1):
            out.append(_mm(A, out[-1]))
        return out

    def harm(L, z):
        # (I - eps*L)^2 @ z applied to the features: no eye, no matrix square
        y = z - EPS_PROJ * _mm(L, z)
        return y - EPS_PROJ * _mm(L, y)

    def sigmoid(x):
        return 0.5 * (jnp.tanh(0.5 * x) + 1.0)                  # EUP tanh

    # z0': [ z0, a01@z0, ... | b1@z1, a02@(b1@z1), ... | harm ] @ [W; A; Wh0]
    feats0 = hops(a01, z0, k) + hops(a02, _mm(b1, z1), k) + [harm(l0, z0)]
    out0 = sigmoid(_mm(jnp.concatenate(feats0, axis=1), wstk0))

    # z1': powers start at 1 -> seed each chain with one application
    feats1 = (hops(a11, _mm(a11, z1), k)
              + hops(a12, _mm(a12, b1t_z0), k)
              + hops(a13, _mm(a13, z1), k)
              + [harm(l1, z1)])
    out1 = sigmoid(_mm(jnp.concatenate(feats1, axis=1), wstk1))

    # z2': powers start at 1; weight stack is [W0..; R0, D1..; Wh0] (reference quirk)
    feats2 = (hops(a21, _mm(a21, z2), k)
              + hops(a22, _mm(a22, b2t_z1), k)
              + [harm(l2, z2)])
    out2 = sigmoid(_mm(jnp.concatenate(feats2, axis=1), wstk2))

    out_ref[z_off[0]:z_off[0] + n0, :] = out0
    out_ref[z_off[1]:z_off[1] + n1, :] = out1
    out_ref[z_off[2]:z_off[2] + n2, :] = out2


# ------------------------------- SAN forward -------------------------------- #

def san_forward(params, z0, z1, z2, b1, b2, *, k, out_size, alpha=ALPHA_LEAKY):
    f32 = lambda x: jnp.asarray(x, dtype=jnp.float32)
    z0, z1, z2, b1, b2 = map(f32, (z0, z1, z2, b1, b2))
    n0, n1, n2 = z0.shape[0], z1.shape[0], z2.shape[0]
    in_size = z0.shape[1]
    W, A, R, D, Wh = (f32(params[nm]) for nm in ("W", "A", "R", "D", "Wh"))

    m0, m1, m2 = _round8(n0), _round8(n1), _round8(n2)

    def padr(x, rows):
        return jnp.pad(x, ((0, rows - x.shape[0]), (0, 0)))

    def padrc(x, rows, cols):
        return jnp.pad(x, ((0, rows - x.shape[0]), (0, cols - x.shape[1])))

    # slab 1: node/edge/triangle features, row-stacked at 8-aligned offsets
    z_off = (0, m0, m0 + m1)
    z_slab = jnp.concatenate([padr(z0, m0), padr(z1, m1), padr(z2, m2)], axis=0)

    # slab 2: boundary maps + transposes, padded to a common lane width
    nw = max(n0, n1, n2)
    b_slab = jnp.concatenate([padrc(b1, m0, nw), padrc(b1.T, m1, nw),
                              padrc(b2, m1, nw), padrc(b2.T, m2, nw)], axis=0)
    b_off = (0, m0, m0 + m1, m0 + 2 * m1)

    # slab 3: row-stacked weight slabs (one per z-level), so every per-hop sum
    # + harmonic term becomes a single (N, n_blocks*in) @ (n_blocks*in, out) dot
    W_rows = W.reshape(k * in_size, out_size)
    A_rows = A.reshape(k * in_size, out_size)
    Rw_rows = R.reshape(k * in_size, out_size)
    RD_rows = jnp.concatenate([R[0]] + [D[j] for j in range(1, k)], axis=0)  # ref quirk
    wh0 = Wh[0]
    stack0 = jnp.concatenate([W_rows, A_rows, wh0], axis=0)            # (2k+1)*in
    stack1 = jnp.concatenate([W_rows, A_rows, Rw_rows, wh0], axis=0)   # (3k+1)*in
    stack2 = jnp.concatenate([W_rows, RD_rows, wh0], axis=0)           # (2k+1)*in
    s0, s1, s2 = (_round8(s.shape[0]) for s in (stack0, stack1, stack2))
    w_slab = jnp.concatenate([padr(stack0, s0), padr(stack1, s1), padr(stack2, s2)],
                             axis=0)
    w_off = (0, s0, s0 + s1)

    # slab 4: folded attention vectors v = W_flat @ att, so the score is x @ v
    F = out_size * k
    fam = {"W": W, "A": A, "R": R, "D": D}
    att_cfg = (("att_l0_1", "W"), ("att_l0_2", "A"), ("att_l1_1", "W"),
               ("att_l1_2", "A"), ("att_l1_3", "R"), ("att_l2_1", "R"),
               ("att_l2_2", "D"))
    v1s, v2s = [], []
    for att_name, fam_name in att_cfg:
        wflat = fam[fam_name].transpose(1, 0, 2).reshape(in_size, F)  # cat([W_j],1)
        a = f32(params[att_name])
        v1s.append(wflat @ a[:F, 0])
        v2s.append(wflat @ a[F:, 0])
    av = jnp.stack(v1s + v2s, axis=0)                                 # (14, in)

    kernel = functools.partial(
        _san_kernel, n0=n0, n1=n1, n2=n2, in_size=in_size, out_size=out_size,
        k=k, alpha=alpha, z_off=z_off, b_off=b_off, w_off=w_off)

    out = pl.pallas_call(
        kernel,
        out_shape=jax.ShapeDtypeStruct((m0 + m1 + m2, out_size), jnp.float32),
        in_specs=[_vmem(), _vmem(), _vmem(), _vmem()],
        out_specs=_vmem(),
    )(z_slab, b_slab, w_slab, av)
    # TODO(synk): on v7x, split the independent z0'/z1'/z2' branches across the two
    # TensorCores (grid + dimension_semantics, or tile the (n1,n1) maps flash-style)
    # once per-branch work exceeds a few us / the maps no longer fit 64 MiB VMEM;
    # at these sizes one fused grid-less program is fastest on v5e/v6e/v7x.

    return (out[0:n0], out[m0:m0 + n1], out[m0 + m1:m0 + m1 + n2])


# --------------------------- plain-JAX reference ---------------------------- #

def ref_forward(params, z0, z1, z2, b1, b2, *, k, out_size, alpha=ALPHA_LEAKY):
    W, A, R, D, Wh = params["W"], params["A"], params["R"], params["D"], params["Wh"]
    leaky = lambda x: jnp.where(x > 0, x, alpha * x)

    l0 = b1 @ b1.T
    l1_d = b1.T @ b1
    l1_u = b2 @ b2.T
    l1 = l1_d + l1_u
    l2 = b2.T @ b2

    def E_f(X, Wk, L, attr, b=None, t=False):
        if b is not None:
            X = (b.T if t else b) @ X
        X_f = jnp.concatenate([X @ Wk[j] for j in range(k)], axis=1)
        E = leaky(X_f @ attr[:out_size * k, :] + (X_f @ attr[out_size * k:, :]).T)
        E = jnp.where(L != 0, E, NEG_BIG)
        return jax.nn.softmax(E, axis=1)

    l0_1 = E_f(z0, W, l0, params["att_l0_1"])
    l0_2 = E_f(z0, A, l0, params["att_l0_2"])
    l1_1 = E_f(z1, W, l1_d, params["att_l1_1"])
    l1_2 = E_f(z0, A, l1_d, params["att_l1_2"], b1, t=True)
    l1_3 = E_f(z1, R, l1_u, params["att_l1_3"])
    l1_4 = E_f(z2, D, l1_u, params["att_l1_4"], b2)
    l2_1 = E_f(z2, R, l2, params["att_l2_1"])
    l2_2 = E_f(z1, D, l2, params["att_l2_2"], b2, t=True)

    def proj(L, eps=0.1, kappa=1):
        P = jnp.eye(L.shape[0], dtype=jnp.float32) - eps * L
        for _ in range(kappa):
            P = P @ P
        return P

    mp = jnp.linalg.matrix_power

    # z0
    first = second = 0.0
    for j in range(k):
        first = first + mp(l0_1, j) @ z0 @ W[j]
        second = second + (b1.T @ mp(l0_2, j).T).T @ z1 @ A[j]
    z0p = jax.nn.sigmoid(first + second + proj(l0) @ z0 @ Wh[0])

    # z1
    first = second = third = 0.0
    for j in range(k):
        first = first + mp(l1_1, j + 1) @ z1 @ W[j]
        second = second + (b1 @ mp(l1_2, j + 1).T).T @ z0 @ A[j]
        third = third + mp(l1_3, j + 1) @ z1 @ R[j]
        _ = (b2.T @ mp(l1_4, j + 1).T).T @ z2 @ D[j]  # unused, as in reference
    z1p = jax.nn.sigmoid(first + second + third + proj(l1) @ z1 @ Wh[0])

    # z2
    first = second = 0.0
    for j in range(k):
        if j == 0:
            first = l2_1 @ z2 @ W[0]
            second = (b2 @ l2_2.T).T @ z1 @ R[0]
        else:
            first = first + mp(l2_1, j + 1) @ z2 @ W[j]
            second = second + (b2 @ mp(l2_2, j + 1).T).T @ z1 @ D[j]
    z2p = jax.nn.sigmoid(first + second + proj(l2) @ z2 @ Wh[0])

    return z0p, z1p, z2p


# ------------------------------ parameter init ------------------------------ #

def init_params(key, in_size, out_size, k):
    names3 = ["W", "A", "R", "D", "Wh"]
    att_names = ["att_l0_1", "att_l0_2", "att_l1_1", "att_l1_2",
                 "att_l1_3", "att_l1_4", "att_l2_1", "att_l2_2"]
    keys = jax.random.split(key, len(names3) + len(att_names))

    def xavier(kk, shape):
        if len(shape) == 3:  # torch fan convention for (k, in, out)
            fan_in, fan_out = shape[1] * shape[2], shape[0] * shape[2]
        else:
            fan_in, fan_out = shape[1], shape[0]
        bound = (6.0 / (fan_in + fan_out)) ** 0.5
        return jax.random.uniform(kk, shape, jnp.float32, -bound, bound)

    params = {}
    for i, n in enumerate(names3):
        params[n] = xavier(keys[i], (k, in_size, out_size))
    for i, n in enumerate(att_names):
        params[n] = xavier(keys[len(names3) + i], (2 * out_size * k, 1))
    return params


# ----------------------------------- main ------------------------------------ #

if __name__ == "__main__":
    in_size, out_size, k = 4, 4, 2
    n_nodes, n_edges, n_tri = 8, 12, 4

    key = jax.random.PRNGKey(0)
    k0, k1, k2, k3, k4, kp = jax.random.split(key, 6)
    z0 = jax.random.normal(k0, (n_nodes, in_size), jnp.float32)
    z1 = jax.random.normal(k1, (n_edges, in_size), jnp.float32)
    z2 = jax.random.normal(k2, (n_tri, in_size), jnp.float32)
    # deterministic {-1, 0, 1} incidence-like boundary maps (dense)
    b1 = jax.random.randint(k3, (n_nodes, n_edges), -1, 2).astype(jnp.float32)
    b2 = jax.random.randint(k4, (n_edges, n_tri), -1, 2).astype(jnp.float32)

    params = init_params(kp, in_size, out_size, k)

    fwd = jax.jit(functools.partial(san_forward, k=k, out_size=out_size))
    z0p, z1p, z2p = fwd(params, z0, z1, z2, b1, b2)
    jax.block_until_ready((z0p, z1p, z2p))

    assert z0p.shape == (n_nodes, out_size)
    assert z1p.shape == (n_edges, out_size)
    assert z2p.shape == (n_tri, out_size)

    # Reference at "highest" matmul precision; the kernel runs at default
    # (single bf16 MXU pass + f32 accumulation), so allow bf16-level tolerance
    # on the sigmoid outputs.
    with jax.default_matmul_precision("highest"):
        r0, r1, r2 = ref_forward(params, z0, z1, z2, b1, b2, k=k, out_size=out_size)
    tol = 2e-2
    assert jnp.allclose(z0p, r0, atol=tol, rtol=tol), "z0 mismatch"
    assert jnp.allclose(z1p, r1, atol=tol, rtol=tol), "z1 mismatch"
    assert jnp.allclose(z2p, r2, atol=tol, rtol=tol), "z2 mismatch"

    print("KERNEL_OK")
</pallas_src>

<mosaic_0001>
module attributes {stable_mosaic.version = 11 : i64} {
  func.func @_san_kernel(%arg0: memref<32x4xf32, #tpu.memory_space<vmem>>, %arg1: memref<48x12xf32, #tpu.memory_space<vmem>>, %arg2: memref<80x4xf32, #tpu.memory_space<vmem>>, %arg3: memref<14x4xf32, #tpu.memory_space<vmem>>, %arg4: memref<32x4xf32, #tpu.memory_space<vmem>>) attributes {dimension_semantics = [], scalar_prefetch = 0 : i64, scratch_operands = 0 : i64, tpu.core_type = #tpu.core_type<tc>} {
    %c0 = arith.constant 0 : index
    %c0_0 = arith.constant 0 : index
    %0 = vector.load %arg0[%c0, %c0_0] : memref<32x4xf32, #tpu.memory_space<vmem>>, vector<8x4xf32>
    %c8 = arith.constant 8 : index
    %c0_1 = arith.constant 0 : index
    %1 = vector.load %arg0[%c8, %c0_1] : memref<32x4xf32, #tpu.memory_space<vmem>>, vector<12x4xf32>
    %c24 = arith.constant 24 : index
    %c0_2 = arith.constant 0 : index
    %2 = vector.load %arg0[%c24, %c0_2] : memref<32x4xf32, #tpu.memory_space<vmem>>, vector<4x4xf32>
    %c0_3 = arith.constant 0 : index
    %c0_4 = arith.constant 0 : index
    %3 = vector.load %arg1[%c0_3, %c0_4] : memref<48x12xf32, #tpu.memory_space<vmem>>, vector<8x12xf32>
    %c8_5 = arith.constant 8 : index
    %c0_6 = arith.constant 0 : index
    %4 = vector.load %arg1[%c8_5, %c0_6] : memref<48x12xf32, #tpu.memory_space<vmem>>, vector<12x8xf32>
    %c24_7 = arith.constant 24 : index
    %c0_8 = arith.constant 0 : index
    %5 = vector.load %arg1[%c24_7, %c0_8] : memref<48x12xf32, #tpu.memory_space<vmem>>, vector<12x4xf32>
    %c40 = arith.constant 40 : index
    %c0_9 = arith.constant 0 : index
    %6 = vector.load %arg1[%c40, %c0_9] : memref<48x12xf32, #tpu.memory_space<vmem>>, vector<4x12xf32>
    %c0_10 = arith.constant 0 : index
    %c0_11 = arith.constant 0 : index
    %7 = vector.load %arg2[%c0_10, %c0_11] : memref<80x4xf32, #tpu.memory_space<vmem>>, vector<20x4xf32>
    %c24_12 = arith.constant 24 : index
    %c0_13 = arith.constant 0 : index
    %8 = vector.load %arg2[%c24_12, %c0_13] : memref<80x4xf32, #tpu.memory_space<vmem>>, vector<28x4xf32>
    %c56 = arith.constant 56 : index
    %c0_14 = arith.constant 0 : index
    %9 = vector.load %arg2[%c56, %c0_14] : memref<80x4xf32, #tpu.memory_space<vmem>>, vector<20x4xf32>
    %c0_15 = arith.constant 0 : index
    %c0_16 = arith.constant 0 : index
    %10 = vector.load %arg3[%c0_15, %c0_16] : memref<14x4xf32, #tpu.memory_space<vmem>>, vector<14x4xf32>
    %cst = arith.constant dense<0.000000e+00> : vector<8x8xf32>
    %11 = tpu.matmul %3, %4, %cst {dimension_numbers = #tpu.dot_dimension_numbers<[1], [0], [0], [1], [0, 0, 1, 1], [], []>} : vector<8x12xf32>, vector<12x8xf32>, vector<8x8xf32> -> vector<8x8xf32>
    %cst_17 = arith.constant dense<0.000000e+00> : vector<12x12xf32>
    %12 = tpu.matmul %4, %3, %cst_17 {dimension_numbers = #tpu.dot_dimension_numbers<[1], [0], [0], [1], [0, 0, 1, 1], [], []>} : vector<12x8xf32>, vector<8x12xf32>, vector<12x12xf32> -> vector<12x12xf32>
    %cst_18 = arith.constant dense<0.000000e+00> : vector<12x12xf32>
    %13 = tpu.matmul %5, %6, %cst_18 {dimension_numbers = #tpu.dot_dimension_numbers<[1], [0], [0], [1], [0, 0, 1, 1], [], []>} : vector<12x4xf32>, vector<4x12xf32>, vector<12x12xf32> -> vector<12x12xf32>
    %14 = arith.addf %12, %13 : vector<12x12xf32>
    %cst_19 = arith.constant dense<0.000000e+00> : vector<4x4xf32>
    %15 = tpu.matmul %6, %5, %cst_19 {dimension_numbers = #tpu.dot_dimension_numbers<[1], [0], [0], [1], [0, 0, 1, 1], [], []>} : vector<4x12xf32>, vector<12x4xf32>, vector<4x4xf32> -> vector<4x4xf32>
    %cst_20 = arith.constant dense<0.000000e+00> : vector<12x4xf32>
    %16 = tpu.matmul %4, %0, %cst_20 {dimension_numbers = #tpu.dot_dimension_numbers<[1], [0], [0], [1], [0, 0, 1, 1], [], []>} : vector<12x8xf32>, vector<8x4xf32>, vector<12x4xf32> -> vector<12x4xf32>
    %cst_21 = arith.constant dense<0.000000e+00> : vector<4x4xf32>
    %17 = tpu.matmul %6, %1, %cst_21 {dimension_numbers = #tpu.dot_dimension_numbers<[1], [0], [0], [1], [0, 0, 1, 1], [], []>} : vector<4x12xf32>, vector<12x4xf32>, vector<4x4xf32> -> vector<4x4xf32>
    %18 = vector.extract_strided_slice %10 {offsets = [0, 0], sizes = [1, 4], strides = [1, 1]} : vector<14x4xf32> to vector<1x4xf32>
    %19 = vector.extract_strided_slice %10 {offsets = [7, 0], sizes = [1, 4], strides = [1, 1]} : vector<14x4xf32> to vector<1x4xf32>
    %20 = vector.broadcast %18 : vector<1x4xf32> to vector<8x4xf32>
    %21 = arith.mulf %0, %20 : vector<8x4xf32>
    %cst_22 = arith.constant dense<0.000000e+00> : vector<8xf32>
    %22 = vector.multi_reduction <add>, %21, %cst_22 [1] : vector<8x4xf32> to vector<8xf32>
    %23 = vector.shape_cast %22 : vector<8xf32> to vector<8x1xf32>
    %cst_23 = arith.constant dense<0.000000e+00> : vector<1x8xf32>
    %24 = tpu.matmul %19, %0, %cst_23 {dimension_numbers = #tpu.dot_dimension_numbers<[1], [1], [0], [0], [0, 0, 1, 0], [], []>} : vector<1x4xf32>, vector<8x4xf32>, vector<1x8xf32> -> vector<1x8xf32>
    %25 = vector.broadcast %23 : vector<8x1xf32> to vector<8x8xf32>
    %26 = vector.broadcast %24 : vector<1x8xf32> to vector<8x8xf32>
    %27 = arith.addf %25, %26 : vector<8x8xf32>
    %cst_24 = arith.constant 0.000000e+00 : f32
    %28 = vector.broadcast %cst_24 : f32 to vector<8x8xf32>
    %29 = arith.cmpf ogt, %27, %28 : vector<8x8xf32>
    %cst_25 = arith.constant 2.000000e-01 : f32
    %30 = vector.broadcast %cst_25 : f32 to vector<8x8xf32>
    %31 = arith.mulf %30, %27 : vector<8x8xf32>
    %32 = arith.select %29, %27, %31 : vector<8x8xi1>, vector<8x8xf32>
    %cst_26 = arith.constant 0.000000e+00 : f32
    %33 = vector.broadcast %cst_26 : f32 to vector<8x8xf32>
    %34 = arith.cmpf one, %11, %33 : vector<8x8xf32>
    %cst_27 = arith.constant -9.000000e+15 : f32
    %35 = vector.broadcast %cst_27 : f32 to vector<8x8xf32>
    %36 = arith.select %34, %32, %35 : vector<8x8xi1>, vector<8x8xf32>
    %cst_28 = arith.constant dense<0xFF800000> : vector<8xf32>
    %37 = vector.multi_reduction <maximumf>, %36, %cst_28 [1] : vector<8x8xf32> to vector<8xf32>
    %38 = vector.shape_cast %37 : vector<8xf32> to vector<8x1xf32>
    %39 = vector.broadcast %38 : vector<8x1xf32> to vector<8x8xf32>
    %40 = arith.subf %36, %39 : vector<8x8xf32>
    %41 = math.exp %40 : vector<8x8xf32>
    %cst_29 = arith.constant dense<0.000000e+00> : vector<8xf32>
    %42 = vector.multi_reduction <add>, %41, %cst_29 [1] : vector<8x8xf32> to vector<8xf32>
    %43 = vector.shape_cast %42 : vector<8xf32> to vector<8x1xf32>
    %44 = tpu.reciprocal %43 {approx = true} : vector<8x1xf32> -> vector<8x1xf32>
    %45 = vector.broadcast %44 : vector<8x1xf32> to vector<8x8xf32>
    %46 = arith.mulf %41, %45 : vector<8x8xf32>
    %47 = vector.extract_strided_slice %10 {offsets = [1, 0], sizes = [1, 4], strides = [1, 1]} : vector<14x4xf32> to vector<1x4xf32>
    %48 = vector.extract_strided_slice %10 {offsets = [8, 0], sizes = [1, 4], strides = [1, 1]} : vector<14x4xf32> to vector<1x4xf32>
    %49 = vector.broadcast %47 : vector<1x4xf32> to vector<8x4xf32>
    %50 = arith.mulf %0, %49 : vector<8x4xf32>
    %cst_30 = arith.constant dense<0.000000e+00> : vector<8xf32>
    %51 = vector.multi_reduction <add>, %50, %cst_30 [1] : vector<8x4xf32> to vector<8xf32>
    %52 = vector.shape_cast %51 : vector<8xf32> to vector<8x1xf32>
    %cst_31 = arith.constant dense<0.000000e+00> : vector<1x8xf32>
    %53 = tpu.matmul %48, %0, %cst_31 {dimension_numbers = #tpu.dot_dimension_numbers<[1], [1], [0], [0], [0, 0, 1, 0], [], []>} : vector<1x4xf32>, vector<8x4xf32>, vector<1x8xf32> -> vector<1x8xf32>
    %54 = vector.broadcast %52 : vector<8x1xf32> to vector<8x8xf32>
    %55 = vector.broadcast %53 : vector<1x8xf32> to vector<8x8xf32>
    %56 = arith.addf %54, %55 : vector<8x8xf32>
    %cst_32 = arith.constant 0.000000e+00 : f32
    %57 = vector.broadcast %cst_32 : f32 to vector<8x8xf32>
    %58 = arith.cmpf ogt, %56, %57 : vector<8x8xf32>
    %cst_33 = arith.constant 2.000000e-01 : f32
    %59 = vector.broadcast %cst_33 : f32 to vector<8x8xf32>
    %60 = arith.mulf %59, %56 : vector<8x8xf32>
    %61 = arith.select %58, %56, %60 : vector<8x8xi1>, vector<8x8xf32>
    %cst_34 = arith.constant 0.000000e+00 : f32
    %62 = vector.broadcast %cst_34 : f32 to vector<8x8xf32>
    %63 = arith.cmpf one, %11, %62 : vector<8x8xf32>
    %cst_35 = arith.constant -9.000000e+15 : f32
    %64 = vector.broadcast %cst_35 : f32 to vector<8x8xf32>
    %65 = arith.select %63, %61, %64 : vector<8x8xi1>, vector<8x8xf32>
    %cst_36 = arith.constant dense<0xFF800000> : vector<8xf32>
    %66 = vector.multi_reduction <maximumf>, %65, %cst_36 [1] : vector<8x8xf32> to vector<8xf32>
    %67 = vector.shape_cast %66 : vector<8xf32> to vector<8x1xf32>
    %68 = vector.broadcast %67 : vector<8x1xf32> to vector<8x8xf32>
    %69 = arith.subf %65, %68 : vector<8x8xf32>
    %70 = math.exp %69 : vector<8x8xf32>
    %cst_37 = arith.constant dense<0.000000e+00> : vector<8xf32>
    %71 = vector.multi_reduction <add>, %70, %cst_37 [1] : vector<8x8xf32> to vector<8xf32>
    %72 = vector.shape_cast %71 : vector<8xf32> to vector<8x1xf32>
    %73 = tpu.reciprocal %72 {approx = true} : vector<8x1xf32> -> vector<8x1xf32>
    %74 = vector.broadcast %73 : vector<8x1xf32> to vector<8x8xf32>
    %75 = arith.mulf %70, %74 : vector<8x8xf32>
    %76 = vector.extract_strided_slice %10 {offsets = [2, 0], sizes = [1, 4], strides = [1, 1]} : vector<14x4xf32> to vector<1x4xf32>
    %77 = vector.extract_strided_slice %10 {offsets = [9, 0], sizes = [1, 4], strides = [1, 1]} : vector<14x4xf32> to vector<1x4xf32>
    %78 = vector.broadcast %76 : vector<1x4xf32> to vector<12x4xf32>
    %79 = arith.mulf %1, %78 : vector<12x4xf32>
    %cst_38 = arith.constant dense<0.000000e+00> : vector<12xf32>
    %80 = vector.multi_reduction <add>, %79, %cst_38 [1] : vector<12x4xf32> to vector<12xf32>
    %81 = vector.shape_cast %80 : vector<12xf32> to vector<12x1xf32>
    %cst_39 = arith.constant dense<0.000000e+00> : vector<1x12xf32>
    %82 = tpu.matmul %77, %1, %cst_39 {dimension_numbers = #tpu.dot_dimension_numbers<[1], [1], [0], [0], [0, 0, 1, 0], [], []>} : vector<1x4xf32>, vector<12x4xf32>, vector<1x12xf32> -> vector<1x12xf32>
    %83 = vector.broadcast %81 : vector<12x1xf32> to vector<12x12xf32>
    %84 = vector.broadcast %82 : vector<1x12xf32> to vector<12x12xf32>
    %85 = arith.addf %83, %84 : vector<12x12xf32>
    %cst_40 = arith.constant 0.000000e+00 : f32
    %86 = vector.broadcast %cst_40 : f32 to vector<12x12xf32>
    %87 = arith.cmpf ogt, %85, %86 : vector<12x12xf32>
    %cst_41 = arith.constant 2.000000e-01 : f32
    %88 = vector.broadcast %cst_41 : f32 to vector<12x12xf32>
    %89 = arith.mulf %88, %85 : vector<12x12xf32>
    %90 = arith.select %87, %85, %89 : vector<12x12xi1>, vector<12x12xf32>
    %cst_42 = arith.constant 0.000000e+00 : f32
    %91 = vector.broadcast %cst_42 : f32 to vector<12x12xf32>
    %92 = arith.cmpf one, %12, %91 : vector<12x12xf32>
    %cst_43 = arith.constant -9.000000e+15 : f32
    %93 = vector.broadcast %cst_43 : f32 to vector<12x12xf32>
    %94 = arith.select %92, %90, %93 : vector<12x12xi1>, vector<12x12xf32>
    %cst_44 = arith.constant dense<0xFF800000> : vector<12xf32>
    %95 = vector.multi_reduction <maximumf>, %94, %cst_44 [1] : vector<12x12xf32> to vector<12xf32>
    %96 = vector.shape_cast %95 : vector<12xf32> to vector<12x1xf32>
    %97 = vector.broadcast %96 : vector<12x1xf32> to vector<12x12xf32>
    %98 = arith.subf %94, %97 : vector<12x12xf32>
    %99 = math.exp %98 : vector<12x12xf32>
    %cst_45 = arith.constant dense<0.000000e+00> : vector<12xf32>
    %100 = vector.multi_reduction <add>, %99, %cst_45 [1] : vector<12x12xf32> to vector<12xf32>
    %101 = vector.shape_cast %100 : vector<12xf32> to vector<12x1xf32>
    %102 = tpu.reciprocal %101 {approx = true} : vector<12x1xf32> -> vector<12x1xf32>
    %103 = vector.broadcast %102 : vector<12x1xf32> to vector<12x12xf32>
    %104 = arith.mulf %99, %103 : vector<12x12xf32>
    %105 = vector.extract_strided_slice %10 {offsets = [3, 0], sizes = [1, 4], strides = [1, 1]} : vector<14x4xf32> to vector<1x4xf32>
    %106 = vector.extract_strided_slice %10 {offsets = [10, 0], sizes = [1, 4], strides = [1, 1]} : vector<14x4xf32> to vector<1x4xf32>
    %107 = vector.broadcast %105 : vector<1x4xf32> to vector<12x4xf32>
    %108 = arith.mulf %16, %107 : vector<12x4xf32>
    %cst_46 = arith.constant dense<0.000000e+00> : vector<12xf32>
    %109 = vector.multi_reduction <add>, %108, %cst_46 [1] : vector<12x4xf32> to vector<12xf32>
    %110 = vector.shape_cast %109 : vector<12xf32> to vector<12x1xf32>
    %cst_47 = arith.constant dense<0.000000e+00> : vector<1x12xf32>
    %111 = tpu.matmul %106, %16, %cst_47 {dimension_numbers = #tpu.dot_dimension_numbers<[1], [1], [0], [0], [0, 0, 1, 0], [], []>} : vector<1x4xf32>, vector<12x4xf32>, vector<1x12xf32> -> vector<1x12xf32>
    %112 = vector.broadcast %110 : vector<12x1xf32> to vector<12x12xf32>
    %113 = vector.broadcast %111 : vector<1x12xf32> to vector<12x12xf32>
    %114 = arith.addf %112, %113 : vector<12x12xf32>
    %cst_48 = arith.constant 0.000000e+00 : f32
    %115 = vector.broadcast %cst_48 : f32 to vector<12x12xf32>
    %116 = arith.cmpf ogt, %114, %115 : vector<12x12xf32>
    %cst_49 = arith.constant 2.000000e-01 : f32
    %117 = vector.broadcast %cst_49 : f32 to vector<12x12xf32>
    %118 = arith.mulf %117, %114 : vector<12x12xf32>
    %119 = arith.select %116, %114, %118 : vector<12x12xi1>, vector<12x12xf32>
    %cst_50 = arith.constant 0.000000e+00 : f32
    %120 = vector.broadcast %cst_50 : f32 to vector<12x12xf32>
    %121 = arith.cmpf one, %12, %120 : vector<12x12xf32>
    %cst_51 = arith.constant -9.000000e+15 : f32
    %122 = vector.broadcast %cst_51 : f32 to vector<12x12xf32>
    %123 = arith.select %121, %119, %122 : vector<12x12xi1>, vector<12x12xf32>
    %cst_52 = arith.constant dense<0xFF800000> : vector<12xf32>
    %124 = vector.multi_reduction <maximumf>, %123, %cst_52 [1] : vector<12x12xf32> to vector<12xf32>
    %125 = vector.shape_cast %124 : vector<12xf32> to vector<12x1xf32>
    %126 = vector.broadcast %125 : vector<12x1xf32> to vector<12x12xf32>
    %127 = arith.subf %123, %126 : vector<12x12xf32>
    %128 = math.exp %127 : vector<12x12xf32>
    %cst_53 = arith.constant dense<0.000000e+00> : vector<12xf32>
    %129 = vector.multi_reduction <add>, %128, %cst_53 [1] : vector<12x12xf32> to vector<12xf32>
    %130 = vector.shape_cast %129 : vector<12xf32> to vector<12x1xf32>
    %131 = tpu.reciprocal %130 {approx = true} : vector<12x1xf32> -> vector<12x1xf32>
    %132 = vector.broadcast %131 : vector<12x1xf32> to vector<12x12xf32>
    %133 = arith.mulf %128, %132 : vector<12x12xf32>
    %134 = vector.extract_strided_slice %10 {offsets = [4, 0], sizes = [1, 4], strides = [1, 1]} : vector<14x4xf32> to vector<1x4xf32>
    %135 = vector.extract_strided_slice %10 {offsets = [11, 0], sizes = [1, 4], strides = [1, 1]} : vector<14x4xf32> to vector<1x4xf32>
    %136 = vector.broadcast %134 : vector<1x4xf32> to vector<12x4xf32>
    %137 = arith.mulf %1, %136 : vector<12x4xf32>
    %cst_54 = arith.constant dense<0.000000e+00> : vector<12xf32>
    %138 = vector.multi_reduction <add>, %137, %cst_54 [1] : vector<12x4xf32> to vector<12xf32>
    %139 = vector.shape_cast %138 : vector<12xf32> to vector<12x1xf32>
    %cst_55 = arith.constant dense<0.000000e+00> : vector<1x12xf32>
    %140 = tpu.matmul %135, %1, %cst_55 {dimension_numbers = #tpu.dot_dimension_numbers<[1], [1], [0], [0], [0, 0, 1, 0], [], []>} : vector<1x4xf32>, vector<12x4xf32>, vector<1x12xf32> -> vector<1x12xf32>
    %141 = vector.broadcast %139 : vector<12x1xf32> to vector<12x12xf32>
    %142 = vector.broadcast %140 : vector<1x12xf32> to vector<12x12xf32>
    %143 = arith.addf %141, %142 : vector<12x12xf32>
    %cst_56 = arith.constant 0.000000e+00 : f32
    %144 = vector.broadcast %cst_56 : f32 to vector<12x12xf32>
    %145 = arith.cmpf ogt, %143, %144 : vector<12x12xf32>
    %cst_57 = arith.constant 2.000000e-01 : f32
    %146 = vector.broadcast %cst_57 : f32 to vector<12x12xf32>
    %147 = arith.mulf %146, %143 : vector<12x12xf32>
    %148 = arith.select %145, %143, %147 : vector<12x12xi1>, vector<12x12xf32>
    %cst_58 = arith.constant 0.000000e+00 : f32
    %149 = vector.broadcast %cst_58 : f32 to vector<12x12xf32>
    %150 = arith.cmpf one, %13, %149 : vector<12x12xf32>
    %cst_59 = arith.constant -9.000000e+15 : f32
    %151 = vector.broadcast %cst_59 : f32 to vector<12x12xf32>
    %152 = arith.select %150, %148, %151 : vector<12x12xi1>, vector<12x12xf32>
    %cst_60 = arith.constant dense<0xFF800000> : vector<12xf32>
    %153 = vector.multi_reduction <maximumf>, %152, %cst_60 [1] : vector<12x12xf32> to vector<12xf32>
    %154 = vector.shape_cast %153 : vector<12xf32> to vector<12x1xf32>
    %155 = vector.broadcast %154 : vector<12x1xf32> to vector<12x12xf32>
    %156 = arith.subf %152, %155 : vector<12x12xf32>
    %157 = math.exp %156 : vector<12x12xf32>
    %cst_61 = arith.constant dense<0.000000e+00> : vector<12xf32>
    %158 = vector.multi_reduction <add>, %157, %cst_61 [1] : vector<12x12xf32> to vector<12xf32>
    %159 = vector.shape_cast %158 : vector<12xf32> to vector<12x1xf32>
    %160 = tpu.reciprocal %159 {approx = true} : vector<12x1xf32> -> vector<12x1xf32>
    %161 = vector.broadcast %160 : vector<12x1xf32> to vector<12x12xf32>
    %162 = arith.mulf %157, %161 : vector<12x12xf32>
    %163 = vector.extract_strided_slice %10 {offsets = [5, 0], sizes = [1, 4], strides = [1, 1]} : vector<14x4xf32> to vector<1x4xf32>
    %164 = vector.extract_strided_slice %10 {offsets = [12, 0], sizes = [1, 4], strides = [1, 1]} : vector<14x4xf32> to vector<1x4xf32>
    %165 = vector.broadcast %163 : vector<1x4xf32> to vector<4x4xf32>
    %166 = arith.mulf %2, %165 : vector<4x4xf32>
    %cst_62 = arith.constant dense<0.000000e+00> : vector<4xf32>
    %167 = vector.multi_reduction <add>, %166, %cst_62 [1] : vector<4x4xf32> to vector<4xf32>
    %168 = vector.shape_cast %167 : vector<4xf32> to vector<4x1xf32>
    %cst_63 = arith.constant dense<0.000000e+00> : vector<1x4xf32>
    %169 = tpu.matmul %164, %2, %cst_63 {dimension_numbers = #tpu.dot_dimension_numbers<[1], [1], [0], [0], [0, 0, 1, 0], [], []>} : vector<1x4xf32>, vector<4x4xf32>, vector<1x4xf32> -> vector<1x4xf32>
    %170 = vector.broadcast %168 : vector<4x1xf32> to vector<4x4xf32>
    %171 = vector.broadcast %169 : vector<1x4xf32> to vector<4x4xf32>
    %172 = arith.addf %170, %171 : vector<4x4xf32>
    %cst_64 = arith.constant 0.000000e+00 : f32
    %173 = vector.broadcast %cst_64 : f32 to vector<4x4xf32>
    %174 = arith.cmpf ogt, %172, %173 : vector<4x4xf32>
    %cst_65 = arith.constant 2.000000e-01 : f32
    %175 = vector.broadcast %cst_65 : f32 to vector<4x4xf32>
    %176 = arith.mulf %175, %172 : vector<4x4xf32>
    %177 = arith.select %174, %172, %176 : vector<4x4xi1>, vector<4x4xf32>
    %cst_66 = arith.constant 0.000000e+00 : f32
    %178 = vector.broadcast %cst_66 : f32 to vector<4x4xf32>
    %179 = arith.cmpf one, %15, %178 : vector<4x4xf32>
    %cst_67 = arith.constant -9.000000e+15 : f32
    %180 = vector.broadcast %cst_67 : f32 to vector<4x4xf32>
    %181 = arith.select %179, %177, %180 : vector<4x4xi1>, vector<4x4xf32>
    %cst_68 = arith.constant dense<0xFF800000> : vector<4xf32>
    %182 = vector.multi_reduction <maximumf>, %181, %cst_68 [1] : vector<4x4xf32> to vector<4xf32>
    %183 = vector.shape_cast %182 : vector<4xf32> to vector<4x1xf32>
    %184 = vector.broadcast %183 : vector<4x1xf32> to vector<4x4xf32>
    %185 = arith.subf %181, %184 : vector<4x4xf32>
    %186 = math.exp %185 : vector<4x4xf32>
    %cst_69 = arith.constant dense<0.000000e+00> : vector<4xf32>
    %187 = vector.multi_reduction <add>, %186, %cst_69 [1] : vector<4x4xf32> to vector<4xf32>
    %188 = vector.shape_cast %187 : vector<4xf32> to vector<4x1xf32>
    %189 = tpu.reciprocal %188 {approx = true} : vector<4x1xf32> -> vector<4x1xf32>
    %190 = vector.broadcast %189 : vector<4x1xf32> to vector<4x4xf32>
    %191 = arith.mulf %186, %190 : vector<4x4xf32>
    %192 = vector.extract_strided_slice %10 {offsets = [6, 0], sizes = [1, 4], strides = [1, 1]} : vector<14x4xf32> to vector<1x4xf32>
    %193 = vector.extract_strided_slice %10 {offsets = [13, 0], sizes = [1, 4], strides = [1, 1]} : vector<14x4xf32> to vector<1x4xf32>
    %194 = vector.broadcast %192 : vector<1x4xf32> to vector<4x4xf32>
    %195 = arith.mulf %17, %194 : vector<4x4xf32>
    %cst_70 = arith.constant dense<0.000000e+00> : vector<4xf32>
    %196 = vector.multi_reduction <add>, %195, %cst_70 [1] : vector<4x4xf32> to vector<4xf32>
    %197 = vector.shape_cast %196 : vector<4xf32> to vector<4x1xf32>
    %cst_71 = arith.constant dense<0.000000e+00> : vector<1x4xf32>
    %198 = tpu.matmul %193, %17, %cst_71 {dimension_numbers = #tpu.dot_dimension_numbers<[1], [1], [0], [0], [0, 0, 1, 0], [], []>} : vector<1x4xf32>, vector<4x4xf32>, vector<1x4xf32> -> vector<1x4xf32>
    %199 = vector.broadcast %197 : vector<4x1xf32> to vector<4x4xf32>
    %200 = vector.broadcast %198 : vector<1x4xf32> to vector<4x4xf32>
    %201 = arith.addf %199, %200 : vector<4x4xf32>
    %cst_72 = arith.constant 0.000000e+00 : f32
    %202 = vector.broadcast %cst_72 : f32 to vector<4x4xf32>
    %203 = arith.cmpf ogt, %201, %202 : vector<4x4xf32>
    %cst_73 = arith.constant 2.000000e-01 : f32
    %204 = vector.broadcast %cst_73 : f32 to vector<4x4xf32>
    %205 = arith.mulf %204, %201 : vector<4x4xf32>
    %206 = arith.select %203, %201, %205 : vector<4x4xi1>, vector<4x4xf32>
    %cst_74 = arith.constant 0.000000e+00 : f32
    %207 = vector.broadcast %cst_74 : f32 to vector<4x4xf32>
    %208 = arith.cmpf one, %15, %207 : vector<4x4xf32>
    %cst_75 = arith.constant -9.000000e+15 : f32
    %209 = vector.broadcast %cst_75 : f32 to vector<4x4xf32>
    %210 = arith.select %208, %206, %209 : vector<4x4xi1>, vector<4x4xf32>
    %cst_76 = arith.constant dense<0xFF800000> : vector<4xf32>
    %211 = vector.multi_reduction <maximumf>, %210, %cst_76 [1] : vector<4x4xf32> to vector<4xf32>
    %212 = vector.shape_cast %211 : vector<4xf32> to vector<4x1xf32>
    %213 = vector.broadcast %212 : vector<4x1xf32> to vector<4x4xf32>
    %214 = arith.subf %210, %213 : vector<4x4xf32>
    %215 = math.exp %214 : vector<4x4xf32>
    %cst_77 = arith.constant dense<0.000000e+00> : vector<4xf32>
    %216 = vector.multi_reduction <add>, %215, %cst_77 [1] : vector<4x4xf32> to vector<4xf32>
    %217 = vector.shape_cast %216 : vector<4xf32> to vector<4x1xf32>
    %218 = tpu.reciprocal %217 {approx = true} : vector<4x1xf32> -> vector<4x1xf32>
    %219 = vector.broadcast %218 : vector<4x1xf32> to vector<4x4xf32>
    %220 = arith.mulf %215, %219 : vector<4x4xf32>
    %cst_78 = arith.constant dense<0.000000e+00> : vector<8x4xf32>
    %221 = tpu.matmul %46, %0, %cst_78 {dimension_numbers = #tpu.dot_dimension_numbers<[1], [0], [0], [1], [0, 0, 1, 1], [], []>} : vector<8x8xf32>, vector<8x4xf32>, vector<8x4xf32> -> vector<8x4xf32>
    %cst_79 = arith.constant dense<0.000000e+00> : vector<8x4xf32>
    %222 = tpu.matmul %3, %1, %cst_79 {dimension_numbers = #tpu.dot_dimension_numbers<[1], [0], [0], [1], [0, 0, 1, 1], [], []>} : vector<8x12xf32>, vector<12x4xf32>, vector<8x4xf32> -> vector<8x4xf32>
    %cst_80 = arith.constant dense<0.000000e+00> : vector<8x4xf32>
    %223 = tpu.matmul %75, %222, %cst_80 {dimension_numbers = #tpu.dot_dimension_numbers<[1], [0], [0], [1], [0, 0, 1, 1], [], []>} : vector<8x8xf32>, vector<8x4xf32>, vector<8x4xf32> -> vector<8x4xf32>
    %cst_81 = arith.constant dense<0.000000e+00> : vector<8x4xf32>
    %224 = tpu.matmul %11, %0, %cst_81 {dimension_numbers = #tpu.dot_dimension_numbers<[1], [0], [0], [1], [0, 0, 1, 1], [], []>} : vector<8x8xf32>, vector<8x4xf32>, vector<8x4xf32> -> vector<8x4xf32>
    %cst_82 = arith.constant 1.000000e-01 : f32
    %225 = vector.broadcast %cst_82 : f32 to vector<8x4xf32>
    %226 = arith.mulf %225, %224 : vector<8x4xf32>
    %227 = arith.subf %0, %226 : vector<8x4xf32>
    %cst_83 = arith.constant dense<0.000000e+00> : vector<8x4xf32>
    %228 = tpu.matmul %11, %227, %cst_83 {dimension_numbers = #tpu.dot_dimension_numbers<[1], [0], [0], [1], [0, 0, 1, 1], [], []>} : vector<8x8xf32>, vector<8x4xf32>, vector<8x4xf32> -> vector<8x4xf32>
    %cst_84 = arith.constant 1.000000e-01 : f32
    %229 = vector.broadcast %cst_84 : f32 to vector<8x4xf32>
    %230 = arith.mulf %229, %228 : vector<8x4xf32>
    %231 = arith.subf %227, %230 : vector<8x4xf32>
    %232 = tpu.concatenate %0, %221, %222, %223, %231 in 1 : vector<8x4xf32>, vector<8x4xf32>, vector<8x4xf32>, vector<8x4xf32>, vector<8x4xf32> -> vector<8x20xf32>
    %cst_85 = arith.constant dense<0.000000e+00> : vector<8x4xf32>
    %233 = tpu.matmul %232, %7, %cst_85 {dimension_numbers = #tpu.dot_dimension_numbers<[1], [0], [0], [1], [0, 0, 1, 1], [], []>} : vector<8x20xf32>, vector<20x4xf32>, vector<8x4xf32> -> vector<8x4xf32>
    %cst_86 = arith.constant 5.000000e-01 : f32
    %234 = vector.broadcast %cst_86 : f32 to vector<8x4xf32>
    %235 = arith.mulf %234, %233 : vector<8x4xf32>
    %236 = math.tanh %235 : vector<8x4xf32>
    %cst_87 = arith.constant 1.000000e+00 : f32
    %237 = vector.broadcast %cst_87 : f32 to vector<8x4xf32>
    %238 = arith.addf %236, %237 : vector<8x4xf32>
    %cst_88 = arith.constant 5.000000e-01 : f32
    %239 = vector.broadcast %cst_88 : f32 to vector<8x4xf32>
    %240 = arith.mulf %239, %238 : vector<8x4xf32>
    %cst_89 = arith.constant dense<0.000000e+00> : vector<12x4xf32>
    %241 = tpu.matmul %104, %1, %cst_89 {dimension_numbers = #tpu.dot_dimension_numbers<[1], [0], [0], [1], [0, 0, 1, 1], [], []>} : vector<12x12xf32>, vector<12x4xf32>, vector<12x4xf32> -> vector<12x4xf32>
    %cst_90 = arith.constant dense<0.000000e+00> : vector<12x4xf32>
    %242 = tpu.matmul %104, %241, %cst_90 {dimension_numbers = #tpu.dot_dimension_numbers<[1], [0], [0], [1], [0, 0, 1, 1], [], []>} : vector<12x12xf32>, vector<12x4xf32>, vector<12x4xf32> -> vector<12x4xf32>
    %cst_91 = arith.constant dense<0.000000e+00> : vector<12x4xf32>
    %243 = tpu.matmul %133, %16, %cst_91 {dimension_numbers = #tpu.dot_dimension_numbers<[1], [0], [0], [1], [0, 0, 1, 1], [], []>} : vector<12x12xf32>, vector<12x4xf32>, vector<12x4xf32> -> vector<12x4xf32>
    %cst_92 = arith.constant dense<0.000000e+00> : vector<12x4xf32>
    %244 = tpu.matmul %133, %243, %cst_92 {dimension_numbers = #tpu.dot_dimension_numbers<[1], [0], [0], [1], [0, 0, 1, 1], [], []>} : vector<12x12xf32>, vector<12x4xf32>, vector<12x4xf32> -> vector<12x4xf32>
    %cst_93 = arith.constant dense<0.000000e+00> : vector<12x4xf32>
    %245 = tpu.matmul %162, %1, %cst_93 {dimension_numbers = #tpu.dot_dimension_numbers<[1], [0], [0], [1], [0, 0, 1, 1], [], []>} : vector<12x12xf32>, vector<12x4xf32>, vector<12x4xf32> -> vector<12x4xf32>
    %cst_94 = arith.constant dense<0.000000e+00> : vector<12x4xf32>
    %246 = tpu.matmul %162, %245, %cst_94 {dimension_numbers = #tpu.dot_dimension_numbers<[1], [0], [0], [1], [0, 0, 1, 1], [], []>} : vector<12x12xf32>, vector<12x4xf32>, vector<12x4xf32> -> vector<12x4xf32>
    %cst_95 = arith.constant dense<0.000000e+00> : vector<12x4xf32>
    %247 = tpu.matmul %14, %1, %cst_95 {dimension_numbers = #tpu.dot_dimension_numbers<[1], [0], [0], [1], [0, 0, 1, 1], [], []>} : vector<12x12xf32>, vector<12x4xf32>, vector<12x4xf32> -> vector<12x4xf32>
    %cst_96 = arith.constant 1.000000e-01 : f32
    %248 = vector.broadcast %cst_96 : f32 to vector<12x4xf32>
    %249 = arith.mulf %248, %247 : vector<12x4xf32>
    %250 = arith.subf %1, %249 : vector<12x4xf32>
    %cst_97 = arith.constant dense<0.000000e+00> : vector<12x4xf32>
    %251 = tpu.matmul %14, %250, %cst_97 {dimension_numbers = #tpu.dot_dimension_numbers<[1], [0], [0], [1], [0, 0, 1, 1], [], []>} : vector<12x12xf32>, vector<12x4xf32>, vector<12x4xf32> -> vector<12x4xf32>
    %cst_98 = arith.constant 1.000000e-01 : f32
    %252 = vector.broadcast %cst_98 : f32 to vector<12x4xf32>
    %253 = arith.mulf %252, %251 : vector<12x4xf32>
    %254 = arith.subf %250, %253 : vector<12x4xf32>
    %255 = tpu.concatenate %241, %242, %243, %244, %245, %246, %254 in 1 : vector<12x4xf32>, vector<12x4xf32>, vector<12x4xf32>, vector<12x4xf32>, vector<12x4xf32>, vector<12x4xf32>, vector<12x4xf32> -> vector<12x28xf32>
    %cst_99 = arith.constant dense<0.000000e+00> : vector<12x4xf32>
    %256 = tpu.matmul %255, %8, %cst_99 {dimension_numbers = #tpu.dot_dimension_numbers<[1], [0], [0], [1], [0, 0, 1, 1], [], []>} : vector<12x28xf32>, vector<28x4xf32>, vector<12x4xf32> -> vector<12x4xf32>
    %cst_100 = arith.constant 5.000000e-01 : f32
    %257 = vector.broadcast %cst_100 : f32 to vector<12x4xf32>
    %258 = arith.mulf %257, %256 : vector<12x4xf32>
    %259 = math.tanh %258 : vector<12x4xf32>
    %cst_101 = arith.constant 1.000000e+00 : f32
    %260 = vector.broadcast %cst_101 : f32 to vector<12x4xf32>
    %261 = arith.addf %259, %260 : vector<12x4xf32>
    %cst_102 = arith.constant 5.000000e-01 : f32
    %262 = vector.broadcast %cst_102 : f32 to vector<12x4xf32>
    %263 = arith.mulf %262, %261 : vector<12x4xf32>
    %cst_103 = arith.constant dense<0.000000e+00> : vector<4x4xf32>
    %264 = tpu.matmul %191, %2, %cst_103 {dimension_numbers = #tpu.dot_dimension_numbers<[1], [0], [0], [1], [0, 0, 1, 1], [], []>} : vector<4x4xf32>, vector<4x4xf32>, vector<4x4xf32> -> vector<4x4xf32>
    %cst_104 = arith.constant dense<0.000000e+00> : vector<4x4xf32>
    %265 = tpu.matmul %191, %264, %cst_104 {dimension_numbers = #tpu.dot_dimension_numbers<[1], [0], [0], [1], [0, 0, 1, 1], [], []>} : vector<4x4xf32>, vector<4x4xf32>, vector<4x4xf32> -> vector<4x4xf32>
    %cst_105 = arith.constant dense<0.000000e+00> : vector<4x4xf32>
    %266 = tpu.matmul %220, %17, %cst_105 {dimension_numbers = #tpu.dot_dimension_numbers<[1], [0], [0], [1], [0, 0, 1, 1], [], []>} : vector<4x4xf32>, vector<4x4xf32>, vector<4x4xf32> -> vector<4x4xf32>
    %cst_106 = arith.constant dense<0.000000e+00> : vector<4x4xf32>
    %267 = tpu.matmul %220, %266, %cst_106 {dimension_numbers = #tpu.dot_dimension_numbers<[1], [0], [0], [1], [0, 0, 1, 1], [], []>} : vector<4x4xf32>, vector<4x4xf32>, vector<4x4xf32> -> vector<4x4xf32>
    %cst_107 = arith.constant dense<0.000000e+00> : vector<4x4xf32>
    %268 = tpu.matmul %15, %2, %cst_107 {dimension_numbers = #tpu.dot_dimension_numbers<[1], [0], [0], [1], [0, 0, 1, 1], [], []>} : vector<4x4xf32>, vector<4x4xf32>, vector<4x4xf32> -> vector<4x4xf32>
    %cst_108 = arith.constant 1.000000e-01 : f32
    %269 = vector.broadcast %cst_108 : f32 to vector<4x4xf32>
    %270 = arith.mulf %269, %268 : vector<4x4xf32>
    %271 = arith.subf %2, %270 : vector<4x4xf32>
    %cst_109 = arith.constant dense<0.000000e+00> : vector<4x4xf32>
    %272 = tpu.matmul %15, %271, %cst_109 {dimension_numbers = #tpu.dot_dimension_numbers<[1], [0], [0], [1], [0, 0, 1, 1], [], []>} : vector<4x4xf32>, vector<4x4xf32>, vector<4x4xf32> -> vector<4x4xf32>
    %cst_110 = arith.constant 1.000000e-01 : f32
    %273 = vector.broadcast %cst_110 : f32 to vector<4x4xf32>
    %274 = arith.mulf %273, %272 : vector<4x4xf32>
    %275 = arith.subf %271, %274 : vector<4x4xf32>
    %276 = tpu.concatenate %264, %265, %266, %267, %275 in 1 : vector<4x4xf32>, vector<4x4xf32>, vector<4x4xf32>, vector<4x4xf32>, vector<4x4xf32> -> vector<4x20xf32>
    %cst_111 = arith.constant dense<0.000000e+00> : vector<4x4xf32>
    %277 = tpu.matmul %276, %9, %cst_111 {dimension_numbers = #tpu.dot_dimension_numbers<[1], [0], [0], [1], [0, 0, 1, 1], [], []>} : vector<4x20xf32>, vector<20x4xf32>, vector<4x4xf32> -> vector<4x4xf32>
    %cst_112 = arith.constant 5.000000e-01 : f32
    %278 = vector.broadcast %cst_112 : f32 to vector<4x4xf32>
    %279 = arith.mulf %278, %277 : vector<4x4xf32>
    %280 = math.tanh %279 : vector<4x4xf32>
    %cst_113 = arith.constant 1.000000e+00 : f32
    %281 = vector.broadcast %cst_113 : f32 to vector<4x4xf32>
    %282 = arith.addf %280, %281 : vector<4x4xf32>
    %cst_114 = arith.constant 5.000000e-01 : f32
    %283 = vector.broadcast %cst_114 : f32 to vector<4x4xf32>
    %284 = arith.mulf %283, %282 : vector<4x4xf32>
    %c0_115 = arith.constant 0 : index
    %c0_116 = arith.constant 0 : index
    %285 = vector.load %arg4[%c0_115, %c0_116] : memref<32x4xf32, #tpu.memory_space<vmem>>, vector<8x4xf32>
    tpu.vector_store %arg4[%c0_115, %c0_116], %240 {strides = array<i32>} : memref<32x4xf32, #tpu.memory_space<vmem>>, vector<8x4xf32>,
    %c8_117 = arith.constant 8 : index
    %c0_118 = arith.constant 0 : index
    %286 = vector.load %arg4[%c8_117, %c0_118] : memref<32x4xf32, #tpu.memory_space<vmem>>, vector<12x4xf32>
    tpu.vector_store %arg4[%c8_117, %c0_118], %263 {strides = array<i32>} : memref<32x4xf32, #tpu.memory_space<vmem>>, vector<12x4xf32>,
    %c24_119 = arith.constant 24 : index
    %c0_120 = arith.constant 0 : index
    %287 = vector.load %arg4[%c24_119, %c0_120] : memref<32x4xf32, #tpu.memory_space<vmem>>, vector<4x4xf32>
    tpu.vector_store %arg4[%c24_119, %c0_120], %284 {strides = array<i32>} : memref<32x4xf32, #tpu.memory_space<vmem>>, vector<4x4xf32>,
    return
  }
}

</mosaic_0001>

<llo_original>
// kernel: san_forward.1
$region0: #{san_forward.1}
  #allocation0 [shape = 'u32[]', space=smem, size = 0x4, offset = 0x4, fixed_abs, tag = 'smem constant byte address 0x4 - core index']
  #allocation1 [shape = 'u32[144,128]{1,0:T(1,128)}', space=vmem, size = 0x12000, scoped, tag = 'internal scratch']
  %s0 = inlined_call_operand.vmem [shape: f32[32,4], index: 0, kind: input, shape index: {}]
  %s1 = inlined_call_operand.vmem [shape: f32[48,12], index: 1, kind: input, shape index: {}]
  %s2 = inlined_call_operand.vmem [shape: f32[80,4], index: 2, kind: input, shape index: {}]
  %s3 = inlined_call_operand.vmem [shape: f32[14,4], index: 3, kind: input, shape index: {}]
  %s4 = inlined_call_operand.vmem [shape: f32[32,4], index: 4, kind: output, shape index: {}]
  %s5 = sld [smem:[#allocation0]]
  $region26: #{san_forward.1} parent=0
    _
  %s7 = ssub.s32 1, %s5
  %s8 = scalar_select 0, %s7, %s5
  // Predicated region
  $region2: #{san_forward.1} parent=0 // pred_check
    _
  $region3: #{san_forward.1} parent=0 // pred_check_branch
    %10 = sbr.rel (0) target = $region5
  $region4: #{san_forward.1} parent=0 // pred_region
    _
  $region5: #{san_forward.1} parent=0 // pred_fallthru
    _
  // Predicated region
  $region6: #{san_forward.1} parent=0 // pred_check
    _
  $region7: #{san_forward.1} parent=0 // pred_check_branch
    %12 = sbr.rel (0) target = $region9
  $region8: #{san_forward.1} parent=0 // pred_region
    _
  $region9: #{san_forward.1} parent=0 // pred_fallthru
    _
  // Predicated region
  $region10: #{san_forward.1} parent=0 // pred_check
    _
  $region11: #{san_forward.1} parent=0 // pred_check_branch
    %14 = sbr.rel (0) target = $region13
  $region12: #{san_forward.1} parent=0 // pred_region
    _
  $region13: #{san_forward.1} parent=0 // pred_fallthru
    _
  // Predicated region
  $region14: #{san_forward.1} parent=0 // pred_check
    _
  $region15: #{san_forward.1} parent=0 // pred_check_branch
    %16 = sbr.rel (0) target = $region17
  $region16: #{san_forward.1} parent=0 // pred_region
    _
  $region17: #{san_forward.1} parent=0 // pred_fallthru
    _
  %v17 = vld [vmem:[%s0] sm:$0xff]
  %v18 = vld [vmem:[%s0 + $0x8] sm:$0xff]
  %v19 = vld [vmem:[%s0 + $0x10] sm:$0xf]
  %v20 = vld [vmem:[%s0 + $0x18] sm:$0xf]
  %v21 = vld [vmem:[%s1] sm:$0xff]
  %v22 = vld [vmem:[%s1 + $0x8] sm:$0xff]
  %v23 = vld [vmem:[%s1 + $0x10] sm:$0xf]
  %v24 = vld [vmem:[%s1 + $0x18] sm:$0xff]
  %v25 = vld [vmem:[%s1 + $0x20] sm:$0xf]
  %v26 = vld [vmem:[%s1 + $0x28] sm:$0xf]
  %v27 = vld [vmem:[%s2] sm:$0xff]
  %v28 = vld [vmem:[%s2 + $0x8] sm:$0xff]
  %v29 = vld [vmem:[%s2 + $0x10] sm:$0xf]
  %v30 = vld [vmem:[%s2 + $0x18] sm:$0xff]
  %v31 = vld [vmem:[%s2 + $0x20] sm:$0xff]
  %v32 = vld [vmem:[%s2 + $0x28] sm:$0xff]
  %v33 = vld [vmem:[%s2 + $0x30] sm:$0xf]
  %v34 = vld [vmem:[%s2 + $0x38] sm:$0xff]
  %v35 = vld [vmem:[%s2 + $0x40] sm:$0xff]
  %v36 = vld [vmem:[%s2 + $0x48] sm:$0xf]
  %v37 = vld [vmem:[%s3] sm:$0xff]
  %v38 = vld [vmem:[%s3 + $0x8] sm:$0x3f]
  %vm39 = vcmask 97280
  %v41 = vsel %vm39, %v21, 0
  %vm43 = vcmask 1043456
  %v45 = vsel %vm43, %v23, 0
  %47 = vmatprep.subr.mxu0 0.0
  %48 = vmatpush1.msra.mxu0 0.0
  %49 = vmatprep.subr.mxu0 0.0
  %50 = vmatpush1.msra.mxu0 0.0
  %51 = vmatprep.subr.mxu0 0.0
  %52 = vmatpush1.msra.mxu0 0.0
  %53 = vmatprep.subr.mxu0 0.0
  %54 = vmatpush1.msra.mxu0 0.0
  %55 = vmatprep.subr.mxu0 0.0
  %56 = vmatpush1.msra.mxu0 0.0
  %57 = vmatprep.subr.mxu0 0.0
  %58 = vmatpush1.msra.mxu0 0.0
  %59 = vmatprep.subr.mxu0 0.0
  %60 = vmatpush1.msra.mxu0 0.0
  %61 = vmatprep.subr.mxu0 0.0
  %62 = vmatpush1.msra.mxu0 0.0
  %63 = vmatprep.subr.mxu0 0.0
  %64 = vmatpush1.msra.mxu0 0.0
  %65 = vmatprep.subr.mxu0 0.0
  %66 = vmatpush1.msra.mxu0 0.0
  %67 = vmatprep.subr.mxu0 0.0
  %68 = vmatpush1.msra.mxu0 0.0
  %69 = vmatprep.subr.mxu0 0.0
  %70 = vmatpush1.msra.mxu0 0.0
  %71 = vmatprep.subr.mxu0 0.0
  %72 = vmatpush1.msra.mxu0 0.0
  %73 = vmatprep.subr.mxu0 0.0
  %74 = vmatpush1.msra.mxu0 0.0
  %75 = vmatprep.subr.mxu0 0.0
  %76 = vmatpush1.msra.mxu0 %v45
  %77 = vmatprep.subr.mxu0 0.0
  %78 = vmatpush1.msra.mxu0 %v22
  %79 = vmatprep.subr.mxu0 0.0
  %80 = vmatpush2.msra.mxu0 0.0
  %81 = vmatprep.subr.mxu0 0.0
  %82 = vmatpush2.msra.mxu0 0.0
  %83 = vmatprep.subr.mxu0 0.0
  %84 = vmatpush2.msra.mxu0 0.0
  %85 = vmatprep.subr.mxu0 0.0
  %86 = vmatpush2.msra.mxu0 0.0
  %87 = vmatprep.subr.mxu0 0.0
  %88 = vmatpush2.msra.mxu0 0.0
  %89 = vmatprep.subr.mxu0 0.0
  %90 = vmatpush2.msra.mxu0 0.0
  %91 = vmatprep.subr.mxu0 0.0
  %92 = vmatpush2.msra.mxu0 0.0
  %93 = vmatprep.subr.mxu0 0.0
  %94 = vmatpush2.msra.mxu0 0.0
  %95 = vmatprep.subr.mxu0 0.0
  %96 = vmatpush2.msra.mxu0 0.0
  %97 = vmatprep.subr.mxu0 0.0
  %98 = vmatpush2.msra.mxu0 0.0
  %99 = vmatprep.subr.mxu0 0.0
  %100 = vmatpush2.msra.mxu0 0.0
  %101 = vmatprep.subr.mxu0 0.0
  %102 = vmatpush2.msra.mxu0 0.0
  %103 = vmatprep.subr.mxu0 0.0
  %104 = vmatpush2.msra.mxu0 0.0
  %105 = vmatprep.subr.mxu0 0.0
  %106 = vmatpush2.msra.mxu0 0.0
  %107 = vmatprep.subr.mxu0 0.0
  %108 = vmatpush2.msra.mxu0 0.0
  %109 = vmatprep.subr.mxu0 0.0
  %110 = vmatpush2.msra.mxu0 0.0
  %111 = vmatprep.mubr.f32.mxu0 0.0
  %112 = vmatmul.mubr.f32.gmra.mxu0 %v41
  %v113 = vpop.f32.mrf.mxu0
  %v114 = vadd.f32 0.0, %v113
  %v115 = vpop.f32.mrf.mxu0
  %116 = vdwg.mxu0
  %vm117 = vcmask 64512
  %v119 = vsel %vm117, %v22, 0
  %v121 = vsel %vm117, %v23, 0
  %123 = vmatprep.subr.mxu0 0.0
  %124 = vmatpush1.msra.mxu0 0.0
  %125 = vmatprep.subr.mxu0 0.0
  %126 = vmatpush1.msra.mxu0 0.0
  %127 = vmatprep.subr.mxu0 0.0
  %128 = vmatpush1.msra.mxu0 0.0
  %129 = vmatprep.subr.mxu0 0.0
  %130 = vmatpush1.msra.mxu0 0.0
  %131 = vmatprep.subr.mxu0 0.0
  %132 = vmatpush1.msra.mxu0 0.0
  %133 = vmatprep.subr.mxu0 0.0
  %134 = vmatpush1.msra.mxu0 0.0
  %135 = vmatprep.subr.mxu0 0.0
  %136 = vmatpush1.msra.mxu0 0.0
  %137 = vmatprep.subr.mxu0 0.0
  %138 = vmatpush1.msra.mxu0 0.0
  %139 = vmatprep.subr.mxu0 0.0
  %140 = vmatpush1.msra.mxu0 0.0
  %141 = vmatprep.subr.mxu0 0.0
  %142 = vmatpush1.msra.mxu0 0.0
  %143 = vmatprep.subr.mxu0 0.0
  %144 = vmatpush1.msra.mxu0 0.0
  %145 = vmatprep.subr.mxu0 0.0
  %146 = vmatpush1.msra.mxu0 0.0
  %147 = vmatprep.subr.mxu0 0.0
  %148 = vmatpush1.msra.mxu0 0.0
  %149 = vmatprep.subr.mxu0 0.0
  %150 = vmatpush1.msra.mxu0 0.0
  %151 = vmatprep.subr.mxu0 0.0
  %152 = vmatpush1.msra.mxu0 0.0
  %153 = vmatprep.subr.mxu0 0.0
  %154 = vmatpush1.msra.mxu0 %v21
  %155 = vmatprep.subr.mxu0 0.0
  %156 = vmatpush2.msra.mxu0 0.0
  %157 = vmatprep.subr.mxu0 0.0
  %158 = vmatpush2.msra.mxu0 0.0
  %159 = vmatprep.subr.mxu0 0.0
  %160 = vmatpush2.msra.mxu0 0.0
  %161 = vmatprep.subr.mxu0 0.0
  %162 = vmatpush2.msra.mxu0 0.0
  %163 = vmatprep.subr.mxu0 0.0
  %164 = vmatpush2.msra.mxu0 0.0
  %165 = vmatprep.subr.mxu0 0.0
  %166 = vmatpush2.msra.mxu0 0.0
  %167 = vmatprep.subr.mxu0 0.0
  %168 = vmatpush2.msra.mxu0 0.0
  %169 = vmatprep.subr.mxu0 0.0
  %170 = vmatpush2.msra.mxu0 0.0
  %171 = vmatprep.subr.mxu0 0.0
  %172 = vmatpush2.msra.mxu0 0.0
  %173 = vmatprep.subr.mxu0 0.0
  %174 = vmatpush2.msra.mxu0 0.0
  %175 = vmatprep.subr.mxu0 0.0
  %176 = vmatpush2.msra.mxu0 0.0
  %177 = vmatprep.subr.mxu0 0.0
  %178 = vmatpush2.msra.mxu0 0.0
  %179 = vmatprep.subr.mxu0 0.0
  %180 = vmatpush2.msra.mxu0 0.0
  %181 = vmatprep.subr.mxu0 0.0
  %182 = vmatpush2.msra.mxu0 0.0
  %183 = vmatprep.subr.mxu0 0.0
  %184 = vmatpush2.msra.mxu0 0.0
  %185 = vmatprep.subr.mxu0 0.0
  %186 = vmatpush2.msra.mxu0 0.0
  %187 = vmatprep.mubr.f32.mxu0 0.0
  %188 = vmatmul.mubr.f32.gmra.mxu0 %v119
  %v189 = vpop.f32.mrf.mxu0
  %v190 = vadd.f32 0.0, %v189
  %v191 = vpop.f32.mrf.mxu0
  %192 = vmatprep.mubr.f32.mxu0 0.0
  %193 = vmatmul.mubr.f32.gmra.mxu0 %v121
  %v194 = vpop.f32.mrf.mxu0
  %v195 = vadd.f32 0.0, %v194
  %v196 = vpop.f32.mrf.mxu0
  %197 = vdwg.mxu0
  %vm198 = vcmask 31744
  %v200 = vsel %vm198, %v24, 0
  %v203 = vsel %vm198, %v25, 0
  %v206 = vsel %vm43, %v26, 0
  %208 = vmatprep.subr.mxu0 0.0
  %209 = vmatpush1.msra.mxu0 0.0
  %210 = vmatprep.subr.mxu0 0.0
  %211 = vmatpush1.msra.mxu0 0.0
  %212 = vmatprep.subr.mxu0 0.0
  %213 = vmatpush1.msra.mxu0 0.0
  %214 = vmatprep.subr.mxu0 0.0
  %215 = vmatpush1.msra.mxu0 0.0
  %216 = vmatprep.subr.mxu0 0.0
  %217 = vmatpush1.msra.mxu0 0.0
  %218 = vmatprep.subr.mxu0 0.0
  %219 = vmatpush1.msra.mxu0 0.0
  %220 = vmatprep.subr.mxu0 0.0
  %221 = vmatpush1.msra.mxu0 0.0
  %222 = vmatprep.subr.mxu0 0.0
  %223 = vmatpush1.msra.mxu0 0.0
  %224 = vmatprep.subr.mxu0 0.0
  %225 = vmatpush1.msra.mxu0 0.0
  %226 = vmatprep.subr.mxu0 0.0
  %227 = vmatpush1.msra.mxu0 0.0
  %228 = vmatprep.subr.mxu0 0.0
  %229 = vmatpush1.msra.mxu0 0.0
  %230 = vmatprep.subr.mxu0 0.0
  %231 = vmatpush1.msra.mxu0 0.0
  %232 = vmatprep.subr.mxu0 0.0
  %233 = vmatpush1.msra.mxu0 0.0
  %234 = vmatprep.subr.mxu0 0.0
  %235 = vmatpush1.msra.mxu0 0.0
  %236 = vmatprep.subr.mxu0 0.0
  %237 = vmatpush1.msra.mxu0 0.0
  %238 = vmatprep.subr.mxu0 0.0
  %239 = vmatpush1.msra.mxu0 %v206
  %240 = vmatprep.subr.mxu0 0.0
  %241 = vmatpush2.msra.mxu0 0.0
  %242 = vmatprep.subr.mxu0 0.0
  %243 = vmatpush2.msra.mxu0 0.0
  %244 = vmatprep.subr.mxu0 0.0
  %245 = vmatpush2.msra.mxu0 0.0
  %246 = vmatprep.subr.mxu0 0.0
  %247 = vmatpush2.msra.mxu0 0.0
  %248 = vmatprep.subr.mxu0 0.0
  %249 = vmatpush2.msra.mxu0 0.0
  %250 = vmatprep.subr.mxu0 0.0
  %251 = vmatpush2.msra.mxu0 0.0
  %252 = vmatprep.subr.mxu0 0.0
  %253 = vmatpush2.msra.mxu0 0.0
  %254 = vmatprep.subr.mxu0 0.0
  %255 = vmatpush2.msra.mxu0 0.0
  %256 = vmatprep.subr.mxu0 0.0
  %257 = vmatpush2.msra.mxu0 0.0
  %258 = vmatprep.subr.mxu0 0.0
  %259 = vmatpush2.msra.mxu0 0.0
  %260 = vmatprep.subr.mxu0 0.0
  %261 = vmatpush2.msra.mxu0 0.0
  %262 = vmatprep.subr.mxu0 0.0
  %263 = vmatpush2.msra.mxu0 0.0
  %264 = vmatprep.subr.mxu0 0.0
  %265 = vmatpush2.msra.mxu0 0.0
  %266 = vmatprep.subr.mxu0 0.0
  %267 = vmatpush2.msra.mxu0 0.0
  %268 = vmatprep.subr.mxu0 0.0
  %269 = vmatpush2.msra.mxu0 0.0
  %270 = vmatprep.subr.mxu0 0.0
  %271 = vmatpush2.msra.mxu0 0.0
  %272 = vmatprep.mubr.f32.mxu0 0.0
  %273 = vmatmul.mubr.f32.gmra.mxu0 %v200
  %v274 = vpop.f32.mrf.mxu0
  %v275 = vadd.f32 0.0, %v274
  %v276 = vpop.f32.mrf.mxu0
  %277 = vmatprep.mubr.f32.mxu0 0.0
  %278 = vmatmul.mubr.f32.gmra.mxu0 %v203
  %v279 = vpop.f32.mrf.mxu0
  %v280 = vadd.f32 0.0, %v279
  %v281 = vpop.f32.mrf.mxu0
  %282 = vdwg.mxu0
  %v283 = vadd.f32 %v190, %v275
  %v284 = vadd.f32 %v195, %v280
  %v285 = vsel %vm39, %v26, 0
  %v287 = vsel %vm43, %v25, 0
  %289 = vmatprep.subr.mxu0 0.0
  %290 = vmatpush1.msra.mxu0 0.0
  %291 = vmatprep.subr.mxu0 0.0
  %292 = vmatpush1.msra.mxu0 0.0
  %293 = vmatprep.subr.mxu0 0.0
  %294 = vmatpush1.msra.mxu0 0.0
  %295 = vmatprep.subr.mxu0 0.0
  %296 = vmatpush1.msra.mxu0 0.0
  %297 = vmatprep.subr.mxu0 0.0
  %298 = vmatpush1.msra.mxu0 0.0
  %299 = vmatprep.subr.mxu0 0.0
  %300 = vmatpush1.msra.mxu0 0.0
  %301 = vmatprep.subr.mxu0 0.0
  %302 = vmatpush1.msra.mxu0 0.0
  %303 = vmatprep.subr.mxu0 0.0
  %304 = vmatpush1.msra.mxu0 0.0
  %305 = vmatprep.subr.mxu0 0.0
  %306 = vmatpush1.msra.mxu0 0.0
  %307 = vmatprep.subr.mxu0 0.0
  %308 = vmatpush1.msra.mxu0 0.0
  %309 = vmatprep.subr.mxu0 0.0
  %310 = vmatpush1.msra.mxu0 0.0
  %311 = vmatprep.subr.mxu0 0.0
  %312 = vmatpush1.msra.mxu0 0.0
  %313 = vmatprep.subr.mxu0 0.0
  %314 = vmatpush1.msra.mxu0 0.0
  %315 = vmatprep.subr.mxu0 0.0
  %316 = vmatpush1.msra.mxu0 0.0
  %317 = vmatprep.subr.mxu0 0.0
  %318 = vmatpush1.msra.mxu0 %v287
  %319 = vmatprep.subr.mxu0 0.0
  %320 = vmatpush1.msra.mxu0 %v24
  %321 = vmatprep.subr.mxu0 0.0
  %322 = vmatpush2.msra.mxu0 0.0
  %323 = vmatprep.subr.mxu0 0.0
  %324 = vmatpush2.msra.mxu0 0.0
  %325 = vmatprep.subr.mxu0 0.0
  %326 = vmatpush2.msra.mxu0 0.0
  %327 = vmatprep.subr.mxu0 0.0
  %328 = vmatpush2.msra.mxu0 0.0
  %329 = vmatprep.subr.mxu0 0.0
  %330 = vmatpush2.msra.mxu0 0.0
  %331 = vmatprep.subr.mxu0 0.0
  %332 = vmatpush2.msra.mxu0 0.0
  %333 = vmatprep.subr.mxu0 0.0
  %334 = vmatpush2.msra.mxu0 0.0
  %335 = vmatprep.subr.mxu0 0.0
  %336 = vmatpush2.msra.mxu0 0.0
  %337 = vmatprep.subr.mxu0 0.0
  %338 = vmatpush2.msra.mxu0 0.0
  %339 = vmatprep.subr.mxu0 0.0
  %340 = vmatpush2.msra.mxu0 0.0
  %341 = vmatprep.subr.mxu0 0.0
  %342 = vmatpush2.msra.mxu0 0.0
  %343 = vmatprep.subr.mxu0 0.0
  %344 = vmatpush2.msra.mxu0 0.0
  %345 = vmatprep.subr.mxu0 0.0
  %346 = vmatpush2.msra.mxu0 0.0
  %347 = vmatprep.subr.mxu0 0.0
  %348 = vmatpush2.msra.mxu0 0.0
  %349 = vmatprep.subr.mxu0 0.0
  %350 = vmatpush2.msra.mxu0 0.0
  %351 = vmatprep.subr.mxu0 0.0
  %352 = vmatpush2.msra.mxu0 0.0
  %353 = vmatprep.mubr.f32.mxu0 0.0
  %354 = vmatmul.mubr.f32.gmra.mxu0 %v285
  %v355 = vpop.f32.mrf.mxu0
  %v356 = vadd.f32 0.0, %v355
  %v357 = vpop.f32.mrf.mxu0
  %358 = vdwg.mxu0
  %359 = vmatprep.subr.mxu0 0.0
  %360 = vmatpush1.msra.mxu0 0.0
  %361 = vmatprep.subr.mxu0 0.0
  %362 = vmatpush1.msra.mxu0 0.0
  %363 = vmatprep.subr.mxu0 0.0
  %364 = vmatpush1.msra.mxu0 0.0
  %365 = vmatprep.subr.mxu0 0.0
  %366 = vmatpush1.msra.mxu0 0.0
  %367 = vmatprep.subr.mxu0 0.0
  %368 = vmatpush1.msra.mxu0 0.0
  %369 = vmatprep.subr.mxu0 0.0
  %370 = vmatpush1.msra.mxu0 0.0
  %371 = vmatprep.subr.mxu0 0.0
  %372 = vmatpush1.msra.mxu0 0.0
  %373 = vmatprep.subr.mxu0 0.0
  %374 = vmatpush1.msra.mxu0 0.0
  %375 = vmatprep.subr.mxu0 0.0
  %376 = vmatpush1.msra.mxu0 0.0
  %377 = vmatprep.subr.mxu0 0.0
  %378 = vmatpush1.msra.mxu0 0.0
  %379 = vmatprep.subr.mxu0 0.0
  %380 = vmatpush1.msra.mxu0 0.0
  %381 = vmatprep.subr.mxu0 0.0
  %382 = vmatpush1.msra.mxu0 0.0
  %383 = vmatprep.subr.mxu0 0.0
  %384 = vmatpush1.msra.mxu0 0.0
  %385 = vmatprep.subr.mxu0 0.0
  %386 = vmatpush1.msra.mxu0 0.0
  %387 = vmatprep.subr.mxu0 0.0
  %388 = vmatpush1.msra.mxu0 0.0
  %389 = vmatprep.subr.mxu0 0.0
  %390 = vmatpush1.msra.mxu0 %v17
  %391 = vmatprep.subr.mxu0 0.0
  %392 = vmatpush2.msra.mxu0 0.0
  %393 = vmatprep.subr.mxu0 0.0
  %394 = vmatpush2.msra.mxu0 0.0
  %395 = vmatprep.subr.mxu0 0.0
  %396 = vmatpush2.msra.mxu0 0.0
  %397 = vmatprep.subr.mxu0 0.0
  %398 = vmatpush2.msra.mxu0 0.0
  %399 = vmatprep.subr.mxu0 0.0
  %400 = vmatpush2.msra.mxu0 0.0
  %401 = vmatprep.subr.mxu0 0.0
  %402 = vmatpush2.msra.mxu0 0.0
  %403 = vmatprep.subr.mxu0 0.0
  %404 = vmatpush2.msra.mxu0 0.0
  %405 = vmatprep.subr.mxu0 0.0
  %406 = vmatpush2.msra.mxu0 0.0
  %407 = vmatprep.subr.mxu0 0.0
  %408 = vmatpush2.msra.mxu0 0.0
  %409 = vmatprep.subr.mxu0 0.0
  %410 = vmatpush2.msra.mxu0 0.0
  %411 = vmatprep.subr.mxu0 0.0
  %412 = vmatpush2.msra.mxu0 0.0
  %413 = vmatprep.subr.mxu0 0.0
  %414 = vmatpush2.msra.mxu0 0.0
  %415 = vmatprep.subr.mxu0 0.0
  %416 = vmatpush2.msra.mxu0 0.0
  %417 = vmatprep.subr.mxu0 0.0
  %418 = vmatpush2.msra.mxu0 0.0
  %419 = vmatprep.subr.mxu0 0.0
  %420 = vmatpush2.msra.mxu0 0.0
  %421 = vmatprep.subr.mxu0 0.0
  %422 = vmatpush2.msra.mxu0 0.0
  %423 = vmatprep.mubr.f32.mxu0 0.0
  %424 = vmatmul.mubr.f32.gmra.mxu0 %v119
  %v425 = vpop.f32.mrf.mxu0
  %v426 = vadd.f32 0.0, %v425
  %v427 = vpop.f32.mrf.mxu0
  %428 = vmatprep.mubr.f32.mxu0 0.0
  %429 = vmatmul.mubr.f32.gmra.mxu0 %v121
  %v430 = vpop.f32.mrf.mxu0
  %v431 = vadd.f32 0.0, %v430
  %v432 = vpop.f32.mrf.mxu0
  %433 = vdwg.mxu0
  %v435 = vsel %vm43, %v19, 0
  %437 = vmatprep.subr.mxu0 0.0
  %438 = vmatpush1.msra.mxu0 0.0
  %439 = vmatprep.subr.mxu0 0.0
  %440 = vmatpush1.msra.mxu0 0.0
  %441 = vmatprep.subr.mxu0 0.0
  %442 = vmatpush1.msra.mxu0 0.0
  %443 = vmatprep.subr.mxu0 0.0
  %444 = vmatpush1.msra.mxu0 0.0
  %445 = vmatprep.subr.mxu0 0.0
  %446 = vmatpush1.msra.mxu0 0.0
  %447 = vmatprep.subr.mxu0 0.0
  %448 = vmatpush1.msra.mxu0 0.0
  %449 = vmatprep.subr.mxu0 0.0
  %450 = vmatpush1.msra.mxu0 0.0
  %451 = vmatprep.subr.mxu0 0.0
  %452 = vmatpush1.msra.mxu0 0.0
  %453 = vmatprep.subr.mxu0 0.0
  %454 = vmatpush1.msra.mxu0 0.0
  %455 = vmatprep.subr.mxu0 0.0
  %456 = vmatpush1.msra.mxu0 0.0
  %457 = vmatprep.subr.mxu0 0.0
  %458 = vmatpush1.msra.mxu0 0.0
  %459 = vmatprep.subr.mxu0 0.0
  %460 = vmatpush1.msra.mxu0 0.0
  %461 = vmatprep.subr.mxu0 0.0
  %462 = vmatpush1.msra.mxu0 0.0
  %463 = vmatprep.subr.mxu0 0.0
  %464 = vmatpush1.msra.mxu0 0.0
  %465 = vmatprep.subr.mxu0 0.0
  %466 = vmatpush1.msra.mxu0 %v435
  %467 = vmatprep.subr.mxu0 0.0
  %468 = vmatpush1.msra.mxu0 %v18
  %469 = vmatprep.subr.mxu0 0.0
  %470 = vmatpush2.msra.mxu0 0.0
  %471 = vmatprep.subr.mxu0 0.0
  %472 = vmatpush2.msra.mxu0 0.0
  %473 = vmatprep.subr.mxu0 0.0
  %474 = vmatpush2.msra.mxu0 0.0
  %475 = vmatprep.subr.mxu0 0.0
  %476 = vmatpush2.msra.mxu0 0.0
  %477 = vmatprep.subr.mxu0 0.0
  %478 = vmatpush2.msra.mxu0 0.0
  %479 = vmatprep.subr.mxu0 0.0
  %480 = vmatpush2.msra.mxu0 0.0
  %481 = vmatprep.subr.mxu0 0.0
  %482 = vmatpush2.msra.mxu0 0.0
  %483 = vmatprep.subr.mxu0 0.0
  %484 = vmatpush2.msra.mxu0 0.0
  %485 = vmatprep.subr.mxu0 0.0
  %486 = vmatpush2.msra.mxu0 0.0
  %487 = vmatprep.subr.mxu0 0.0
  %488 = vmatpush2.msra.mxu0 0.0
  %489 = vmatprep.subr.mxu0 0.0
  %490 = vmatpush2.msra.mxu0 0.0
  %491 = vmatprep.subr.mxu0 0.0
  %492 = vmatpush2.msra.mxu0 0.0
  %493 = vmatprep.subr.mxu0 0.0
  %494 = vmatpush2.msra.mxu0 0.0
  %495 = vmatprep.subr.mxu0 0.0
  %496 = vmatpush2.msra.mxu0 0.0
  %497 = vmatprep.subr.mxu0 0.0
  %498 = vmatpush2.msra.mxu0 0.0
  %499 = vmatprep.subr.mxu0 0.0
  %500 = vmatpush2.msra.mxu0 0.0
  %501 = vmatprep.mubr.f32.mxu0 0.0
  %502 = vmatmul.mubr.f32.gmra.mxu0 %v285
  %v503 = vpop.f32.mrf.mxu0
  %v504 = vadd.f32 0.0, %v503
  %v505 = vpop.f32.mrf.mxu0
  %506 = vdwg.mxu0
  %v507 = vlaneseq
  %v508 = vshrl.u32 %v507, 7
  %v509 = vsub.s32 0, %v508
  %v510 = vrot.slane %v37, %v509
  %v511 = vmul.f32 %v17, %v510
  %v512 = vsel %vm198, %v511, 0.0
  %513 = vadd.xlane.f32.xlu0 %v512
  %v514 = vpop.xlane.xlu0 %513
  %v516 = vrot.slane %v37, 7
  %v517 = vsel %vm198, %v516, 0
  %v520 = vsel %vm198, %v17, 0
  %522 = vmatprep.subr.mxu0 0.0
  %523 = vmatpush1.xpose.msra.mxu0 0.0
  %524 = vmatprep.subr.mxu0 0.0
  %525 = vmatpush1.xpose.msra.mxu0 0.0
  %526 = vmatprep.subr.mxu0 0.0
  %527 = vmatpush1.xpose.msra.mxu0 0.0
  %528 = vmatprep.subr.mxu0 0.0
  %529 = vmatpush1.xpose.msra.mxu0 0.0
  %530 = vmatprep.subr.mxu0 0.0
  %531 = vmatpush1.xpose.msra.mxu0 0.0
  %532 = vmatprep.subr.mxu0 0.0
  %533 = vmatpush1.xpose.msra.mxu0 0.0
  %534 = vmatprep.subr.mxu0 0.0
  %535 = vmatpush1.xpose.msra.mxu0 0.0
  %536 = vmatprep.subr.mxu0 0.0
  %537 = vmatpush1.xpose.msra.mxu0 0.0
  %538 = vmatprep.subr.mxu0 0.0
  %539 = vmatpush1.xpose.msra.mxu0 0.0
  %540 = vmatprep.subr.mxu0 0.0
  %541 = vmatpush1.xpose.msra.mxu0 0.0
  %542 = vmatprep.subr.mxu0 0.0
  %543 = vmatpush1.xpose.msra.mxu0 0.0
  %544 = vmatprep.subr.mxu0 0.0
  %545 = vmatpush1.xpose.msra.mxu0 0.0
  %546 = vmatprep.subr.mxu0 0.0
  %547 = vmatpush1.xpose.msra.mxu0 0.0
  %548 = vmatprep.subr.mxu0 0.0
  %549 = vmatpush1.xpose.msra.mxu0 0.0
  %550 = vmatprep.subr.mxu0 0.0
  %551 = vmatpush1.xpose.msra.mxu0 0.0
  %552 = vmatprep.subr.mxu0 0.0
  %553 = vmatpush1.xpose.msra.mxu0 %v520
  %554 = vmatprep.subr.mxu0 0.0
  %555 = vmatpush2.xpose.msra.mxu0 0.0
  %556 = vmatprep.subr.mxu0 0.0
  %557 = vmatpush2.xpose.msra.mxu0 0.0
  %558 = vmatprep.subr.mxu0 0.0
  %559 = vmatpush2.xpose.msra.mxu0 0.0
  %560 = vmatprep.subr.mxu0 0.0
  %561 = vmatpush2.xpose.msra.mxu0 0.0
  %562 = vmatprep.subr.mxu0 0.0
  %563 = vmatpush2.xpose.msra.mxu0 0.0
  %564 = vmatprep.subr.mxu0 0.0
  %565 = vmatpush2.xpose.msra.mxu0 0.0
  %566 = vmatprep.subr.mxu0 0.0
  %567 = vmatpush2.xpose.msra.mxu0 0.0
  %568 = vmatprep.subr.mxu0 0.0
  %569 = vmatpush2.xpose.msra.mxu0 0.0
  %570 = vmatprep.subr.mxu0 0.0
  %571 = vmatpush2.xpose.msra.mxu0 0.0
  %572 = vmatprep.subr.mxu0 0.0
  %573 = vmatpush2.xpose.msra.mxu0 0.0
  %574 = vmatprep.subr.mxu0 0.0
  %575 = vmatpush2.xpose.msra.mxu0 0.0
  %576 = vmatprep.subr.mxu0 0.0
  %577 = vmatpush2.xpose.msra.mxu0 0.0
  %578 = vmatprep.subr.mxu0 0.0
  %579 = vmatpush2.xpose.msra.mxu0 0.0
  %580 = vmatprep.subr.mxu0 0.0
  %581 = vmatpush2.xpose.msra.mxu0 0.0
  %582 = vmatprep.subr.mxu0 0.0
  %583 = vmatpush2.xpose.msra.mxu0 0.0
  %584 = vmatprep.subr.mxu0 0.0
  %585 = vmatpush2.xpose.msra.mxu0 0.0
  %586 = vmatprep.mubr.f32.mxu0 0.0
  %587 = vmatmul.mubr.f32.gmra.mxu0 %v517
  %v588 = vpop.f32.mrf.mxu0
  %v589 = vadd.f32 0.0, %v588
  %v590 = vpop.f32.mrf.mxu0
  %591 = vdwg.mxu0
  %v592 = vlaneseq
  %v593 = vshrl.u32 %v592, 7
  %v594 = vsub.s32 0, %v593
  %v595 = vrot.slane %v589, %v594
  %v596 = vadd.f32 %v514, %v595
  %vm597 = vcmp.gt.f32.partialorder %v596, 0.0
  %v598 = vmul.f32 %v596, 0.2
  %v599 = vsel %vm597, %v596, %v598
  %vm600 = vcmp.ne.f32.partialorder %v114, 0.0
  %v601 = vsel %vm600, %v599, -9e+15
  %v602 = vsel %vm117, %v601, -inf
  %603 = vmax.xlane.f32.xlu0 %v602
  %v604 = vpop.xlane.xlu0 %603
  %v605 = vsub.f32 %v601, %v604
  %v606 = vmul.f32 %v605, 1.442695
  %v607 = vpow.pop %v606
  %v608 = vsel %vm117, %v607, 0.0
  %609 = vadd.xlane.f32.xlu0 %v608
  %v610 = vpop.xlane.xlu0 %609
  %v611 = vrcp.pop %v610
  %v612 = vmul.f32 %v607, %v611
  %v613 = vlaneseq
  %v614 = vshrl.u32 %v613, 7
  %v615 = vsub.s32 1, %v614
  %v616 = vrot.slane %v37, %v615
  %v617 = vmul.f32 %v17, %v616
  %v618 = vsel %vm198, %v617, 0.0
  %619 = vadd.xlane.f32.xlu0 %v618
  %v620 = vpop.xlane.xlu0 %619
  %v622 = vsel %vm198, %v38, 0
  %624 = vmatprep.subr.mxu0 0.0
  %625 = vmatpush1.xpose.msra.mxu0 0.0
  %626 = vmatprep.subr.mxu0 0.0
  %627 = vmatpush1.xpose.msra.mxu0 0.0
  %628 = vmatprep.subr.mxu0 0.0
  %629 = vmatpush1.xpose.msra.mxu0 0.0
  %630 = vmatprep.subr.mxu0 0.0
  %631 = vmatpush1.xpose.msra.mxu0 0.0
  %632 = vmatprep.subr.mxu0 0.0
  %633 = vmatpush1.xpose.msra.mxu0 0.0
  %634 = vmatprep.subr.mxu0 0.0
  %635 = vmatpush1.xpose.msra.mxu0 0.0
  %636 = vmatprep.subr.mxu0 0.0
  %637 = vmatpush1.xpose.msra.mxu0 0.0
  %638 = vmatprep.subr.mxu0 0.0
  %639 = vmatpush1.xpose.msra.mxu0 0.0
  %640 = vmatprep.subr.mxu0 0.0
  %641 = vmatpush1.xpose.msra.mxu0 0.0
  %642 = vmatprep.subr.mxu0 0.0
  %643 = vmatpush1.xpose.msra.mxu0 0.0
  %644 = vmatprep.subr.mxu0 0.0
  %645 = vmatpush1.xpose.msra.mxu0 0.0
  %646 = vmatprep.subr.mxu0 0.0
  %647 = vmatpush1.xpose.msra.mxu0 0.0
  %648 = vmatprep.subr.mxu0 0.0
  %649 = vmatpush1.xpose.msra.mxu0 0.0
  %650 = vmatprep.subr.mxu0 0.0
  %651 = vmatpush1.xpose.msra.mxu0 0.0
  %652 = vmatprep.subr.mxu0 0.0
  %653 = vmatpush1.xpose.msra.mxu0 0.0
  %654 = vmatprep.subr.mxu0 0.0
  %655 = vmatpush1.xpose.msra.mxu0 %v520
  %656 = vmatprep.subr.mxu0 0.0
  %657 = vmatpush2.xpose.msra.mxu0 0.0
  %658 = vmatprep.subr.mxu0 0.0
  %659 = vmatpush2.xpose.msra.mxu0 0.0
  %660 = vmatprep.subr.mxu0 0.0
  %661 = vmatpush2.xpose.msra.mxu0 0.0
  %662 = vmatprep.subr.mxu0 0.0
  %663 = vmatpush2.xpose.msra.mxu0 0.0
  %664 = vmatprep.subr.mxu0 0.0
  %665 = vmatpush2.xpose.msra.mxu0 0.0
  %666 = vmatprep.subr.mxu0 0.0
  %667 = vmatpush2.xpose.msra.mxu0 0.0
  %668 = vmatprep.subr.mxu0 0.0
  %669 = vmatpush2.xpose.msra.mxu0 0.0
  %670 = vmatprep.subr.mxu0 0.0
  %671 = vmatpush2.xpose.msra.mxu0 0.0
  %672 = vmatprep.subr.mxu0 0.0
  %673 = vmatpush2.xpose.msra.mxu0 0.0
  %674 = vmatprep.subr.mxu0 0.0
  %675 = vmatpush2.xpose.msra.mxu0 0.0
  %676 = vmatprep.subr.mxu0 0.0
  %677 = vmatpush2.xpose.msra.mxu0 0.0
  %678 = vmatprep.subr.mxu0 0.0
  %679 = vmatpush2.xpose.msra.mxu0 0.0
  %680 = vmatprep.subr.mxu0 0.0
  %681 = vmatpush2.xpose.msra.mxu0 0.0
  %682 = vmatprep.subr.mxu0 0.0
  %683 = vmatpush2.xpose.msra.mxu0 0.0
  %684 = vmatprep.subr.mxu0 0.0
  %685 = vmatpush2.xpose.msra.mxu0 0.0
  %686 = vmatprep.subr.mxu0 0.0
  %687 = vmatpush2.xpose.msra.mxu0 0.0
  %688 = vmatprep.mubr.f32.mxu0 0.0
  %689 = vmatmul.mubr.f32.gmra.mxu0 %v622
  %v690 = vpop.f32.mrf.mxu0
  %v691 = vadd.f32 0.0, %v690
  %v692 = vpop.f32.mrf.mxu0
  %693 = vdwg.mxu0
  %v694 = vlaneseq
  %v695 = vshrl.u32 %v694, 7
  %v696 = vsub.s32 0, %v695
  %v697 = vrot.slane %v691, %v696
  %v698 = vadd.f32 %v620, %v697
  %vm699 = vcmp.gt.f32.partialorder %v698, 0.0
  %v700 = vmul.f32 %v698, 0.2
  %v701 = vsel %vm699, %v698, %v700
  %v702 = vsel %vm600, %v701, -9e+15
  %v703 = vsel %vm117, %v702, -inf
  %704 = vmax.xlane.f32.xlu0 %v703
  %v705 = vpop.xlane.xlu0 %704
  %v706 = vsub.f32 %v702, %v705
  %v707 = vmul.f32 %v706, 1.442695
  %v708 = vpow.pop %v707
  %v709 = vsel %vm117, %v708, 0.0
  %710 = vadd.xlane.f32.xlu0 %v709
  %v711 = vpop.xlane.xlu0 %710
  %v712 = vrcp.pop %v711
  %v713 = vmul.f32 %v708, %v712
  %v714 = vlaneseq
  %v715 = vshrl.u32 %v714, 7
  %v716 = vsub.s32 2, %v715
  %v717 = vrot.slane %v37, %v716
  %v718 = vmul.f32 %v18, %v717
  %v719 = vmul.f32 %v19, %v717
  %v720 = vsel %vm198, %v718, 0.0
  %721 = vadd.xlane.f32.xlu0 %v720
  %v722 = vpop.xlane.xlu0 %721
  %vm723 = vcmask 27648
  %v724 = vsel %vm723, %v719, 0.0
  %725 = vadd.xlane.f32.xlu0 %v724
  %v726 = vpop.xlane.xlu0 %725
  %v727 = vrot.slane %v38, 1
  %v728 = vsel %vm198, %v727, 0
  %v731 = vsel %vm198, %v18, 0
  %v733 = vsel %vm198, %v19, 0
  %735 = vmatprep.subr.mxu0 0.0
  %736 = vmatpush1.xpose.msra.mxu0 0.0
  %737 = vmatprep.subr.mxu0 0.0
  %738 = vmatpush1.xpose.msra.mxu0 0.0
  %739 = vmatprep.subr.mxu0 0.0
  %740 = vmatpush1.xpose.msra.mxu0 0.0
  %741 = vmatprep.subr.mxu0 0.0
  %742 = vmatpush1.xpose.msra.mxu0 0.0
  %743 = vmatprep.subr.mxu0 0.0
  %744 = vmatpush1.xpose.msra.mxu0 0.0
  %745 = vmatprep.subr.mxu0 0.0
  %746 = vmatpush1.xpose.msra.mxu0 0.0
  %747 = vmatprep.subr.mxu0 0.0
  %748 = vmatpush1.xpose.msra.mxu0 0.0
  %749 = vmatprep.subr.mxu0 0.0
  %750 = vmatpush1.xpose.msra.mxu0 0.0
  %751 = vmatprep.subr.mxu0 0.0
  %752 = vmatpush1.xpose.msra.mxu0 0.0
  %753 = vmatprep.subr.mxu0 0.0
  %754 = vmatpush1.xpose.msra.mxu0 0.0
  %755 = vmatprep.subr.mxu0 0.0
  %756 = vmatpush1.xpose.msra.mxu0 0.0
  %757 = vmatprep.subr.mxu0 0.0
  %758 = vmatpush1.xpose.msra.mxu0 0.0
  %759 = vmatprep.subr.mxu0 0.0
  %760 = vmatpush1.xpose.msra.mxu0 0.0
  %761 = vmatprep.subr.mxu0 0.0
  %762 = vmatpush1.xpose.msra.mxu0 0.0
  %763 = vmatprep.subr.mxu0 0.0
  %764 = vmatpush1.xpose.msra.mxu0 %v733
  %765 = vmatprep.subr.mxu0 0.0
  %766 = vmatpush1.xpose.msra.mxu0 %v731
  %767 = vmatprep.subr.mxu0 0.0
  %768 = vmatpush2.xpose.msra.mxu0 0.0
  %769 = vmatprep.subr.mxu0 0.0
  %770 = vmatpush2.xpose.msra.mxu0 0.0
  %771 = vmatprep.subr.mxu0 0.0
  %772 = vmatpush2.xpose.msra.mxu0 0.0
  %773 = vmatprep.subr.mxu0 0.0
  %774 = vmatpush2.xpose.msra.mxu0 0.0
  %775 = vmatprep.subr.mxu0 0.0
  %776 = vmatpush2.xpose.msra.mxu0 0.0
  %777 = vmatprep.subr.mxu0 0.0
  %778 = vmatpush2.xpose.msra.mxu0 0.0
  %779 = vmatprep.subr.mxu0 0.0
  %780 = vmatpush2.xpose.msra.mxu0 0.0
  %781 = vmatprep.subr.mxu0 0.0
  %782 = vmatpush2.xpose.msra.mxu0 0.0
  %783 = vmatprep.subr.mxu0 0.0
  %784 = vmatpush2.xpose.msra.mxu0 0.0
  %785 = vmatprep.subr.mxu0 0.0
  %786 = vmatpush2.xpose.msra.mxu0 0.0
  %787 = vmatprep.subr.mxu0 0.0
  %788 = vmatpush2.xpose.msra.mxu0 0.0
  %789 = vmatprep.subr.mxu0 0.0
  %790 = vmatpush2.xpose.msra.mxu0 0.0
  %791 = vmatprep.subr.mxu0 0.0
  %792 = vmatpush2.xpose.msra.mxu0 0.0
  %793 = vmatprep.subr.mxu0 0.0
  %794 = vmatpush2.xpose.msra.mxu0 0.0
  %795 = vmatprep.subr.mxu0 0.0
  %796 = vmatpush2.xpose.msra.mxu0 0.0
  %797 = vmatprep.subr.mxu0 0.0
  %798 = vmatpush2.xpose.msra.mxu0 0.0
  %799 = vmatprep.mubr.f32.mxu0 0.0
  %800 = vmatmul.mubr.f32.gmra.mxu0 %v728
  %v801 = vpop.f32.mrf.mxu0
  %v802 = vadd.f32 0.0, %v801
  %v803 = vpop.f32.mrf.mxu0
  %804 = vdwg.mxu0
  %v805 = vlaneseq
  %v806 = vshrl.u32 %v805, 7
  %v807 = vsub.s32 0, %v806
  %v808 = vrot.slane %v802, %v807
  %v809 = vadd.f32 %v722, %v808
  %v810 = vadd.f32 %v726, %v808
  %vm811 = vcmp.gt.f32.partialorder %v809, 0.0
  %vm812 = vcmp.gt.f32.partialorder %v810, 0.0
  %v813 = vmul.f32 %v809, 0.2
  %v814 = vmul.f32 %v810, 0.2
  %v815 = vsel %vm811, %v809, %v813
  %v816 = vsel %vm812, %v810, %v814
  %vm817 = vcmp.ne.f32.partialorder %v190, 0.0
  %vm818 = vcmp.ne.f32.partialorder %v195, 0.0
  %v819 = vsel %vm817, %v815, -9e+15
  %v820 = vsel %vm818, %v816, -9e+15
  %v821 = vsel %vm39, %v819, -inf
  %822 = vmax.xlane.f32.xlu0 %v821
  %v823 = vpop.xlane.xlu0 %822
  %vm824 = vcmask 93184
  %v825 = vsel %vm824, %v820, -inf
  %826 = vmax.xlane.f32.xlu0 %v825
  %v827 = vpop.xlane.xlu0 %826
  %v828 = vsub.f32 %v819, %v823
  %v829 = vsub.f32 %v820, %v827
  %v830 = vmul.f32 %v828, 1.442695
  %v831 = vpow.pop %v830
  %v832 = vmul.f32 %v829, 1.442695
  %v833 = vpow.pop %v832
  %v834 = vsel %vm39, %v831, 0.0
  %835 = vadd.xlane.f32.xlu0 %v834
  %v836 = vpop.xlane.xlu0 %835
  %v837 = vsel %vm824, %v833, 0.0
  %838 = vadd.xlane.f32.xlu0 %v837
  %v839 = vpop.xlane.xlu0 %838
  %v840 = vrcp.pop %v836
  %v841 = vrcp.pop %v839
  %v842 = vmul.f32 %v831, %v840
  %v843 = vmul.f32 %v833, %v841
  %v844 = vlaneseq
  %v845 = vshrl.u32 %v844, 7
  %v846 = vsub.s32 3, %v845
  %v847 = vrot.slane %v37, %v846
  %v848 = vmul.f32 %v426, %v847
  %v849 = vmul.f32 %v431, %v847
  %v850 = vsel %vm198, %v848, 0.0
  %851 = vadd.xlane.f32.xlu0 %v850
  %v852 = vpop.xlane.xlu0 %851
  %v853 = vsel %vm723, %v849, 0.0
  %854 = vadd.xlane.f32.xlu0 %v853
  %v855 = vpop.xlane.xlu0 %854
  %v856 = vrot.slane %v38, 2
  %v857 = vsel %vm198, %v856, 0
  %v860 = vsel %vm198, %v426, 0
  %v863 = vsel %vm198, %v431, 0
  %865 = vmatprep.subr.mxu0 0.0
  %866 = vmatpush1.xpose.msra.mxu0 0.0
  %867 = vmatprep.subr.mxu0 0.0
  %868 = vmatpush1.xpose.msra.mxu0 0.0
  %869 = vmatprep.subr.mxu0 0.0
  %870 = vmatpush1.xpose.msra.mxu0 0.0
  %871 = vmatprep.subr.mxu0 0.0
  %872 = vmatpush1.xpose.msra.mxu0 0.0
  %873 = vmatprep.subr.mxu0 0.0
  %874 = vmatpush1.xpose.msra.mxu0 0.0
  %875 = vmatprep.subr.mxu0 0.0
  %876 = vmatpush1.xpose.msra.mxu0 0.0
  %877 = vmatprep.subr.mxu0 0.0
  %878 = vmatpush1.xpose.msra.mxu0 0.0
  %879 = vmatprep.subr.mxu0 0.0
  %880 = vmatpush1.xpose.msra.mxu0 0.0
  %881 = vmatprep.subr.mxu0 0.0
  %882 = vmatpush1.xpose.msra.mxu0 0.0
  %883 = vmatprep.subr.mxu0 0.0
  %884 = vmatpush1.xpose.msra.mxu0 0.0
  %885 = vmatprep.subr.mxu0 0.0
  %886 = vmatpush1.xpose.msra.mxu0 0.0
  %887 = vmatprep.subr.mxu0 0.0
  %888 = vmatpush1.xpose.msra.mxu0 0.0
  %889 = vmatprep.subr.mxu0 0.0
  %890 = vmatpush1.xpose.msra.mxu0 0.0
  %891 = vmatprep.subr.mxu0 0.0
  %892 = vmatpush1.xpose.msra.mxu0 0.0
  %893 = vmatprep.subr.mxu0 0.0
  %894 = vmatpush1.xpose.msra.mxu0 %v863
  %895 = vmatprep.subr.mxu0 0.0
  %896 = vmatpush1.xpose.msra.mxu0 %v860
  %897 = vmatprep.subr.mxu0 0.0
  %898 = vmatpush2.xpose.msra.mxu0 0.0
  %899 = vmatprep.subr.mxu0 0.0
  %900 = vmatpush2.xpose.msra.mxu0 0.0
  %901 = vmatprep.subr.mxu0 0.0
  %902 = vmatpush2.xpose.msra.mxu0 0.0
  %903 = vmatprep.subr.mxu0 0.0
  %904 = vmatpush2.xpose.msra.mxu0 0.0
  %905 = vmatprep.subr.mxu0 0.0
  %906 = vmatpush2.xpose.msra.mxu0 0.0
  %907 = vmatprep.subr.mxu0 0.0
  %908 = vmatpush2.xpose.msra.mxu0 0.0
  %909 = vmatprep.subr.mxu0 0.0
  %910 = vmatpush2.xpose.msra.mxu0 0.0
  %911 = vmatprep.subr.mxu0 0.0
  %912 = vmatpush2.xpose.msra.mxu0 0.0
  %913 = vmatprep.subr.mxu0 0.0
  %914 = vmatpush2.xpose.msra.mxu0 0.0
  %915 = vmatprep.subr.mxu0 0.0
  %916 = vmatpush2.xpose.msra.mxu0 0.0
  %917 = vmatprep.subr.mxu0 0.0
  %918 = vmatpush2.xpose.msra.mxu0 0.0
  %919 = vmatprep.subr.mxu0 0.0
  %920 = vmatpush2.xpose.msra.mxu0 0.0
  %921 = vmatprep.subr.mxu0 0.0
  %922 = vmatpush2.xpose.msra.mxu0 0.0
  %923 = vmatprep.subr.mxu0 0.0
  %924 = vmatpush2.xpose.msra.mxu0 0.0
  %925 = vmatprep.subr.mxu0 0.0
  %926 = vmatpush2.xpose.msra.mxu0 0.0
  %927 = vmatprep.subr.mxu0 0.0
  %928 = vmatpush2.xpose.msra.mxu0 0.0
  %929 = vmatprep.mubr.f32.mxu0 0.0
  %930 = vmatmul.mubr.f32.gmra.mxu0 %v857
  %v931 = vpop.f32.mrf.mxu0
  %v932 = vadd.f32 0.0, %v931
  %v933 = vpop.f32.mrf.mxu0
  %934 = vdwg.mxu0
  %v935 = vlaneseq
  %v936 = vshrl.u32 %v935, 7
  %v937 = vsub.s32 0, %v936
  %v938 = vrot.slane %v932, %v937
  %v939 = vadd.f32 %v852, %v938
  %v940 = vadd.f32 %v855, %v938
  %vm941 = vcmp.gt.f32.partialorder %v939, 0.0
  %vm942 = vcmp.gt.f32.partialorder %v940, 0.0
  %v943 = vmul.f32 %v939, 0.2
  %v944 = vmul.f32 %v940, 0.2
  %v945 = vsel %vm941, %v939, %v943
  %v946 = vsel %vm942, %v940, %v944
  %v947 = vsel %vm817, %v945, -9e+15
  %v948 = vsel %vm818, %v946, -9e+15
  %v949 = vsel %vm39, %v947, -inf
  %950 = vmax.xlane.f32.xlu0 %v949
  %v951 = vpop.xlane.xlu0 %950
  %v952 = vsel %vm824, %v948, -inf
  %953 = vmax.xlane.f32.xlu0 %v952
  %v954 = vpop.xlane.xlu0 %953
  %v955 = vsub.f32 %v947, %v951
  %v956 = vsub.f32 %v948, %v954
  %v957 = vmul.f32 %v955, 1.442695
  %v958 = vpow.pop %v957
  %v959 = vmul.f32 %v956, 1.442695
  %v960 = vpow.pop %v959
  %v961 = vsel %vm39, %v958, 0.0
  %962 = vadd.xlane.f32.xlu0 %v961
  %v963 = vpop.xlane.xlu0 %962
  %v964 = vsel %vm824, %v960, 0.0
  %965 = vadd.xlane.f32.xlu0 %v964
  %v966 = vpop.xlane.xlu0 %965
  %v967 = vrcp.pop %v963
  %v968 = vrcp.pop %v966
  %v969 = vmul.f32 %v958, %v967
  %v970 = vmul.f32 %v960, %v968
  %v971 = vlaneseq
  %v972 = vshrl.u32 %v971, 7
  %v973 = vsub.s32 4, %v972
  %v974 = vrot.slane %v37, %v973
  %v975 = vmul.f32 %v18, %v974
  %v976 = vmul.f32 %v19, %v974
  %v977 = vsel %vm198, %v975, 0.0
  %978 = vadd.xlane.f32.xlu0 %v977
  %v979 = vpop.xlane.xlu0 %978
  %v980 = vsel %vm723, %v976, 0.0
  %981 = vadd.xlane.f32.xlu0 %v980
  %v982 = vpop.xlane.xlu0 %981
  %v983 = vrot.slane %v38, 3
  %v984 = vsel %vm198, %v983, 0
  %986 = vmatprep.subr.mxu0 0.0
  %987 = vmatpush1.xpose.msra.mxu0 0.0
  %988 = vmatprep.subr.mxu0 0.0
  %989 = vmatpush1.xpose.msra.mxu0 0.0
  %990 = vmatprep.subr.mxu0 0.0
  %991 = vmatpush1.xpose.msra.mxu0 0.0
  %992 = vmatprep.subr.mxu0 0.0
  %993 = vmatpush1.xpose.msra.mxu0 0.0
  %994 = vmatprep.subr.mxu0 0.0
  %995 = vmatpush1.xpose.msra.mxu0 0.0
  %996 = vmatprep.subr.mxu0 0.0
  %997 = vmatpush1.xpose.msra.mxu0 0.0
  %998 = vmatprep.subr.mxu0 0.0
  %999 = vmatpush1.xpose.msra.mxu0 0.0
  %1000 = vmatprep.subr.mxu0 0.0
  %1001 = vmatpush1.xpose.msra.mxu0 0.0
  %1002 = vmatprep.subr.mxu0 0.0
  %1003 = vmatpush1.xpose.msra.mxu0 0.0
  %1004 = vmatprep.subr.mxu0 0.0
  %1005 = vmatpush1.xpose.msra.mxu0 0.0
  %1006 = vmatprep.subr.mxu0 0.0
  %1007 = vmatpush1.xpose.msra.mxu0 0.0
  %1008 = vmatprep.subr.mxu0 0.0
  %1009 = vmatpush1.xpose.msra.mxu0 0.0
  %1010 = vmatprep.subr.mxu0 0.0
  %1011 = vmatpush1.xpose.msra.mxu0 0.0
  %1012 = vmatprep.subr.mxu0 0.0
  %1013 = vmatpush1.xpose.msra.mxu0 0.0
  %1014 = vmatprep.subr.mxu0 0.0
  %1015 = vmatpush1.xpose.msra.mxu0 %v733
  %1016 = vmatprep.subr.mxu0 0.0
  %1017 = vmatpush1.xpose.msra.mxu0 %v731
  %1018 = vmatprep.subr.mxu0 0.0
  %1019 = vmatpush2.xpose.msra.mxu0 0.0
  %1020 = vmatprep.subr.mxu0 0.0
  %1021 = vmatpush2.xpose.msra.mxu0 0.0
  %1022 = vmatprep.subr.mxu0 0.0
  %1023 = vmatpush2.xpose.msra.mxu0 0.0
  %1024 = vmatprep.subr.mxu0 0.0
  %1025 = vmatpush2.xpose.msra.mxu0 0.0
  %1026 = vmatprep.subr.mxu0 0.0
  %1027 = vmatpush2.xpose.msra.mxu0 0.0
  %1028 = vmatprep.subr.mxu0 0.0
  %1029 = vmatpush2.xpose.msra.mxu0 0.0
  %1030 = vmatprep.subr.mxu0 0.0
  %1031 = vmatpush2.xpose.msra.mxu0 0.0
  %1032 = vmatprep.subr.mxu0 0.0
  %1033 = vmatpush2.xpose.msra.mxu0 0.0
  %1034 = vmatprep.subr.mxu0 0.0
  %1035 = vmatpush2.xpose.msra.mxu0 0.0
  %1036 = vmatprep.subr.mxu0 0.0
  %1037 = vmatpush2.xpose.msra.mxu0 0.0
  %1038 = vmatprep.subr.mxu0 0.0
  %1039 = vmatpush2.xpose.msra.mxu0 0.0
  %1040 = vmatprep.subr.mxu0 0.0
  %1041 = vmatpush2.xpose.msra.mxu0 0.0
  %1042 = vmatprep.subr.mxu0 0.0
  %1043 = vmatpush2.xpose.msra.mxu0 0.0
  %1044 = vmatprep.subr.mxu0 0.0
  %1045 = vmatpush2.xpose.msra.mxu0 0.0
  %1046 = vmatprep.subr.mxu0 0.0
  %1047 = vmatpush2.xpose.msra.mxu0 0.0
  %1048 = vmatprep.subr.mxu0 0.0
  %1049 = vmatpush2.xpose.msra.mxu0 0.0
  %1050 = vmatprep.mubr.f32.mxu0 0.0
  %1051 = vmatmul.mubr.f32.gmra.mxu0 %v984
  %v1052 = vpop.f32.mrf.mxu0
  %v1053 = vadd.f32 0.0, %v1052
  %v1054 = vpop.f32.mrf.mxu0
  %1055 = vdwg.mxu0
  %v1056 = vlaneseq
  %v1057 = vshrl.u32 %v1056, 7
  %v1058 = vsub.s32 0, %v1057
  %v1059 = vrot.slane %v1053, %v1058
  %v1060 = vadd.f32 %v979, %v1059
  %v1061 = vadd.f32 %v982, %v1059
  %vm1062 = vcmp.gt.f32.partialorder %v1060, 0.0
  %vm1063 = vcmp.gt.f32.partialorder %v1061, 0.0
  %v1064 = vmul.f32 %v1060, 0.2
  %v1065 = vmul.f32 %v1061, 0.2
  %v1066 = vsel %vm1062, %v1060, %v1064
  %v1067 = vsel %vm1063, %v1061, %v1065
  %vm1068 = vcmp.ne.f32.partialorder %v275, 0.0
  %vm1069 = vcmp.ne.f32.partialorder %v280, 0.0
  %v1070 = vsel %vm1068, %v1066, -9e+15
  %v1071 = vsel %vm1069, %v1067, -9e+15
  %v1072 = vsel %vm39, %v1070, -inf
  %1073 = vmax.xlane.f32.xlu0 %v1072
  %v1074 = vpop.xlane.xlu0 %1073
  %v1075 = vsel %vm824, %v1071, -inf
  %1076 = vmax.xlane.f32.xlu0 %v1075
  %v1077 = vpop.xlane.xlu0 %1076
  %v1078 = vsub.f32 %v1070, %v1074
  %v1079 = vsub.f32 %v1071, %v1077
  %v1080 = vmul.f32 %v1078, 1.442695
  %v1081 = vpow.pop %v1080
  %v1082 = vmul.f32 %v1079, 1.442695
  %v1083 = vpow.pop %v1082
  %v1084 = vsel %vm39, %v1081, 0.0
  %1085 = vadd.xlane.f32.xlu0 %v1084
  %v1086 = vpop.xlane.xlu0 %1085
  %v1087 = vsel %vm824, %v1083, 0.0
  %1088 = vadd.xlane.f32.xlu0 %v1087
  %v1089 = vpop.xlane.xlu0 %1088
  %v1090 = vrcp.pop %v1086
  %v1091 = vrcp.pop %v1089
  %v1092 = vmul.f32 %v1081, %v1090
  %v1093 = vmul.f32 %v1083, %v1091
  %v1094 = vlaneseq
  %v1095 = vshrl.u32 %v1094, 7
  %v1096 = vsub.s32 5, %v1095
  %v1097 = vrot.slane %v37, %v1096
  %v1098 = vmul.f32 %v20, %v1097
  %v1099 = vsel %vm723, %v1098, 0.0
  %1100 = vadd.xlane.f32.xlu0 %v1099
  %v1101 = vpop.xlane.xlu0 %1100
  %v1102 = vrot.slane %v38, 4
  %v1103 = vsel %vm198, %v1102, 0
  %v1106 = vsel %vm198, %v20, 0
  %1108 = vmatprep.subr.mxu0 0.0
  %1109 = vmatpush1.xpose.msra.mxu0 0.0
  %1110 = vmatprep.subr.mxu0 0.0
  %1111 = vmatpush1.xpose.msra.mxu0 0.0
  %1112 = vmatprep.subr.mxu0 0.0
  %1113 = vmatpush1.xpose.msra.mxu0 0.0
  %1114 = vmatprep.subr.mxu0 0.0
  %1115 = vmatpush1.xpose.msra.mxu0 0.0
  %1116 = vmatprep.subr.mxu0 0.0
  %1117 = vmatpush1.xpose.msra.mxu0 0.0
  %1118 = vmatprep.subr.mxu0 0.0
  %1119 = vmatpush1.xpose.msra.mxu0 0.0
  %1120 = vmatprep.subr.mxu0 0.0
  %1121 = vmatpush1.xpose.msra.mxu0 0.0
  %1122 = vmatprep.subr.mxu0 0.0
  %1123 = vmatpush1.xpose.msra.mxu0 0.0
  %1124 = vmatprep.subr.mxu0 0.0
  %1125 = vmatpush1.xpose.msra.mxu0 0.0
  %1126 = vmatprep.subr.mxu0 0.0
  %1127 = vmatpush1.xpose.msra.mxu0 0.0
  %1128 = vmatprep.subr.mxu0 0.0
  %1129 = vmatpush1.xpose.msra.mxu0 0.0
  %1130 = vmatprep.subr.mxu0 0.0
  %1131 = vmatpush1.xpose.msra.mxu0 0.0
  %1132 = vmatprep.subr.mxu0 0.0
  %1133 = vmatpush1.xpose.msra.mxu0 0.0
  %1134 = vmatprep.subr.mxu0 0.0
  %1135 = vmatpush1.xpose.msra.mxu0 0.0
  %1136 = vmatprep.subr.mxu0 0.0
  %1137 = vmatpush1.xpose.msra.mxu0 0.0
  %1138 = vmatprep.subr.mxu0 0.0
  %1139 = vmatpush1.xpose.msra.mxu0 %v1106
  %1140 = vmatprep.subr.mxu0 0.0
  %1141 = vmatpush2.xpose.msra.mxu0 0.0
  %1142 = vmatprep.subr.mxu0 0.0
  %1143 = vmatpush2.xpose.msra.mxu0 0.0
  %1144 = vmatprep.subr.mxu0 0.0
  %1145 = vmatpush2.xpose.msra.mxu0 0.0
  %1146 = vmatprep.subr.mxu0 0.0
  %1147 = vmatpush2.xpose.msra.mxu0 0.0
  %1148 = vmatprep.subr.mxu0 0.0
  %1149 = vmatpush2.xpose.msra.mxu0 0.0
  %1150 = vmatprep.subr.mxu0 0.0
  %1151 = vmatpush2.xpose.msra.mxu0 0.0
  %1152 = vmatprep.subr.mxu0 0.0
  %1153 = vmatpush2.xpose.msra.mxu0 0.0
  %1154 = vmatprep.subr.mxu0 0.0
  %1155 = vmatpush2.xpose.msra.mxu0 0.0
  %1156 = vmatprep.subr.mxu0 0.0
  %1157 = vmatpush2.xpose.msra.mxu0 0.0
  %1158 = vmatprep.subr.mxu0 0.0
  %1159 = vmatpush2.xpose.msra.mxu0 0.0
  %1160 = vmatprep.subr.mxu0 0.0
  %1161 = vmatpush2.xpose.msra.mxu0 0.0
  %1162 = vmatprep.subr.mxu0 0.0
  %1163 = vmatpush2.xpose.msra.mxu0 0.0
  %1164 = vmatprep.subr.mxu0 0.0
  %1165 = vmatpush2.xpose.msra.mxu0 0.0
  %1166 = vmatprep.subr.mxu0 0.0
  %1167 = vmatpush2.xpose.msra.mxu0 0.0
  %1168 = vmatprep.subr.mxu0 0.0
  %1169 = vmatpush2.xpose.msra.mxu0 0.0
  %1170 = vmatprep.subr.mxu0 0.0
  %1171 = vmatpush2.xpose.msra.mxu0 0.0
  %1172 = vmatprep.mubr.f32.mxu0 0.0
  %1173 = vmatmul.mubr.f32.gmra.mxu0 %v1103
  %v1174 = vpop.f32.mrf.mxu0
  %v1175 = vadd.f32 0.0, %v1174
  %v1176 = vpop.f32.mrf.mxu0
  %1177 = vdwg.mxu0
  %v1178 = vlaneseq
  %v1179 = vshrl.u32 %v1178, 7
  %v1180 = vsub.s32 0, %v1179
  %v1181 = vrot.slane %v1175, %v1180
  %v1182 = vadd.f32 %v1101, %v1181
  %vm1183 = vcmp.gt.f32.partialorder %v1182, 0.0
  %v1184 = vmul.f32 %v1182, 0.2
  %v1185 = vsel %vm1183, %v1182, %v1184
  %vm1186 = vcmp.ne.f32.partialorder %v356, 0.0
  %v1187 = vsel %vm1186, %v1185, -9e+15
  %v1188 = vsel %vm723, %v1187, -inf
  %1189 = vmax.xlane.f32.xlu0 %v1188
  %v1190 = vpop.xlane.xlu0 %1189
  %v1191 = vsub.f32 %v1187, %v1190
  %v1192 = vmul.f32 %v1191, 1.442695
  %v1193 = vpow.pop %v1192
  %v1194 = vsel %vm723, %v1193, 0.0
  %1195 = vadd.xlane.f32.xlu0 %v1194
  %v1196 = vpop.xlane.xlu0 %1195
  %v1197 = vrcp.pop %v1196
  %v1198 = vmul.f32 %v1193, %v1197
  %v1199 = vlaneseq
  %v1200 = vshrl.u32 %v1199, 7
  %v1201 = vsub.s32 6, %v1200
  %v1202 = vrot.slane %v37, %v1201
  %v1203 = vmul.f32 %v504, %v1202
  %v1204 = vsel %vm723, %v1203, 0.0
  %1205 = vadd.xlane.f32.xlu0 %v1204
  %v1206 = vpop.xlane.xlu0 %1205
  %v1207 = vrot.slane %v38, 5
  %v1208 = vsel %vm198, %v1207, 0
  %v1211 = vsel %vm198, %v504, 0
  %1213 = vmatprep.subr.mxu0 0.0
  %1214 = vmatpush1.xpose.msra.mxu0 0.0
  %1215 = vmatprep.subr.mxu0 0.0
  %1216 = vmatpush1.xpose.msra.mxu0 0.0
  %1217 = vmatprep.subr.mxu0 0.0
  %1218 = vmatpush1.xpose.msra.mxu0 0.0
  %1219 = vmatprep.subr.mxu0 0.0
  %1220 = vmatpush1.xpose.msra.mxu0 0.0
  %1221 = vmatprep.subr.mxu0 0.0
  %1222 = vmatpush1.xpose.msra.mxu0 0.0
  %1223 = vmatprep.subr.mxu0 0.0
  %1224 = vmatpush1.xpose.msra.mxu0 0.0
  %1225 = vmatprep.subr.mxu0 0.0
  %1226 = vmatpush1.xpose.msra.mxu0 0.0
  %1227 = vmatprep.subr.mxu0 0.0
  %1228 = vmatpush1.xpose.msra.mxu0 0.0
  %1229 = vmatprep.subr.mxu0 0.0
  %1230 = vmatpush1.xpose.msra.mxu0 0.0
  %1231 = vmatprep.subr.mxu0 0.0
  %1232 = vmatpush1.xpose.msra.mxu0 0.0
  %1233 = vmatprep.subr.mxu0 0.0
  %1234 = vmatpush1.xpose.msra.mxu0 0.0
  %1235 = vmatprep.subr.mxu0 0.0
  %1236 = vmatpush1.xpose.msra.mxu0 0.0
  %1237 = vmatprep.subr.mxu0 0.0
  %1238 = vmatpush1.xpose.msra.mxu0 0.0
  %1239 = vmatprep.subr.mxu0 0.0
  %1240 = vmatpush1.xpose.msra.mxu0 0.0
  %1241 = vmatprep.subr.mxu0 0.0
  %1242 = vmatpush1.xpose.msra.mxu0 0.0
  %1243 = vmatprep.subr.mxu0 0.0
  %1244 = vmatpush1.xpose.msra.mxu0 %v1211
  %1245 = vmatprep.subr.mxu0 0.0
  %1246 = vmatpush2.xpose.msra.mxu0 0.0
  %1247 = vmatprep.subr.mxu0 0.0
  %1248 = vmatpush2.xpose.msra.mxu0 0.0
  %1249 = vmatprep.subr.mxu0 0.0
  %1250 = vmatpush2.xpose.msra.mxu0 0.0
  %1251 = vmatprep.subr.mxu0 0.0
  %1252 = vmatpush2.xpose.msra.mxu0 0.0
  %1253 = vmatprep.subr.mxu0 0.0
  %1254 = vmatpush2.xpose.msra.mxu0 0.0
  %1255 = vmatprep.subr.mxu0 0.0
  %1256 = vmatpush2.xpose.msra.mxu0 0.0
  %1257 = vmatprep.subr.mxu0 0.0
  %1258 = vmatpush2.xpose.msra.mxu0 0.0
  %1259 = vmatprep.subr.mxu0 0.0
  %1260 = vmatpush2.xpose.msra.mxu0 0.0
  %1261 = vmatprep.subr.mxu0 0.0
  %1262 = vmatpush2.xpose.msra.mxu0 0.0
  %1263 = vmatprep.subr.mxu0 0.0
  %1264 = vmatpush2.xpose.msra.mxu0 0.0
  %1265 = vmatprep.subr.mxu0 0.0
  %1266 = vmatpush2.xpose.msra.mxu0 0.0
  %1267 = vmatprep.subr.mxu0 0.0
  %1268 = vmatpush2.xpose.msra.mxu0 0.0
  %1269 = vmatprep.subr.mxu0 0.0
  %1270 = vmatpush2.xpose.msra.mxu0 0.0
  %1271 = vmatprep.subr.mxu0 0.0
  %1272 = vmatpush2.xpose.msra.mxu0 0.0
  %1273 = vmatprep.subr.mxu0 0.0
  %1274 = vmatpush2.xpose.msra.mxu0 0.0
  %1275 = vmatprep.subr.mxu0 0.0
  %1276 = vmatpush2.xpose.msra.mxu0 0.0
  %1277 = vmatprep.mubr.f32.mxu0 0.0
  %1278 = vmatmul.mubr.f32.gmra.mxu0 %v1208
  %v1279 = vpop.f32.mrf.mxu0
  %v1280 = vadd.f32 0.0, %v1279
  %v1281 = vpop.f32.mrf.mxu0
  %1282 = vdwg.mxu0
  %v1283 = vlaneseq
  %v1284 = vshrl.u32 %v1283, 7
  %v1285 = vsub.s32 0, %v1284
  %v1286 = vrot.slane %v1280, %v1285
  %v1287 = vadd.f32 %v1206, %v1286
  %vm1288 = vcmp.gt.f32.partialorder %v1287, 0.0
  %v1289 = vmul.f32 %v1287, 0.2
  %v1290 = vsel %vm1288, %v1287, %v1289
  %v1291 = vsel %vm1186, %v1290, -9e+15
  %v1292 = vsel %vm723, %v1291, -inf
  %1293 = vmax.xlane.f32.xlu0 %v1292
  %v1294 = vpop.xlane.xlu0 %1293
  %v1295 = vsub.f32 %v1291, %v1294
  %v1296 = vmul.f32 %v1295, 1.442695
  %v1297 = vpow.pop %v1296
  %v1298 = vsel %vm723, %v1297, 0.0
  %1299 = vadd.xlane.f32.xlu0 %v1298
  %v1300 = vpop.xlane.xlu0 %1299
  %v1301 = vrcp.pop %v1300
  %v1302 = vmul.f32 %v1297, %v1301
  %v1304 = vsel %vm117, %v612, 0
  %1306 = vmatprep.subr.mxu0 0.0
  %1307 = vmatpush1.msra.mxu0 0.0
  %1308 = vmatprep.subr.mxu0 0.0
  %1309 = vmatpush1.msra.mxu0 0.0
  %1310 = vmatprep.subr.mxu0 0.0
  %1311 = vmatpush1.msra.mxu0 0.0
  %1312 = vmatprep.subr.mxu0 0.0
  %1313 = vmatpush1.msra.mxu0 0.0
  %1314 = vmatprep.subr.mxu0 0.0
  %1315 = vmatpush1.msra.mxu0 0.0
  %1316 = vmatprep.subr.mxu0 0.0
  %1317 = vmatpush1.msra.mxu0 0.0
  %1318 = vmatprep.subr.mxu0 0.0
  %1319 = vmatpush1.msra.mxu0 0.0
  %1320 = vmatprep.subr.mxu0 0.0
  %1321 = vmatpush1.msra.mxu0 0.0
  %1322 = vmatprep.subr.mxu0 0.0
  %1323 = vmatpush1.msra.mxu0 0.0
  %1324 = vmatprep.subr.mxu0 0.0
  %1325 = vmatpush1.msra.mxu0 0.0
  %1326 = vmatprep.subr.mxu0 0.0
  %1327 = vmatpush1.msra.mxu0 0.0
  %1328 = vmatprep.subr.mxu0 0.0
  %1329 = vmatpush1.msra.mxu0 0.0
  %1330 = vmatprep.subr.mxu0 0.0
  %1331 = vmatpush1.msra.mxu0 0.0
  %1332 = vmatprep.subr.mxu0 0.0
  %1333 = vmatpush1.msra.mxu0 0.0
  %1334 = vmatprep.subr.mxu0 0.0
  %1335 = vmatpush1.msra.mxu0 0.0
  %1336 = vmatprep.subr.mxu0 0.0
  %1337 = vmatpush1.msra.mxu0 %v17
  %1338 = vmatprep.subr.mxu0 0.0
  %1339 = vmatpush2.msra.mxu0 0.0
  %1340 = vmatprep.subr.mxu0 0.0
  %1341 = vmatpush2.msra.mxu0 0.0
  %1342 = vmatprep.subr.mxu0 0.0
  %1343 = vmatpush2.msra.mxu0 0.0
  %1344 = vmatprep.subr.mxu0 0.0
  %1345 = vmatpush2.msra.mxu0 0.0
  %1346 = vmatprep.subr.mxu0 0.0
  %1347 = vmatpush2.msra.mxu0 0.0
  %1348 = vmatprep.subr.mxu0 0.0
  %1349 = vmatpush2.msra.mxu0 0.0
  %1350 = vmatprep.subr.mxu0 0.0
  %1351 = vmatpush2.msra.mxu0 0.0
  %1352 = vmatprep.subr.mxu0 0.0
  %1353 = vmatpush2.msra.mxu0 0.0
  %1354 = vmatprep.subr.mxu0 0.0
  %1355 = vmatpush2.msra.mxu0 0.0
  %1356 = vmatprep.subr.mxu0 0.0
  %1357 = vmatpush2.msra.mxu0 0.0
  %1358 = vmatprep.subr.mxu0 0.0
  %1359 = vmatpush2.msra.mxu0 0.0
  %1360 = vmatprep.subr.mxu0 0.0
  %1361 = vmatpush2.msra.mxu0 0.0
  %1362 = vmatprep.subr.mxu0 0.0
  %1363 = vmatpush2.msra.mxu0 0.0
  %1364 = vmatprep.subr.mxu0 0.0
  %1365 = vmatpush2.msra.mxu0 0.0
  %1366 = vmatprep.subr.mxu0 0.0
  %1367 = vmatpush2.msra.mxu0 0.0
  %1368 = vmatprep.subr.mxu0 0.0
  %1369 = vmatpush2.msra.mxu0 0.0
  %1370 = vmatprep.mubr.f32.mxu0 0.0
  %1371 = vmatmul.mubr.f32.gmra.mxu0 %v1304
  %v1372 = vpop.f32.mrf.mxu0
  %v1373 = vadd.f32 0.0, %v1372
  %v1374 = vpop.f32.mrf.mxu0
  %1375 = vdwg.mxu0
  %1376 = vmatprep.subr.mxu0 0.0
  %1377 = vmatpush1.msra.mxu0 0.0
  %1378 = vmatprep.subr.mxu0 0.0
  %1379 = vmatpush1.msra.mxu0 0.0
  %1380 = vmatprep.subr.mxu0 0.0
  %1381 = vmatpush1.msra.mxu0 0.0
  %1382 = vmatprep.subr.mxu0 0.0
  %1383 = vmatpush1.msra.mxu0 0.0
  %1384 = vmatprep.subr.mxu0 0.0
  %1385 = vmatpush1.msra.mxu0 0.0
  %1386 = vmatprep.subr.mxu0 0.0
  %1387 = vmatpush1.msra.mxu0 0.0
  %1388 = vmatprep.subr.mxu0 0.0
  %1389 = vmatpush1.msra.mxu0 0.0
  %1390 = vmatprep.subr.mxu0 0.0
  %1391 = vmatpush1.msra.mxu0 0.0
  %1392 = vmatprep.subr.mxu0 0.0
  %1393 = vmatpush1.msra.mxu0 0.0
  %1394 = vmatprep.subr.mxu0 0.0
  %1395 = vmatpush1.msra.mxu0 0.0
  %1396 = vmatprep.subr.mxu0 0.0
  %1397 = vmatpush1.msra.mxu0 0.0
  %1398 = vmatprep.subr.mxu0 0.0
  %1399 = vmatpush1.msra.mxu0 0.0
  %1400 = vmatprep.subr.mxu0 0.0
  %1401 = vmatpush1.msra.mxu0 0.0
  %1402 = vmatprep.subr.mxu0 0.0
  %1403 = vmatpush1.msra.mxu0 0.0
  %1404 = vmatprep.subr.mxu0 0.0
  %1405 = vmatpush1.msra.mxu0 %v435
  %1406 = vmatprep.subr.mxu0 0.0
  %1407 = vmatpush1.msra.mxu0 %v18
  %1408 = vmatprep.subr.mxu0 0.0
  %1409 = vmatpush2.msra.mxu0 0.0
  %1410 = vmatprep.subr.mxu0 0.0
  %1411 = vmatpush2.msra.mxu0 0.0
  %1412 = vmatprep.subr.mxu0 0.0
  %1413 = vmatpush2.msra.mxu0 0.0
  %1414 = vmatprep.subr.mxu0 0.0
  %1415 = vmatpush2.msra.mxu0 0.0
  %1416 = vmatprep.subr.mxu0 0.0
  %1417 = vmatpush2.msra.mxu0 0.0
  %1418 = vmatprep.subr.mxu0 0.0
  %1419 = vmatpush2.msra.mxu0 0.0
  %1420 = vmatprep.subr.mxu0 0.0
  %1421 = vmatpush2.msra.mxu0 0.0
  %1422 = vmatprep.subr.mxu0 0.0
  %1423 = vmatpush2.msra.mxu0 0.0
  %1424 = vmatprep.subr.mxu0 0.0
  %1425 = vmatpush2.msra.mxu0 0.0
  %1426 = vmatprep.subr.mxu0 0.0
  %1427 = vmatpush2.msra.mxu0 0.0
  %1428 = vmatprep.subr.mxu0 0.0
  %1429 = vmatpush2.msra.mxu0 0.0
  %1430 = vmatprep.subr.mxu0 0.0
  %1431 = vmatpush2.msra.mxu0 0.0
  %1432 = vmatprep.subr.mxu0 0.0
  %1433 = vmatpush2.msra.mxu0 0.0
  %1434 = vmatprep.subr.mxu0 0.0
  %1435 = vmatpush2.msra.mxu0 0.0
  %1436 = vmatprep.subr.mxu0 0.0
  %1437 = vmatpush2.msra.mxu0 0.0
  %1438 = vmatprep.subr.mxu0 0.0
  %1439 = vmatpush2.msra.mxu0 0.0
  %1440 = vmatprep.mubr.f32.mxu0 0.0
  %1441 = vmatmul.mubr.f32.gmra.mxu0 %v41
  %v1442 = vpop.f32.mrf.mxu0
  %v1443 = vadd.f32 0.0, %v1442
  %v1444 = vpop.f32.mrf.mxu0
  %1445 = vdwg.mxu0
  %v1447 = vsel %vm117, %v713, 0
  %1449 = vmatprep.subr.mxu0 0.0
  %1450 = vmatpush1.msra.mxu0 0.0
  %1451 = vmatprep.subr.mxu0 0.0
  %1452 = vmatpush1.msra.mxu0 0.0
  %1453 = vmatprep.subr.mxu0 0.0
  %1454 = vmatpush1.msra.mxu0 0.0
  %1455 = vmatprep.subr.mxu0 0.0
  %1456 = vmatpush1.msra.mxu0 0.0
  %1457 = vmatprep.subr.mxu0 0.0
  %1458 = vmatpush1.msra.mxu0 0.0
  %1459 = vmatprep.subr.mxu0 0.0
  %1460 = vmatpush1.msra.mxu0 0.0
  %1461 = vmatprep.subr.mxu0 0.0
  %1462 = vmatpush1.msra.mxu0 0.0
  %1463 = vmatprep.subr.mxu0 0.0
  %1464 = vmatpush1.msra.mxu0 0.0
  %1465 = vmatprep.subr.mxu0 0.0
  %1466 = vmatpush1.msra.mxu0 0.0
  %1467 = vmatprep.subr.mxu0 0.0
  %1468 = vmatpush1.msra.mxu0 0.0
  %1469 = vmatprep.subr.mxu0 0.0
  %1470 = vmatpush1.msra.mxu0 0.0
  %1471 = vmatprep.subr.mxu0 0.0
  %1472 = vmatpush1.msra.mxu0 0.0
  %1473 = vmatprep.subr.mxu0 0.0
  %1474 = vmatpush1.msra.mxu0 0.0
  %1475 = vmatprep.subr.mxu0 0.0
  %1476 = vmatpush1.msra.mxu0 0.0
  %1477 = vmatprep.subr.mxu0 0.0
  %1478 = vmatpush1.msra.mxu0 0.0
  %1479 = vmatprep.subr.mxu0 0.0
  %1480 = vmatpush1.msra.mxu0 %v1443
  %1481 = vmatprep.subr.mxu0 0.0
  %1482 = vmatpush2.msra.mxu0 0.0
  %1483 = vmatprep.subr.mxu0 0.0
  %1484 = vmatpush2.msra.mxu0 0.0
  %1485 = vmatprep.subr.mxu0 0.0
  %1486 = vmatpush2.msra.mxu0 0.0
  %1487 = vmatprep.subr.mxu0 0.0
  %1488 = vmatpush2.msra.mxu0 0.0
  %1489 = vmatprep.subr.mxu0 0.0
  %1490 = vmatpush2.msra.mxu0 0.0
  %1491 = vmatprep.subr.mxu0 0.0
  %1492 = vmatpush2.msra.mxu0 0.0
  %1493 = vmatprep.subr.mxu0 0.0
  %1494 = vmatpush2.msra.mxu0 0.0
  %1495 = vmatprep.subr.mxu0 0.0
  %1496 = vmatpush2.msra.mxu0 0.0
  %1497 = vmatprep.subr.mxu0 0.0
  %1498 = vmatpush2.msra.mxu0 0.0
  %1499 = vmatprep.subr.mxu0 0.0
  %1500 = vmatpush2.msra.mxu0 0.0
  %1501 = vmatprep.subr.mxu0 0.0
  %1502 = vmatpush2.msra.mxu0 0.0
  %1503 = vmatprep.subr.mxu0 0.0
  %1504 = vmatpush2.msra.mxu0 0.0
  %1505 = vmatprep.subr.mxu0 0.0
  %1506 = vmatpush2.msra.mxu0 0.0
  %1507 = vmatprep.subr.mxu0 0.0
  %1508 = vmatpush2.msra.mxu0 0.0
  %1509 = vmatprep.subr.mxu0 0.0
  %1510 = vmatpush2.msra.mxu0 0.0
  %1511 = vmatprep.subr.mxu0 0.0
  %1512 = vmatpush2.msra.mxu0 0.0
  %1513 = vmatprep.mubr.f32.mxu0 0.0
  %1514 = vmatmul.mubr.f32.gmra.mxu0 %v1447
  %v1515 = vpop.f32.mrf.mxu0
  %v1516 = vadd.f32 0.0, %v1515
  %v1517 = vpop.f32.mrf.mxu0
  %1518 = vdwg.mxu0
  %v1520 = vsel %vm117, %v114, 0
  %1522 = vmatprep.subr.mxu0 0.0
  %1523 = vmatpush1.msra.mxu0 0.0
  %1524 = vmatprep.subr.mxu0 0.0
  %1525 = vmatpush1.msra.mxu0 0.0
  %1526 = vmatprep.subr.mxu0 0.0
  %1527 = vmatpush1.msra.mxu0 0.0
  %1528 = vmatprep.subr.mxu0 0.0
  %1529 = vmatpush1.msra.mxu0 0.0
  %1530 = vmatprep.subr.mxu0 0.0
  %1531 = vmatpush1.msra.mxu0 0.0
  %1532 = vmatprep.subr.mxu0 0.0
  %1533 = vmatpush1.msra.mxu0 0.0
  %1534 = vmatprep.subr.mxu0 0.0
  %1535 = vmatpush1.msra.mxu0 0.0
  %1536 = vmatprep.subr.mxu0 0.0
  %1537 = vmatpush1.msra.mxu0 0.0
  %1538 = vmatprep.subr.mxu0 0.0
  %1539 = vmatpush1.msra.mxu0 0.0
  %1540 = vmatprep.subr.mxu0 0.0
  %1541 = vmatpush1.msra.mxu0 0.0
  %1542 = vmatprep.subr.mxu0 0.0
  %1543 = vmatpush1.msra.mxu0 0.0
  %1544 = vmatprep.subr.mxu0 0.0
  %1545 = vmatpush1.msra.mxu0 0.0
  %1546 = vmatprep.subr.mxu0 0.0
  %1547 = vmatpush1.msra.mxu0 0.0
  %1548 = vmatprep.subr.mxu0 0.0
  %1549 = vmatpush1.msra.mxu0 0.0
  %1550 = vmatprep.subr.mxu0 0.0
  %1551 = vmatpush1.msra.mxu0 0.0
  %1552 = vmatprep.subr.mxu0 0.0
  %1553 = vmatpush1.msra.mxu0 %v17
  %1554 = vmatprep.subr.mxu0 0.0
  %1555 = vmatpush2.msra.mxu0 0.0
  %1556 = vmatprep.subr.mxu0 0.0
  %1557 = vmatpush2.msra.mxu0 0.0
  %1558 = vmatprep.subr.mxu0 0.0
  %1559 = vmatpush2.msra.mxu0 0.0
  %1560 = vmatprep.subr.mxu0 0.0
  %1561 = vmatpush2.msra.mxu0 0.0
  %1562 = vmatprep.subr.mxu0 0.0
  %1563 = vmatpush2.msra.mxu0 0.0
  %1564 = vmatprep.subr.mxu0 0.0
  %1565 = vmatpush2.msra.mxu0 0.0
  %1566 = vmatprep.subr.mxu0 0.0
  %1567 = vmatpush2.msra.mxu0 0.0
  %1568 = vmatprep.subr.mxu0 0.0
  %1569 = vmatpush2.msra.mxu0 0.0
  %1570 = vmatprep.subr.mxu0 0.0
  %1571 = vmatpush2.msra.mxu0 0.0
  %1572 = vmatprep.subr.mxu0 0.0
  %1573 = vmatpush2.msra.mxu0 0.0
  %1574 = vmatprep.subr.mxu0 0.0
  %1575 = vmatpush2.msra.mxu0 0.0
  %1576 = vmatprep.subr.mxu0 0.0
  %1577 = vmatpush2.msra.mxu0 0.0
  %1578 = vmatprep.subr.mxu0 0.0
  %1579 = vmatpush2.msra.mxu0 0.0
  %1580 = vmatprep.subr.mxu0 0.0
  %1581 = vmatpush2.msra.mxu0 0.0
  %1582 = vmatprep.subr.mxu0 0.0
  %1583 = vmatpush2.msra.mxu0 0.0
  %1584 = vmatprep.subr.mxu0 0.0
  %1585 = vmatpush2.msra.mxu0 0.0
  %1586 = vmatprep.mubr.f32.mxu0 0.0
  %1587 = vmatmul.mubr.f32.gmra.mxu0 %v1520
  %v1588 = vpop.f32.mrf.mxu0
  %v1589 = vadd.f32 0.0, %v1588
  %v1590 = vpop.f32.mrf.mxu0
  %1591 = vdwg.mxu0
  %v1592 = vmul.f32 %v1589, 0.1
  %v1593 = vsub.f32 %v17, %v1592
  %1594 = vmatprep.subr.mxu0 0.0
  %1595 = vmatpush1.msra.mxu0 0.0
  %1596 = vmatprep.subr.mxu0 0.0
  %1597 = vmatpush1.msra.mxu0 0.0
  %1598 = vmatprep.subr.mxu0 0.0
  %1599 = vmatpush1.msra.mxu0 0.0
  %1600 = vmatprep.subr.mxu0 0.0
  %1601 = vmatpush1.msra.mxu0 0.0
  %1602 = vmatprep.subr.mxu0 0.0
  %1603 = vmatpush1.msra.mxu0 0.0
  %1604 = vmatprep.subr.mxu0 0.0
  %1605 = vmatpush1.msra.mxu0 0.0
  %1606 = vmatprep.subr.mxu0 0.0
  %1607 = vmatpush1.msra.mxu0 0.0
  %1608 = vmatprep.subr.mxu0 0.0
  %1609 = vmatpush1.msra.mxu0 0.0
  %1610 = vmatprep.subr.mxu0 0.0
  %1611 = vmatpush1.msra.mxu0 0.0
  %1612 = vmatprep.subr.mxu0 0.0
  %1613 = vmatpush1.msra.mxu0 0.0
  %1614 = vmatprep.subr.mxu0 0.0
  %1615 = vmatpush1.msra.mxu0 0.0
  %1616 = vmatprep.subr.mxu0 0.0
  %1617 = vmatpush1.msra.mxu0 0.0
  %1618 = vmatprep.subr.mxu0 0.0
  %1619 = vmatpush1.msra.mxu0 0.0
  %1620 = vmatprep.subr.mxu0 0.0
  %1621 = vmatpush1.msra.mxu0 0.0
  %1622 = vmatprep.subr.mxu0 0.0
  %1623 = vmatpush1.msra.mxu0 0.0
  %1624 = vmatprep.subr.mxu0 0.0
  %1625 = vmatpush1.msra.mxu0 %v1593
  %1626 = vmatprep.subr.mxu0 0.0
  %1627 = vmatpush2.msra.mxu0 0.0
  %1628 = vmatprep.subr.mxu0 0.0
  %1629 = vmatpush2.msra.mxu0 0.0
  %1630 = vmatprep.subr.mxu0 0.0
  %1631 = vmatpush2.msra.mxu0 0.0
  %1632 = vmatprep.subr.mxu0 0.0
  %1633 = vmatpush2.msra.mxu0 0.0
  %1634 = vmatprep.subr.mxu0 0.0
  %1635 = vmatpush2.msra.mxu0 0.0
  %1636 = vmatprep.subr.mxu0 0.0
  %1637 = vmatpush2.msra.mxu0 0.0
  %1638 = vmatprep.subr.mxu0 0.0
  %1639 = vmatpush2.msra.mxu0 0.0
  %1640 = vmatprep.subr.mxu0 0.0
  %1641 = vmatpush2.msra.mxu0 0.0
  %1642 = vmatprep.subr.mxu0 0.0
  %1643 = vmatpush2.msra.mxu0 0.0
  %1644 = vmatprep.subr.mxu0 0.0
  %1645 = vmatpush2.msra.mxu0 0.0
  %1646 = vmatprep.subr.mxu0 0.0
  %1647 = vmatpush2.msra.mxu0 0.0
  %1648 = vmatprep.subr.mxu0 0.0
  %1649 = vmatpush2.msra.mxu0 0.0
  %1650 = vmatprep.subr.mxu0 0.0
  %1651 = vmatpush2.msra.mxu0 0.0
  %1652 = vmatprep.subr.mxu0 0.0
  %1653 = vmatpush2.msra.mxu0 0.0
  %1654 = vmatprep.subr.mxu0 0.0
  %1655 = vmatpush2.msra.mxu0 0.0
  %1656 = vmatprep.subr.mxu0 0.0
  %1657 = vmatpush2.msra.mxu0 0.0
  %1658 = vmatprep.mubr.f32.mxu0 0.0
  %1659 = vmatmul.mubr.f32.gmra.mxu0 %v1520
  %v1660 = vpop.f32.mrf.mxu0
  %v1661 = vadd.f32 0.0, %v1660
  %v1662 = vpop.f32.mrf.mxu0
  %1663 = vdwg.mxu0
  %v1664 = vmul.f32 %v1661, 0.1
  %v1665 = vsub.f32 %v1593, %v1664
  %1667 = vrot.lane.b32.xlu0 %v1373, 4
  %v1668 = vpop.permute.xlu0 %1667
  %1671 = vrot.lane.b32.xlu0 %v1443, 8
  %v1672 = vpop.permute.xlu0 %1671
  %1675 = vrot.lane.b32.xlu0 %v1516, 12
  %v1676 = vpop.permute.xlu0 %1675
  %1679 = vrot.lane.b32.xlu0 %v1665, 16
  %v1680 = vpop.permute.xlu0 %1679
  %v1682 = vsel %vm198, %v17, %v1668
  %v1683 = vsel %vm117, %v1682, %v1672
  %v1684 = vsel %vm39, %v1683, %v1676
  %vm1685 = vcmask 130048
  %v1686 = vsel %vm1685, %v1684, %v1680
  %vm1687 = vcmask 162816
  %v1689 = vsel %vm1687, %v1686, 0
  %v1692 = vsel %vm43, %v29, 0
  %1694 = vmatprep.subr.mxu0 0.0
  %1695 = vmatpush1.msra.mxu0 0.0
  %1696 = vmatprep.subr.mxu0 0.0
  %1697 = vmatpush1.msra.mxu0 0.0
  %1698 = vmatprep.subr.mxu0 0.0
  %1699 = vmatpush1.msra.mxu0 0.0
  %1700 = vmatprep.subr.mxu0 0.0
  %1701 = vmatpush1.msra.mxu0 0.0
  %1702 = vmatprep.subr.mxu0 0.0
  %1703 = vmatpush1.msra.mxu0 0.0
  %1704 = vmatprep.subr.mxu0 0.0
  %1705 = vmatpush1.msra.mxu0 0.0
  %1706 = vmatprep.subr.mxu0 0.0
  %1707 = vmatpush1.msra.mxu0 0.0
  %1708 = vmatprep.subr.mxu0 0.0
  %1709 = vmatpush1.msra.mxu0 0.0
  %1710 = vmatprep.subr.mxu0 0.0
  %1711 = vmatpush1.msra.mxu0 0.0
  %1712 = vmatprep.subr.mxu0 0.0
  %1713 = vmatpush1.msra.mxu0 0.0
  %1714 = vmatprep.subr.mxu0 0.0
  %1715 = vmatpush1.msra.mxu0 0.0
  %1716 = vmatprep.subr.mxu0 0.0
  %1717 = vmatpush1.msra.mxu0 0.0
  %1718 = vmatprep.subr.mxu0 0.0
  %1719 = vmatpush1.msra.mxu0 0.0
  %1720 = vmatprep.subr.mxu0 0.0
  %1721 = vmatpush1.msra.mxu0 %v1692
  %1722 = vmatprep.subr.mxu0 0.0
  %1723 = vmatpush1.msra.mxu0 %v28
  %1724 = vmatprep.subr.mxu0 0.0
  %1725 = vmatpush1.msra.mxu0 %v27
  %1726 = vmatprep.subr.mxu0 0.0
  %1727 = vmatpush2.msra.mxu0 0.0
  %1728 = vmatprep.subr.mxu0 0.0
  %1729 = vmatpush2.msra.mxu0 0.0
  %1730 = vmatprep.subr.mxu0 0.0
  %1731 = vmatpush2.msra.mxu0 0.0
  %1732 = vmatprep.subr.mxu0 0.0
  %1733 = vmatpush2.msra.mxu0 0.0
  %1734 = vmatprep.subr.mxu0 0.0
  %1735 = vmatpush2.msra.mxu0 0.0
  %1736 = vmatprep.subr.mxu0 0.0
  %1737 = vmatpush2.msra.mxu0 0.0
  %1738 = vmatprep.subr.mxu0 0.0
  %1739 = vmatpush2.msra.mxu0 0.0
  %1740 = vmatprep.subr.mxu0 0.0
  %1741 = vmatpush2.msra.mxu0 0.0
  %1742 = vmatprep.subr.mxu0 0.0
  %1743 = vmatpush2.msra.mxu0 0.0
  %1744 = vmatprep.subr.mxu0 0.0
  %1745 = vmatpush2.msra.mxu0 0.0
  %1746 = vmatprep.subr.mxu0 0.0
  %1747 = vmatpush2.msra.mxu0 0.0
  %1748 = vmatprep.subr.mxu0 0.0
  %1749 = vmatpush2.msra.mxu0 0.0
  %1750 = vmatprep.subr.mxu0 0.0
  %1751 = vmatpush2.msra.mxu0 0.0
  %1752 = vmatprep.subr.mxu0 0.0
  %1753 = vmatpush2.msra.mxu0 0.0
  %1754 = vmatprep.subr.mxu0 0.0
  %1755 = vmatpush2.msra.mxu0 0.0
  %1756 = vmatprep.subr.mxu0 0.0
  %1757 = vmatpush2.msra.mxu0 0.0
  %1758 = vmatprep.mubr.f32.mxu0 0.0
  %1759 = vmatmul.mubr.f32.gmra.mxu0 %v1689
  %v1760 = vpop.f32.mrf.mxu0
  %v1761 = vadd.f32 0.0, %v1760
  %v1762 = vpop.f32.mrf.mxu0
  %1763 = vdwg.mxu0
  %v1764 = vmul.f32 %v1761, 0.5
  %v1765 = vtanh.pop %v1764
  %v1766 = vadd.f32 %v1765, 1.0
  %v1767 = vmul.f32 %v1766, 0.5
  %v1769 = vsel %vm39, %v842, 0
  %v1772 = vsel %vm39, %v843, 0
  %1774 = vmatprep.subr.mxu0 0.0
  %1775 = vmatpush1.msra.mxu0 0.0
  %1776 = vmatprep.subr.mxu0 0.0
  %1777 = vmatpush1.msra.mxu0 0.0
  %1778 = vmatprep.subr.mxu0 0.0
  %1779 = vmatpush1.msra.mxu0 0.0
  %1780 = vmatprep.subr.mxu0 0.0
  %1781 = vmatpush1.msra.mxu0 0.0
  %1782 = vmatprep.subr.mxu0 0.0
  %1783 = vmatpush1.msra.mxu0 0.0
  %1784 = vmatprep.subr.mxu0 0.0
  %1785 = vmatpush1.msra.mxu0 0.0
  %1786 = vmatprep.subr.mxu0 0.0
  %1787 = vmatpush1.msra.mxu0 0.0
  %1788 = vmatprep.subr.mxu0 0.0
  %1789 = vmatpush1.msra.mxu0 0.0
  %1790 = vmatprep.subr.mxu0 0.0
  %1791 = vmatpush1.msra.mxu0 0.0
  %1792 = vmatprep.subr.mxu0 0.0
  %1793 = vmatpush1.msra.mxu0 0.0
  %1794 = vmatprep.subr.mxu0 0.0
  %1795 = vmatpush1.msra.mxu0 0.0
  %1796 = vmatprep.subr.mxu0 0.0
  %1797 = vmatpush1.msra.mxu0 0.0
  %1798 = vmatprep.subr.mxu0 0.0
  %1799 = vmatpush1.msra.mxu0 0.0
  %1800 = vmatprep.subr.mxu0 0.0
  %1801 = vmatpush1.msra.mxu0 0.0
  %1802 = vmatprep.subr.mxu0 0.0
  %1803 = vmatpush1.msra.mxu0 %v435
  %1804 = vmatprep.subr.mxu0 0.0
  %1805 = vmatpush1.msra.mxu0 %v18
  %1806 = vmatprep.subr.mxu0 0.0
  %1807 = vmatpush2.msra.mxu0 0.0
  %1808 = vmatprep.subr.mxu0 0.0
  %1809 = vmatpush2.msra.mxu0 0.0
  %1810 = vmatprep.subr.mxu0 0.0
  %1811 = vmatpush2.msra.mxu0 0.0
  %1812 = vmatprep.subr.mxu0 0.0
  %1813 = vmatpush2.msra.mxu0 0.0
  %1814 = vmatprep.subr.mxu0 0.0
  %1815 = vmatpush2.msra.mxu0 0.0
  %1816 = vmatprep.subr.mxu0 0.0
  %1817 = vmatpush2.msra.mxu0 0.0
  %1818 = vmatprep.subr.mxu0 0.0
  %1819 = vmatpush2.msra.mxu0 0.0
  %1820 = vmatprep.subr.mxu0 0.0
  %1821 = vmatpush2.msra.mxu0 0.0
  %1822 = vmatprep.subr.mxu0 0.0
  %1823 = vmatpush2.msra.mxu0 0.0
  %1824 = vmatprep.subr.mxu0 0.0
  %1825 = vmatpush2.msra.mxu0 0.0
  %1826 = vmatprep.subr.mxu0 0.0
  %1827 = vmatpush2.msra.mxu0 0.0
  %1828 = vmatprep.subr.mxu0 0.0
  %1829 = vmatpush2.msra.mxu0 0.0
  %1830 = vmatprep.subr.mxu0 0.0
  %1831 = vmatpush2.msra.mxu0 0.0
  %1832 = vmatprep.subr.mxu0 0.0
  %1833 = vmatpush2.msra.mxu0 0.0
  %1834 = vmatprep.subr.mxu0 0.0
  %1835 = vmatpush2.msra.mxu0 0.0
  %1836 = vmatprep.subr.mxu0 0.0
  %1837 = vmatpush2.msra.mxu0 0.0
  %1838 = vmatprep.mubr.f32.mxu0 0.0
  %1839 = vmatmul.mubr.f32.gmra.mxu0 %v1769
  %v1840 = vpop.f32.mrf.mxu0
  %v1841 = vadd.f32 0.0, %v1840
  %v1842 = vpop.f32.mrf.mxu0
  %1843 = vmatprep.mubr.f32.mxu0 0.0
  %1844 = vmatmul.mubr.f32.gmra.mxu0 %v1772
  %v1845 = vpop.f32.mrf.mxu0
  %v1846 = vadd.f32 0.0, %v1845
  %v1847 = vpop.f32.mrf.mxu0
  %1848 = vdwg.mxu0
  %v1850 = vsel %vm43, %v1846, 0
  %1852 = vmatprep.subr.mxu0 0.0
  %1853 = vmatpush1.msra.mxu0 0.0
  %1854 = vmatprep.subr.mxu0 0.0
  %1855 = vmatpush1.msra.mxu0 0.0
  %1856 = vmatprep.subr.mxu0 0.0
  %1857 = vmatpush1.msra.mxu0 0.0
  %1858 = vmatprep.subr.mxu0 0.0
  %1859 = vmatpush1.msra.mxu0 0.0
  %1860 = vmatprep.subr.mxu0 0.0
  %1861 = vmatpush1.msra.mxu0 0.0
  %1862 = vmatprep.subr.mxu0 0.0
  %1863 = vmatpush1.msra.mxu0 0.0
  %1864 = vmatprep.subr.mxu0 0.0
  %1865 = vmatpush1.msra.mxu0 0.0
  %1866 = vmatprep.subr.mxu0 0.0
  %1867 = vmatpush1.msra.mxu0 0.0
  %1868 = vmatprep.subr.mxu0 0.0
  %1869 = vmatpush1.msra.mxu0 0.0
  %1870 = vmatprep.subr.mxu0 0.0
  %1871 = vmatpush1.msra.mxu0 0.0
  %1872 = vmatprep.subr.mxu0 0.0
  %1873 = vmatpush1.msra.mxu0 0.0
  %1874 = vmatprep.subr.mxu0 0.0
  %1875 = vmatpush1.msra.mxu0 0.0
  %1876 = vmatprep.subr.mxu0 0.0
  %1877 = vmatpush1.msra.mxu0 0.0
  %1878 = vmatprep.subr.mxu0 0.0
  %1879 = vmatpush1.msra.mxu0 0.0
  %1880 = vmatprep.subr.mxu0 0.0
  %1881 = vmatpush1.msra.mxu0 %v1850
  %1882 = vmatprep.subr.mxu0 0.0
  %1883 = vmatpush1.msra.mxu0 %v1841
  %1884 = vmatprep.subr.mxu0 0.0
  %1885 = vmatpush2.msra.mxu0 0.0
  %1886 = vmatprep.subr.mxu0 0.0
  %1887 = vmatpush2.msra.mxu0 0.0
  %1888 = vmatprep.subr.mxu0 0.0
  %1889 = vmatpush2.msra.mxu0 0.0
  %1890 = vmatprep.subr.mxu0 0.0
  %1891 = vmatpush2.msra.mxu0 0.0
  %1892 = vmatprep.subr.mxu0 0.0
  %1893 = vmatpush2.msra.mxu0 0.0
  %1894 = vmatprep.subr.mxu0 0.0
  %1895 = vmatpush2.msra.mxu0 0.0
  %1896 = vmatprep.subr.mxu0 0.0
  %1897 = vmatpush2.msra.mxu0 0.0
  %1898 = vmatprep.subr.mxu0 0.0
  %1899 = vmatpush2.msra.mxu0 0.0
  %1900 = vmatprep.subr.mxu0 0.0
  %1901 = vmatpush2.msra.mxu0 0.0
  %1902 = vmatprep.subr.mxu0 0.0
  %1903 = vmatpush2.msra.mxu0 0.0
  %1904 = vmatprep.subr.mxu0 0.0
  %1905 = vmatpush2.msra.mxu0 0.0
  %1906 = vmatprep.subr.mxu0 0.0
  %1907 = vmatpush2.msra.mxu0 0.0
  %1908 = vmatprep.subr.mxu0 0.0
  %1909 = vmatpush2.msra.mxu0 0.0
  %1910 = vmatprep.subr.mxu0 0.0
  %1911 = vmatpush2.msra.mxu0 0.0
  %1912 = vmatprep.subr.mxu0 0.0
  %1913 = vmatpush2.msra.mxu0 0.0
  %1914 = vmatprep.subr.mxu0 0.0
  %1915 = vmatpush2.msra.mxu0 0.0
  %1916 = vmatprep.mubr.f32.mxu0 0.0
  %1917 = vmatmul.mubr.f32.gmra.mxu0 %v1769
  %v1918 = vpop.f32.mrf.mxu0
  %v1919 = vadd.f32 0.0, %v1918
  %v1920 = vpop.f32.mrf.mxu0
  %1921 = vmatprep.mubr.f32.mxu0 0.0
  %1922 = vmatmul.mubr.f32.gmra.mxu0 %v1772
  %v1923 = vpop.f32.mrf.mxu0
  %v1924 = vadd.f32 0.0, %v1923
  %v1925 = vpop.f32.mrf.mxu0
  %1926 = vdwg.mxu0
  %v1928 = vsel %vm39, %v969, 0
  %v1931 = vsel %vm39, %v970, 0
  %v1933 = vsel %vm43, %v431, 0
  %1935 = vmatprep.subr.mxu0 0.0
  %1936 = vmatpush1.msra.mxu0 0.0
  %1937 = vmatprep.subr.mxu0 0.0
  %1938 = vmatpush1.msra.mxu0 0.0
  %1939 = vmatprep.subr.mxu0 0.0
  %1940 = vmatpush1.msra.mxu0 0.0
  %1941 = vmatprep.subr.mxu0 0.0
  %1942 = vmatpush1.msra.mxu0 0.0
  %1943 = vmatprep.subr.mxu0 0.0
  %1944 = vmatpush1.msra.mxu0 0.0
  %1945 = vmatprep.subr.mxu0 0.0
  %1946 = vmatpush1.msra.mxu0 0.0
  %1947 = vmatprep.subr.mxu0 0.0
  %1948 = vmatpush1.msra.mxu0 0.0
  %1949 = vmatprep.subr.mxu0 0.0
  %1950 = vmatpush1.msra.mxu0 0.0
  %1951 = vmatprep.subr.mxu0 0.0
  %1952 = vmatpush1.msra.mxu0 0.0
  %1953 = vmatprep.subr.mxu0 0.0
  %1954 = vmatpush1.msra.mxu0 0.0
  %1955 = vmatprep.subr.mxu0 0.0
  %1956 = vmatpush1.msra.mxu0 0.0
  %1957 = vmatprep.subr.mxu0 0.0
  %1958 = vmatpush1.msra.mxu0 0.0
  %1959 = vmatprep.subr.mxu0 0.0
  %1960 = vmatpush1.msra.mxu0 0.0
  %1961 = vmatprep.subr.mxu0 0.0
  %1962 = vmatpush1.msra.mxu0 0.0
  %1963 = vmatprep.subr.mxu0 0.0
  %1964 = vmatpush1.msra.mxu0 %v1933
  %1965 = vmatprep.subr.mxu0 0.0
  %1966 = vmatpush1.msra.mxu0 %v426
  %1967 = vmatprep.subr.mxu0 0.0
  %1968 = vmatpush2.msra.mxu0 0.0
  %1969 = vmatprep.subr.mxu0 0.0
  %1970 = vmatpush2.msra.mxu0 0.0
  %1971 = vmatprep.subr.mxu0 0.0
  %1972 = vmatpush2.msra.mxu0 0.0
  %1973 = vmatprep.subr.mxu0 0.0
  %1974 = vmatpush2.msra.mxu0 0.0
  %1975 = vmatprep.subr.mxu0 0.0
  %1976 = vmatpush2.msra.mxu0 0.0
  %1977 = vmatprep.subr.mxu0 0.0
  %1978 = vmatpush2.msra.mxu0 0.0
  %1979 = vmatprep.subr.mxu0 0.0
  %1980 = vmatpush2.msra.mxu0 0.0
  %1981 = vmatprep.subr.mxu0 0.0
  %1982 = vmatpush2.msra.mxu0 0.0
  %1983 = vmatprep.subr.mxu0 0.0
  %1984 = vmatpush2.msra.mxu0 0.0
  %1985 = vmatprep.subr.mxu0 0.0
  %1986 = vmatpush2.msra.mxu0 0.0
  %1987 = vmatprep.subr.mxu0 0.0
  %1988 = vmatpush2.msra.mxu0 0.0
  %1989 = vmatprep.subr.mxu0 0.0
  %1990 = vmatpush2.msra.mxu0 0.0
  %1991 = vmatprep.subr.mxu0 0.0
  %1992 = vmatpush2.msra.mxu0 0.0
  %1993 = vmatprep.subr.mxu0 0.0
  %1994 = vmatpush2.msra.mxu0 0.0
  %1995 = vmatprep.subr.mxu0 0.0
  %1996 = vmatpush2.msra.mxu0 0.0
  %1997 = vmatprep.subr.mxu0 0.0
  %1998 = vmatpush2.msra.mxu0 0.0
  %1999 = vmatprep.mubr.f32.mxu0 0.0
  %2000 = vmatmul.mubr.f32.gmra.mxu0 %v1928
  %v2001 = vpop.f32.mrf.mxu0
  %v2002 = vadd.f32 0.0, %v2001
  %v2003 = vpop.f32.mrf.mxu0
  %2004 = vmatprep.mubr.f32.mxu0 0.0
  %2005 = vmatmul.mubr.f32.gmra.mxu0 %v1931
  %v2006 = vpop.f32.mrf.mxu0
  %v2007 = vadd.f32 0.0, %v2006
  %v2008 = vpop.f32.mrf.mxu0
  %2009 = vdwg.mxu0
  %v2011 = vsel %vm43, %v2007, 0
  %2013 = vmatprep.subr.mxu0 0.0
  %2014 = vmatpush1.msra.mxu0 0.0
  %2015 = vmatprep.subr.mxu0 0.0
  %2016 = vmatpush1.msra.mxu0 0.0
  %2017 = vmatprep.subr.mxu0 0.0
  %2018 = vmatpush1.msra.mxu0 0.0
  %2019 = vmatprep.subr.mxu0 0.0
  %2020 = vmatpush1.msra.mxu0 0.0
  %2021 = vmatprep.subr.mxu0 0.0
  %2022 = vmatpush1.msra.mxu0 0.0
  %2023 = vmatprep.subr.mxu0 0.0
  %2024 = vmatpush1.msra.mxu0 0.0
  %2025 = vmatprep.subr.mxu0 0.0
  %2026 = vmatpush1.msra.mxu0 0.0
  %2027 = vmatprep.subr.mxu0 0.0
  %2028 = vmatpush1.msra.mxu0 0.0
  %2029 = vmatprep.subr.mxu0 0.0
  %2030 = vmatpush1.msra.mxu0 0.0
  %2031 = vmatprep.subr.mxu0 0.0
  %2032 = vmatpush1.msra.mxu0 0.0
  %2033 = vmatprep.subr.mxu0 0.0
  %2034 = vmatpush1.msra.mxu0 0.0
  %2035 = vmatprep.subr.mxu0 0.0
  %2036 = vmatpush1.msra.mxu0 0.0
  %2037 = vmatprep.subr.mxu0 0.0
  %2038 = vmatpush1.msra.mxu0 0.0
  %2039 = vmatprep.subr.mxu0 0.0
  %2040 = vmatpush1.msra.mxu0 0.0
  %2041 = vmatprep.subr.mxu0 0.0
  %2042 = vmatpush1.msra.mxu0 %v2011
  %2043 = vmatprep.subr.mxu0 0.0
  %2044 = vmatpush1.msra.mxu0 %v2002
  %2045 = vmatprep.subr.mxu0 0.0
  %2046 = vmatpush2.msra.mxu0 0.0
  %2047 = vmatprep.subr.mxu0 0.0
  %2048 = vmatpush2.msra.mxu0 0.0
  %2049 = vmatprep.subr.mxu0 0.0
  %2050 = vmatpush2.msra.mxu0 0.0
  %2051 = vmatprep.subr.mxu0 0.0
  %2052 = vmatpush2.msra.mxu0 0.0
  %2053 = vmatprep.subr.mxu0 0.0
  %2054 = vmatpush2.msra.mxu0 0.0
  %2055 = vmatprep.subr.mxu0 0.0
  %2056 = vmatpush2.msra.mxu0 0.0
  %2057 = vmatprep.subr.mxu0 0.0
  %2058 = vmatpush2.msra.mxu0 0.0
  %2059 = vmatprep.subr.mxu0 0.0
  %2060 = vmatpush2.msra.mxu0 0.0
  %2061 = vmatprep.subr.mxu0 0.0
  %2062 = vmatpush2.msra.mxu0 0.0
  %2063 = vmatprep.subr.mxu0 0.0
  %2064 = vmatpush2.msra.mxu0 0.0
  %2065 = vmatprep.subr.mxu0 0.0
  %2066 = vmatpush2.msra.mxu0 0.0
  %2067 = vmatprep.subr.mxu0 0.0
  %2068 = vmatpush2.msra.mxu0 0.0
  %2069 = vmatprep.subr.mxu0 0.0
  %2070 = vmatpush2.msra.mxu0 0.0
  %2071 = vmatprep.subr.mxu0 0.0
  %2072 = vmatpush2.msra.mxu0 0.0
  %2073 = vmatprep.subr.mxu0 0.0
  %2074 = vmatpush2.msra.mxu0 0.0
  %2075 = vmatprep.subr.mxu0 0.0
  %2076 = vmatpush2.msra.mxu0 0.0
  %2077 = vmatprep.mubr.f32.mxu0 0.0
  %2078 = vmatmul.mubr.f32.gmra.mxu0 %v1928
  %v2079 = vpop.f32.mrf.mxu0
  %v2080 = vadd.f32 0.0, %v2079
  %v2081 = vpop.f32.mrf.mxu0
  %2082 = vmatprep.mubr.f32.mxu0 0.0
  %2083 = vmatmul.mubr.f32.gmra.mxu0 %v1931
  %v2084 = vpop.f32.mrf.mxu0
  %v2085 = vadd.f32 0.0, %v2084
  %v2086 = vpop.f32.mrf.mxu0
  %2087 = vdwg.mxu0
  %v2089 = vsel %vm39, %v1092, 0
  %v2092 = vsel %vm39, %v1093, 0
  %2094 = vmatprep.subr.mxu0 0.0
  %2095 = vmatpush1.msra.mxu0 0.0
  %2096 = vmatprep.subr.mxu0 0.0
  %2097 = vmatpush1.msra.mxu0 0.0
  %2098 = vmatprep.subr.mxu0 0.0
  %2099 = vmatpush1.msra.mxu0 0.0
  %2100 = vmatprep.subr.mxu0 0.0
  %2101 = vmatpush1.msra.mxu0 0.0
  %2102 = vmatprep.subr.mxu0 0.0
  %2103 = vmatpush1.msra.mxu0 0.0
  %2104 = vmatprep.subr.mxu0 0.0
  %2105 = vmatpush1.msra.mxu0 0.0
  %2106 = vmatprep.subr.mxu0 0.0
  %2107 = vmatpush1.msra.mxu0 0.0
  %2108 = vmatprep.subr.mxu0 0.0
  %2109 = vmatpush1.msra.mxu0 0.0
  %2110 = vmatprep.subr.mxu0 0.0
  %2111 = vmatpush1.msra.mxu0 0.0
  %2112 = vmatprep.subr.mxu0 0.0
  %2113 = vmatpush1.msra.mxu0 0.0
  %2114 = vmatprep.subr.mxu0 0.0
  %2115 = vmatpush1.msra.mxu0 0.0
  %2116 = vmatprep.subr.mxu0 0.0
  %2117 = vmatpush1.msra.mxu0 0.0
  %2118 = vmatprep.subr.mxu0 0.0
  %2119 = vmatpush1.msra.mxu0 0.0
  %2120 = vmatprep.subr.mxu0 0.0
  %2121 = vmatpush1.msra.mxu0 0.0
  %2122 = vmatprep.subr.mxu0 0.0
  %2123 = vmatpush1.msra.mxu0 %v435
  %2124 = vmatprep.subr.mxu0 0.0
  %2125 = vmatpush1.msra.mxu0 %v18
  %2126 = vmatprep.subr.mxu0 0.0
  %2127 = vmatpush2.msra.mxu0 0.0
  %2128 = vmatprep.subr.mxu0 0.0
  %2129 = vmatpush2.msra.mxu0 0.0
  %2130 = vmatprep.subr.mxu0 0.0
  %2131 = vmatpush2.msra.mxu0 0.0
  %2132 = vmatprep.subr.mxu0 0.0
  %2133 = vmatpush2.msra.mxu0 0.0
  %2134 = vmatprep.subr.mxu0 0.0
  %2135 = vmatpush2.msra.mxu0 0.0
  %2136 = vmatprep.subr.mxu0 0.0
  %2137 = vmatpush2.msra.mxu0 0.0
  %2138 = vmatprep.subr.mxu0 0.0
  %2139 = vmatpush2.msra.mxu0 0.0
  %2140 = vmatprep.subr.mxu0 0.0
  %2141 = vmatpush2.msra.mxu0 0.0
  %2142 = vmatprep.subr.mxu0 0.0
  %2143 = vmatpush2.msra.mxu0 0.0
  %2144 = vmatprep.subr.mxu0 0.0
  %2145 = vmatpush2.msra.mxu0 0.0
  %2146 = vmatprep.subr.mxu0 0.0
  %2147 = vmatpush2.msra.mxu0 0.0
  %2148 = vmatprep.subr.mxu0 0.0
  %2149 = vmatpush2.msra.mxu0 0.0
  %2150 = vmatprep.subr.mxu0 0.0
  %2151 = vmatpush2.msra.mxu0 0.0
  %2152 = vmatprep.subr.mxu0 0.0
  %2153 = vmatpush2.msra.mxu0 0.0
  %2154 = vmatprep.subr.mxu0 0.0
  %2155 = vmatpush2.msra.mxu0 0.0
  %2156 = vmatprep.subr.mxu0 0.0
  %2157 = vmatpush2.msra.mxu0 0.0
  %2158 = vmatprep.mubr.f32.mxu0 0.0
  %2159 = vmatmul.mubr.f32.gmra.mxu0 %v2089
  %v2160 = vpop.f32.mrf.mxu0
  %v2161 = vadd.f32 0.0, %v2160
  %v2162 = vpop.f32.mrf.mxu0
  %2163 = vmatprep.mubr.f32.mxu0 0.0
  %2164 = vmatmul.mubr.f32.gmra.mxu0 %v2092
  %v2165 = vpop.f32.mrf.mxu0
  %v2166 = vadd.f32 0.0, %v2165
  %v2167 = vpop.f32.mrf.mxu0
  %2168 = vdwg.mxu0
  %v2170 = vsel %vm43, %v2166, 0
  %2172 = vmatprep.subr.mxu0 0.0
  %2173 = vmatpush1.msra.mxu0 0.0
  %2174 = vmatprep.subr.mxu0 0.0
  %2175 = vmatpush1.msra.mxu0 0.0
  %2176 = vmatprep.subr.mxu0 0.0
  %2177 = vmatpush1.msra.mxu0 0.0
  %2178 = vmatprep.subr.mxu0 0.0
  %2179 = vmatpush1.msra.mxu0 0.0
  %2180 = vmatprep.subr.mxu0 0.0
  %2181 = vmatpush1.msra.mxu0 0.0
  %2182 = vmatprep.subr.mxu0 0.0
  %2183 = vmatpush1.msra.mxu0 0.0
  %2184 = vmatprep.subr.mxu0 0.0
  %2185 = vmatpush1.msra.mxu0 0.0
  %2186 = vmatprep.subr.mxu0 0.0
  %2187 = vmatpush1.msra.mxu0 0.0
  %2188 = vmatprep.subr.mxu0 0.0
  %2189 = vmatpush1.msra.mxu0 0.0
  %2190 = vmatprep.subr.mxu0 0.0
  %2191 = vmatpush1.msra.mxu0 0.0
  %2192 = vmatprep.subr.mxu0 0.0
  %2193 = vmatpush1.msra.mxu0 0.0
  %2194 = vmatprep.subr.mxu0 0.0
  %2195 = vmatpush1.msra.mxu0 0.0
  %2196 = vmatprep.subr.mxu0 0.0
  %2197 = vmatpush1.msra.mxu0 0.0
  %2198 = vmatprep.subr.mxu0 0.0
  %2199 = vmatpush1.msra.mxu0 0.0
  %2200 = vmatprep.subr.mxu0 0.0
  %2201 = vmatpush1.msra.mxu0 %v2170
  %2202 = vmatprep.subr.mxu0 0.0
  %2203 = vmatpush1.msra.mxu0 %v2161
  %2204 = vmatprep.subr.mxu0 0.0
  %2205 = vmatpush2.msra.mxu0 0.0
  %2206 = vmatprep.subr.mxu0 0.0
  %2207 = vmatpush2.msra.mxu0 0.0
  %2208 = vmatprep.subr.mxu0 0.0
  %2209 = vmatpush2.msra.mxu0 0.0
  %2210 = vmatprep.subr.mxu0 0.0
  %2211 = vmatpush2.msra.mxu0 0.0
  %2212 = vmatprep.subr.mxu0 0.0
  %2213 = vmatpush2.msra.mxu0 0.0
  %2214 = vmatprep.subr.mxu0 0.0
  %2215 = vmatpush2.msra.mxu0 0.0
  %2216 = vmatprep.subr.mxu0 0.0
  %2217 = vmatpush2.msra.mxu0 0.0
  %2218 = vmatprep.subr.mxu0 0.0
  %2219 = vmatpush2.msra.mxu0 0.0
  %2220 = vmatprep.subr.mxu0 0.0
  %2221 = vmatpush2.msra.mxu0 0.0
  %2222 = vmatprep.subr.mxu0 0.0
  %2223 = vmatpush2.msra.mxu0 0.0
  %2224 = vmatprep.subr.mxu0 0.0
  %2225 = vmatpush2.msra.mxu0 0.0
  %2226 = vmatprep.subr.mxu0 0.0
  %2227 = vmatpush2.msra.mxu0 0.0
  %2228 = vmatprep.subr.mxu0 0.0
  %2229 = vmatpush2.msra.mxu0 0.0
  %2230 = vmatprep.subr.mxu0 0.0
  %2231 = vmatpush2.msra.mxu0 0.0
  %2232 = vmatprep.subr.mxu0 0.0
  %2233 = vmatpush2.msra.mxu0 0.0
  %2234 = vmatprep.subr.mxu0 0.0
  %2235 = vmatpush2.msra.mxu0 0.0
  %2236 = vmatprep.mubr.f32.mxu0 0.0
  %2237 = vmatmul.mubr.f32.gmra.mxu0 %v2089
  %v2238 = vpop.f32.mrf.mxu0
  %v2239 = vadd.f32 0.0, %v2238
  %v2240 = vpop.f32.mrf.mxu0
  %2241 = vmatprep.mubr.f32.mxu0 0.0
  %2242 = vmatmul.mubr.f32.gmra.mxu0 %v2092
  %v2243 = vpop.f32.mrf.mxu0
  %v2244 = vadd.f32 0.0, %v2243
  %v2245 = vpop.f32.mrf.mxu0
  %2246 = vdwg.mxu0
  %v2248 = vsel %vm39, %v283, 0
  %v2251 = vsel %vm39, %v284, 0
  %2253 = vmatprep.subr.mxu0 0.0
  %2254 = vmatpush1.msra.mxu0 0.0
  %2255 = vmatprep.subr.mxu0 0.0
  %2256 = vmatpush1.msra.mxu0 0.0
  %2257 = vmatprep.subr.mxu0 0.0
  %2258 = vmatpush1.msra.mxu0 0.0
  %2259 = vmatprep.subr.mxu0 0.0
  %2260 = vmatpush1.msra.mxu0 0.0
  %2261 = vmatprep.subr.mxu0 0.0
  %2262 = vmatpush1.msra.mxu0 0.0
  %2263 = vmatprep.subr.mxu0 0.0
  %2264 = vmatpush1.msra.mxu0 0.0
  %2265 = vmatprep.subr.mxu0 0.0
  %2266 = vmatpush1.msra.mxu0 0.0
  %2267 = vmatprep.subr.mxu0 0.0
  %2268 = vmatpush1.msra.mxu0 0.0
  %2269 = vmatprep.subr.mxu0 0.0
  %2270 = vmatpush1.msra.mxu0 0.0
  %2271 = vmatprep.subr.mxu0 0.0
  %2272 = vmatpush1.msra.mxu0 0.0
  %2273 = vmatprep.subr.mxu0 0.0
  %2274 = vmatpush1.msra.mxu0 0.0
  %2275 = vmatprep.subr.mxu0 0.0
  %2276 = vmatpush1.msra.mxu0 0.0
  %2277 = vmatprep.subr.mxu0 0.0
  %2278 = vmatpush1.msra.mxu0 0.0
  %2279 = vmatprep.subr.mxu0 0.0
  %2280 = vmatpush1.msra.mxu0 0.0
  %2281 = vmatprep.subr.mxu0 0.0
  %2282 = vmatpush1.msra.mxu0 %v435
  %2283 = vmatprep.subr.mxu0 0.0
  %2284 = vmatpush1.msra.mxu0 %v18
  %2285 = vmatprep.subr.mxu0 0.0
  %2286 = vmatpush2.msra.mxu0 0.0
  %2287 = vmatprep.subr.mxu0 0.0
  %2288 = vmatpush2.msra.mxu0 0.0
  %2289 = vmatprep.subr.mxu0 0.0
  %2290 = vmatpush2.msra.mxu0 0.0
  %2291 = vmatprep.subr.mxu0 0.0
  %2292 = vmatpush2.msra.mxu0 0.0
  %2293 = vmatprep.subr.mxu0 0.0
  %2294 = vmatpush2.msra.mxu0 0.0
  %2295 = vmatprep.subr.mxu0 0.0
  %2296 = vmatpush2.msra.mxu0 0.0
  %2297 = vmatprep.subr.mxu0 0.0
  %2298 = vmatpush2.msra.mxu0 0.0
  %2299 = vmatprep.subr.mxu0 0.0
  %2300 = vmatpush2.msra.mxu0 0.0
  %2301 = vmatprep.subr.mxu0 0.0
  %2302 = vmatpush2.msra.mxu0 0.0
  %2303 = vmatprep.subr.mxu0 0.0
  %2304 = vmatpush2.msra.mxu0 0.0
  %2305 = vmatprep.subr.mxu0 0.0
  %2306 = vmatpush2.msra.mxu0 0.0
  %2307 = vmatprep.subr.mxu0 0.0
  %2308 = vmatpush2.msra.mxu0 0.0
  %2309 = vmatprep.subr.mxu0 0.0
  %2310 = vmatpush2.msra.mxu0 0.0
  %2311 = vmatprep.subr.mxu0 0.0
  %2312 = vmatpush2.msra.mxu0 0.0
  %2313 = vmatprep.subr.mxu0 0.0
  %2314 = vmatpush2.msra.mxu0 0.0
  %2315 = vmatprep.subr.mxu0 0.0
  %2316 = vmatpush2.msra.mxu0 0.0
  %2317 = vmatprep.mubr.f32.mxu0 0.0
  %2318 = vmatmul.mubr.f32.gmra.mxu0 %v2248
  %v2319 = vpop.f32.mrf.mxu0
  %v2320 = vadd.f32 0.0, %v2319
  %v2321 = vpop.f32.mrf.mxu0
  %2322 = vmatprep.mubr.f32.mxu0 0.0
  %2323 = vmatmul.mubr.f32.gmra.mxu0 %v2251
  %v2324 = vpop.f32.mrf.mxu0
  %v2325 = vadd.f32 0.0, %v2324
  %v2326 = vpop.f32.mrf.mxu0
  %2327 = vdwg.mxu0
  %v2328 = vmul.f32 %v2320, 0.1
  %v2329 = vmul.f32 %v2325, 0.1
  %v2330 = vsub.f32 %v18, %v2328
  %v2331 = vsub.f32 %v19, %v2329
  %v2333 = vsel %vm43, %v2331, 0
  %2335 = vmatprep.subr.mxu0 0.0
  %2336 = vmatpush1.msra.mxu0 0.0
  %2337 = vmatprep.subr.mxu0 0.0
  %2338 = vmatpush1.msra.mxu0 0.0
  %2339 = vmatprep.subr.mxu0 0.0
  %2340 = vmatpush1.msra.mxu0 0.0
  %2341 = vmatprep.subr.mxu0 0.0
  %2342 = vmatpush1.msra.mxu0 0.0
  %2343 = vmatprep.subr.mxu0 0.0
  %2344 = vmatpush1.msra.mxu0 0.0
  %2345 = vmatprep.subr.mxu0 0.0
  %2346 = vmatpush1.msra.mxu0 0.0
  %2347 = vmatprep.subr.mxu0 0.0
  %2348 = vmatpush1.msra.mxu0 0.0
  %2349 = vmatprep.subr.mxu0 0.0
  %2350 = vmatpush1.msra.mxu0 0.0
  %2351 = vmatprep.subr.mxu0 0.0
  %2352 = vmatpush1.msra.mxu0 0.0
  %2353 = vmatprep.subr.mxu0 0.0
  %2354 = vmatpush1.msra.mxu0 0.0
  %2355 = vmatprep.subr.mxu0 0.0
  %2356 = vmatpush1.msra.mxu0 0.0
  %2357 = vmatprep.subr.mxu0 0.0
  %2358 = vmatpush1.msra.mxu0 0.0
  %2359 = vmatprep.subr.mxu0 0.0
  %2360 = vmatpush1.msra.mxu0 0.0
  %2361 = vmatprep.subr.mxu0 0.0
  %2362 = vmatpush1.msra.mxu0 0.0
  %2363 = vmatprep.subr.mxu0 0.0
  %2364 = vmatpush1.msra.mxu0 %v2333
  %2365 = vmatprep.subr.mxu0 0.0
  %2366 = vmatpush1.msra.mxu0 %v2330
  %2367 = vmatprep.subr.mxu0 0.0
  %2368 = vmatpush2.msra.mxu0 0.0
  %2369 = vmatprep.subr.mxu0 0.0
  %2370 = vmatpush2.msra.mxu0 0.0
  %2371 = vmatprep.subr.mxu0 0.0
  %2372 = vmatpush2.msra.mxu0 0.0
  %2373 = vmatprep.subr.mxu0 0.0
  %2374 = vmatpush2.msra.mxu0 0.0
  %2375 = vmatprep.subr.mxu0 0.0
  %2376 = vmatpush2.msra.mxu0 0.0
  %2377 = vmatprep.subr.mxu0 0.0
  %2378 = vmatpush2.msra.mxu0 0.0
  %2379 = vmatprep.subr.mxu0 0.0
  %2380 = vmatpush2.msra.mxu0 0.0
  %2381 = vmatprep.subr.mxu0 0.0
  %2382 = vmatpush2.msra.mxu0 0.0
  %2383 = vmatprep.subr.mxu0 0.0
  %2384 = vmatpush2.msra.mxu0 0.0
  %2385 = vmatprep.subr.mxu0 0.0
  %2386 = vmatpush2.msra.mxu0 0.0
  %2387 = vmatprep.subr.mxu0 0.0
  %2388 = vmatpush2.msra.mxu0 0.0
  %2389 = vmatprep.subr.mxu0 0.0
  %2390 = vmatpush2.msra.mxu0 0.0
  %2391 = vmatprep.subr.mxu0 0.0
  %2392 = vmatpush2.msra.mxu0 0.0
  %2393 = vmatprep.subr.mxu0 0.0
  %2394 = vmatpush2.msra.mxu0 0.0
  %2395 = vmatprep.subr.mxu0 0.0
  %2396 = vmatpush2.msra.mxu0 0.0
  %2397 = vmatprep.subr.mxu0 0.0
  %2398 = vmatpush2.msra.mxu0 0.0
  %2399 = vmatprep.mubr.f32.mxu0 0.0
  %2400 = vmatmul.mubr.f32.gmra.mxu0 %v2248
  %v2401 = vpop.f32.mrf.mxu0
  %v2402 = vadd.f32 0.0, %v2401
  %v2403 = vpop.f32.mrf.mxu0
  %2404 = vmatprep.mubr.f32.mxu0 0.0
  %2405 = vmatmul.mubr.f32.gmra.mxu0 %v2251
  %v2406 = vpop.f32.mrf.mxu0
  %v2407 = vadd.f32 0.0, %v2406
  %v2408 = vpop.f32.mrf.mxu0
  %2409 = vdwg.mxu0
  %v2410 = vmul.f32 %v2402, 0.1
  %v2411 = vmul.f32 %v2407, 0.1
  %v2412 = vsub.f32 %v2330, %v2410
  %v2413 = vsub.f32 %v2331, %v2411
  %2416 = vrot.lane.b32.xlu0 %v1919, 4
  %v2417 = vpop.permute.xlu0 %2416
  %2418 = vrot.lane.b32.xlu0 %v1924, 4
  %v2419 = vpop.permute.xlu0 %2418
  %2423 = vrot.lane.b32.xlu0 %v2002, 8
  %v2424 = vpop.permute.xlu0 %2423
  %2425 = vrot.lane.b32.xlu0 %v2007, 8
  %v2426 = vpop.permute.xlu0 %2425
  %2431 = vrot.lane.b32.xlu0 %v2080, 12
  %v2432 = vpop.permute.xlu0 %2431
  %2433 = vrot.lane.b32.xlu0 %v2085, 12
  %v2434 = vpop.permute.xlu0 %2433
  %2438 = vrot.lane.b32.xlu0 %v2161, 16
  %v2439 = vpop.permute.xlu0 %2438
  %2440 = vrot.lane.b32.xlu0 %v2166, 16
  %v2441 = vpop.permute.xlu0 %2440
  %2446 = vrot.lane.b32.xlu0 %v2239, 20
  %v2447 = vpop.permute.xlu0 %2446
  %2448 = vrot.lane.b32.xlu0 %v2244, 20
  %v2449 = vpop.permute.xlu0 %2448
  %2454 = vrot.lane.b32.xlu0 %v2412, 24
  %v2455 = vpop.permute.xlu0 %2454
  %2456 = vrot.lane.b32.xlu0 %v2413, 24
  %v2457 = vpop.permute.xlu0 %2456
  %v2460 = vsel %vm198, %v1841, %v2417
  %v2461 = vsel %vm198, %v1846, %v2419
  %v2462 = vsel %vm117, %v2460, %v2424
  %v2463 = vsel %vm117, %v2461, %v2426
  %v2464 = vsel %vm39, %v2462, %v2432
  %v2465 = vsel %vm39, %v2463, %v2434
  %v2466 = vsel %vm1685, %v2464, %v2439
  %v2467 = vsel %vm1685, %v2465, %v2441
  %v2468 = vsel %vm1687, %v2466, %v2447
  %v2469 = vsel %vm1687, %v2467, %v2449
  %vm2470 = vcmask 195584
  %v2471 = vsel %vm2470, %v2468, %v2455
  %v2472 = vsel %vm2470, %v2469, %v2457
  %vm2473 = vcmask 228352
  %v2475 = vsel %vm2473, %v2471, 0
  %v2478 = vsel %vm2473, %v2472, 0
  %v2481 = vsel %vm43, %v33, 0
  %2483 = vmatprep.subr.mxu0 0.0
  %2484 = vmatpush1.msra.mxu0 0.0
  %2485 = vmatprep.subr.mxu0 0.0
  %2486 = vmatpush1.msra.mxu0 0.0
  %2487 = vmatprep.subr.mxu0 0.0
  %2488 = vmatpush1.msra.mxu0 0.0
  %2489 = vmatprep.subr.mxu0 0.0
  %2490 = vmatpush1.msra.mxu0 0.0
  %2491 = vmatprep.subr.mxu0 0.0
  %2492 = vmatpush1.msra.mxu0 0.0
  %2493 = vmatprep.subr.mxu0 0.0
  %2494 = vmatpush1.msra.mxu0 0.0
  %2495 = vmatprep.subr.mxu0 0.0
  %2496 = vmatpush1.msra.mxu0 0.0
  %2497 = vmatprep.subr.mxu0 0.0
  %2498 = vmatpush1.msra.mxu0 0.0
  %2499 = vmatprep.subr.mxu0 0.0
  %2500 = vmatpush1.msra.mxu0 0.0
  %2501 = vmatprep.subr.mxu0 0.0
  %2502 = vmatpush1.msra.mxu0 0.0
  %2503 = vmatprep.subr.mxu0 0.0
  %2504 = vmatpush1.msra.mxu0 0.0
  %2505 = vmatprep.subr.mxu0 0.0
  %2506 = vmatpush1.msra.mxu0 0.0
  %2507 = vmatprep.subr.mxu0 0.0
  %2508 = vmatpush1.msra.mxu0 %v2481
  %2509 = vmatprep.subr.mxu0 0.0
  %2510 = vmatpush1.msra.mxu0 %v32
  %2511 = vmatprep.subr.mxu0 0.0
  %2512 = vmatpush1.msra.mxu0 %v31
  %2513 = vmatprep.subr.mxu0 0.0
  %2514 = vmatpush1.msra.mxu0 %v30
  %2515 = vmatprep.subr.mxu0 0.0
  %2516 = vmatpush2.msra.mxu0 0.0
  %2517 = vmatprep.subr.mxu0 0.0
  %2518 = vmatpush2.msra.mxu0 0.0
  %2519 = vmatprep.subr.mxu0 0.0
  %2520 = vmatpush2.msra.mxu0 0.0
  %2521 = vmatprep.subr.mxu0 0.0
  %2522 = vmatpush2.msra.mxu0 0.0
  %2523 = vmatprep.subr.mxu0 0.0
  %2524 = vmatpush2.msra.mxu0 0.0
  %2525 = vmatprep.subr.mxu0 0.0
  %2526 = vmatpush2.msra.mxu0 0.0
  %2527 = vmatprep.subr.mxu0 0.0
  %2528 = vmatpush2.msra.mxu0 0.0
  %2529 = vmatprep.subr.mxu0 0.0
  %2530 = vmatpush2.msra.mxu0 0.0
  %2531 = vmatprep.subr.mxu0 0.0
  %2532 = vmatpush2.msra.mxu0 0.0
  %2533 = vmatprep.subr.mxu0 0.0
  %2534 = vmatpush2.msra.mxu0 0.0
  %2535 = vmatprep.subr.mxu0 0.0
  %2536 = vmatpush2.msra.mxu0 0.0
  %2537 = vmatprep.subr.mxu0 0.0
  %2538 = vmatpush2.msra.mxu0 0.0
  %2539 = vmatprep.subr.mxu0 0.0
  %2540 = vmatpush2.msra.mxu0 0.0
  %2541 = vmatprep.subr.mxu0 0.0
  %2542 = vmatpush2.msra.mxu0 0.0
  %2543 = vmatprep.subr.mxu0 0.0
  %2544 = vmatpush2.msra.mxu0 0.0
  %2545 = vmatprep.subr.mxu0 0.0
  %2546 = vmatpush2.msra.mxu0 0.0
  %2547 = vmatprep.mubr.f32.mxu0 0.0
  %2548 = vmatmul.mubr.f32.gmra.mxu0 %v2475
  %v2549 = vpop.f32.mrf.mxu0
  %v2550 = vadd.f32 0.0, %v2549
  %v2551 = vpop.f32.mrf.mxu0
  %2552 = vmatprep.mubr.f32.mxu0 0.0
  %2553 = vmatmul.mubr.f32.gmra.mxu0 %v2478
  %v2554 = vpop.f32.mrf.mxu0
  %v2555 = vadd.f32 0.0, %v2554
  %v2556 = vpop.f32.mrf.mxu0
  %2557 = vdwg.mxu0
  %v2558 = vmul.f32 %v2550, 0.5
  %v2559 = vmul.f32 %v2555, 0.5
  %v2560 = vtanh.pop %v2558
  %v2561 = vtanh.pop %v2559
  %v2562 = vadd.f32 %v2560, 1.0
  %v2563 = vadd.f32 %v2561, 1.0
  %v2564 = vmul.f32 %v2562, 0.5
  %v2565 = vmul.f32 %v2563, 0.5
  %v2567 = vsel %vm198, %v1198, 0
  %v2569 = vsel %vm43, %v20, 0
  %2571 = vmatprep.subr.mxu0 0.0
  %2572 = vmatpush1.msra.mxu0 0.0
  %2573 = vmatprep.subr.mxu0 0.0
  %2574 = vmatpush1.msra.mxu0 0.0
  %2575 = vmatprep.subr.mxu0 0.0
  %2576 = vmatpush1.msra.mxu0 0.0
  %2577 = vmatprep.subr.mxu0 0.0
  %2578 = vmatpush1.msra.mxu0 0.0
  %2579 = vmatprep.subr.mxu0 0.0
  %2580 = vmatpush1.msra.mxu0 0.0
  %2581 = vmatprep.subr.mxu0 0.0
  %2582 = vmatpush1.msra.mxu0 0.0
  %2583 = vmatprep.subr.mxu0 0.0
  %2584 = vmatpush1.msra.mxu0 0.0
  %2585 = vmatprep.subr.mxu0 0.0
  %2586 = vmatpush1.msra.mxu0 0.0
  %2587 = vmatprep.subr.mxu0 0.0
  %2588 = vmatpush1.msra.mxu0 0.0
  %2589 = vmatprep.subr.mxu0 0.0
  %2590 = vmatpush1.msra.mxu0 0.0
  %2591 = vmatprep.subr.mxu0 0.0
  %2592 = vmatpush1.msra.mxu0 0.0
  %2593 = vmatprep.subr.mxu0 0.0
  %2594 = vmatpush1.msra.mxu0 0.0
  %2595 = vmatprep.subr.mxu0 0.0
  %2596 = vmatpush1.msra.mxu0 0.0
  %2597 = vmatprep.subr.mxu0 0.0
  %2598 = vmatpush1.msra.mxu0 0.0
  %2599 = vmatprep.subr.mxu0 0.0
  %2600 = vmatpush1.msra.mxu0 0.0
  %2601 = vmatprep.subr.mxu0 0.0
  %2602 = vmatpush1.msra.mxu0 %v2569
  %2603 = vmatprep.subr.mxu0 0.0
  %2604 = vmatpush2.msra.mxu0 0.0
  %2605 = vmatprep.subr.mxu0 0.0
  %2606 = vmatpush2.msra.mxu0 0.0
  %2607 = vmatprep.subr.mxu0 0.0
  %2608 = vmatpush2.msra.mxu0 0.0
  %2609 = vmatprep.subr.mxu0 0.0
  %2610 = vmatpush2.msra.mxu0 0.0
  %2611 = vmatprep.subr.mxu0 0.0
  %2612 = vmatpush2.msra.mxu0 0.0
  %2613 = vmatprep.subr.mxu0 0.0
  %2614 = vmatpush2.msra.mxu0 0.0
  %2615 = vmatprep.subr.mxu0 0.0
  %2616 = vmatpush2.msra.mxu0 0.0
  %2617 = vmatprep.subr.mxu0 0.0
  %2618 = vmatpush2.msra.mxu0 0.0
  %2619 = vmatprep.subr.mxu0 0.0
  %2620 = vmatpush2.msra.mxu0 0.0
  %2621 = vmatprep.subr.mxu0 0.0
  %2622 = vmatpush2.msra.mxu0 0.0
  %2623 = vmatprep.subr.mxu0 0.0
  %2624 = vmatpush2.msra.mxu0 0.0
  %2625 = vmatprep.subr.mxu0 0.0
  %2626 = vmatpush2.msra.mxu0 0.0
  %2627 = vmatprep.subr.mxu0 0.0
  %2628 = vmatpush2.msra.mxu0 0.0
  %2629 = vmatprep.subr.mxu0 0.0
  %2630 = vmatpush2.msra.mxu0 0.0
  %2631 = vmatprep.subr.mxu0 0.0
  %2632 = vmatpush2.msra.mxu0 0.0
  %2633 = vmatprep.subr.mxu0 0.0
  %2634 = vmatpush2.msra.mxu0 0.0
  %2635 = vmatprep.mubr.f32.mxu0 0.0
  %2636 = vmatmul.mubr.f32.gmra.mxu0 %v2567
  %v2637 = vpop.f32.mrf.mxu0
  %v2638 = vadd.f32 0.0, %v2637
  %v2639 = vpop.f32.mrf.mxu0
  %2640 = vdwg.mxu0
  %v2642 = vsel %vm43, %v2638, 0
  %2644 = vmatprep.subr.mxu0 0.0
  %2645 = vmatpush1.msra.mxu0 0.0
  %2646 = vmatprep.subr.mxu0 0.0
  %2647 = vmatpush1.msra.mxu0 0.0
  %2648 = vmatprep.subr.mxu0 0.0
  %2649 = vmatpush1.msra.mxu0 0.0
  %2650 = vmatprep.subr.mxu0 0.0
  %2651 = vmatpush1.msra.mxu0 0.0
  %2652 = vmatprep.subr.mxu0 0.0
  %2653 = vmatpush1.msra.mxu0 0.0
  %2654 = vmatprep.subr.mxu0 0.0
  %2655 = vmatpush1.msra.mxu0 0.0
  %2656 = vmatprep.subr.mxu0 0.0
  %2657 = vmatpush1.msra.mxu0 0.0
  %2658 = vmatprep.subr.mxu0 0.0
  %2659 = vmatpush1.msra.mxu0 0.0
  %2660 = vmatprep.subr.mxu0 0.0
  %2661 = vmatpush1.msra.mxu0 0.0
  %2662 = vmatprep.subr.mxu0 0.0
  %2663 = vmatpush1.msra.mxu0 0.0
  %2664 = vmatprep.subr.mxu0 0.0
  %2665 = vmatpush1.msra.mxu0 0.0
  %2666 = vmatprep.subr.mxu0 0.0
  %2667 = vmatpush1.msra.mxu0 0.0
  %2668 = vmatprep.subr.mxu0 0.0
  %2669 = vmatpush1.msra.mxu0 0.0
  %2670 = vmatprep.subr.mxu0 0.0
  %2671 = vmatpush1.msra.mxu0 0.0
  %2672 = vmatprep.subr.mxu0 0.0
  %2673 = vmatpush1.msra.mxu0 0.0
  %2674 = vmatprep.subr.mxu0 0.0
  %2675 = vmatpush1.msra.mxu0 %v2642
  %2676 = vmatprep.subr.mxu0 0.0
  %2677 = vmatpush2.msra.mxu0 0.0
  %2678 = vmatprep.subr.mxu0 0.0
  %2679 = vmatpush2.msra.mxu0 0.0
  %2680 = vmatprep.subr.mxu0 0.0
  %2681 = vmatpush2.msra.mxu0 0.0
  %2682 = vmatprep.subr.mxu0 0.0
  %2683 = vmatpush2.msra.mxu0 0.0
  %2684 = vmatprep.subr.mxu0 0.0
  %2685 = vmatpush2.msra.mxu0 0.0
  %2686 = vmatprep.subr.mxu0 0.0
  %2687 = vmatpush2.msra.mxu0 0.0
  %2688 = vmatprep.subr.mxu0 0.0
  %2689 = vmatpush2.msra.mxu0 0.0
  %2690 = vmatprep.subr.mxu0 0.0
  %2691 = vmatpush2.msra.mxu0 0.0
  %2692 = vmatprep.subr.mxu0 0.0
  %2693 = vmatpush2.msra.mxu0 0.0
  %2694 = vmatprep.subr.mxu0 0.0
  %2695 = vmatpush2.msra.mxu0 0.0
  %2696 = vmatprep.subr.mxu0 0.0
  %2697 = vmatpush2.msra.mxu0 0.0
  %2698 = vmatprep.subr.mxu0 0.0
  %2699 = vmatpush2.msra.mxu0 0.0
  %2700 = vmatprep.subr.mxu0 0.0
  %2701 = vmatpush2.msra.mxu0 0.0
  %2702 = vmatprep.subr.mxu0 0.0
  %2703 = vmatpush2.msra.mxu0 0.0
  %2704 = vmatprep.subr.mxu0 0.0
  %2705 = vmatpush2.msra.mxu0 0.0
  %2706 = vmatprep.subr.mxu0 0.0
  %2707 = vmatpush2.msra.mxu0 0.0
  %2708 = vmatprep.mubr.f32.mxu0 0.0
  %2709 = vmatmul.mubr.f32.gmra.mxu0 %v2567
  %v2710 = vpop.f32.mrf.mxu0
  %v2711 = vadd.f32 0.0, %v2710
  %v2712 = vpop.f32.mrf.mxu0
  %2713 = vdwg.mxu0
  %v2715 = vsel %vm198, %v1302, 0
  %v2717 = vsel %vm43, %v504, 0
  %2719 = vmatprep.subr.mxu0 0.0
  %2720 = vmatpush1.msra.mxu0 0.0
  %2721 = vmatprep.subr.mxu0 0.0
  %2722 = vmatpush1.msra.mxu0 0.0
  %2723 = vmatprep.subr.mxu0 0.0
  %2724 = vmatpush1.msra.mxu0 0.0
  %2725 = vmatprep.subr.mxu0 0.0
  %2726 = vmatpush1.msra.mxu0 0.0
  %2727 = vmatprep.subr.mxu0 0.0
  %2728 = vmatpush1.msra.mxu0 0.0
  %2729 = vmatprep.subr.mxu0 0.0
  %2730 = vmatpush1.msra.mxu0 0.0
  %2731 = vmatprep.subr.mxu0 0.0
  %2732 = vmatpush1.msra.mxu0 0.0
  %2733 = vmatprep.subr.mxu0 0.0
  %2734 = vmatpush1.msra.mxu0 0.0
  %2735 = vmatprep.subr.mxu0 0.0
  %2736 = vmatpush1.msra.mxu0 0.0
  %2737 = vmatprep.subr.mxu0 0.0
  %2738 = vmatpush1.msra.mxu0 0.0
  %2739 = vmatprep.subr.mxu0 0.0
  %2740 = vmatpush1.msra.mxu0 0.0
  %2741 = vmatprep.subr.mxu0 0.0
  %2742 = vmatpush1.msra.mxu0 0.0
  %2743 = vmatprep.subr.mxu0 0.0
  %2744 = vmatpush1.msra.mxu0 0.0
  %2745 = vmatprep.subr.mxu0 0.0
  %2746 = vmatpush1.msra.mxu0 0.0
  %2747 = vmatprep.subr.mxu0 0.0
  %2748 = vmatpush1.msra.mxu0 0.0
  %2749 = vmatprep.subr.mxu0 0.0
  %2750 = vmatpush1.msra.mxu0 %v2717
  %2751 = vmatprep.subr.mxu0 0.0
  %2752 = vmatpush2.msra.mxu0 0.0
  %2753 = vmatprep.subr.mxu0 0.0
  %2754 = vmatpush2.msra.mxu0 0.0
  %2755 = vmatprep.subr.mxu0 0.0
  %2756 = vmatpush2.msra.mxu0 0.0
  %2757 = vmatprep.subr.mxu0 0.0
  %2758 = vmatpush2.msra.mxu0 0.0
  %2759 = vmatprep.subr.mxu0 0.0
  %2760 = vmatpush2.msra.mxu0 0.0
  %2761 = vmatprep.subr.mxu0 0.0
  %2762 = vmatpush2.msra.mxu0 0.0
  %2763 = vmatprep.subr.mxu0 0.0
  %2764 = vmatpush2.msra.mxu0 0.0
  %2765 = vmatprep.subr.mxu0 0.0
  %2766 = vmatpush2.msra.mxu0 0.0
  %2767 = vmatprep.subr.mxu0 0.0
  %2768 = vmatpush2.msra.mxu0 0.0
  %2769 = vmatprep.subr.mxu0 0.0
  %2770 = vmatpush2.msra.mxu0 0.0
  %2771 = vmatprep.subr.mxu0 0.0
  %2772 = vmatpush2.msra.mxu0 0.0
  %2773 = vmatprep.subr.mxu0 0.0
  %2774 = vmatpush2.msra.mxu0 0.0
  %2775 = vmatprep.subr.mxu0 0.0
  %2776 = vmatpush2.msra.mxu0 0.0
  %2777 = vmatprep.subr.mxu0 0.0
  %2778 = vmatpush2.msra.mxu0 0.0
  %2779 = vmatprep.subr.mxu0 0.0
  %2780 = vmatpush2.msra.mxu0 0.0
  %2781 = vmatprep.subr.mxu0 0.0
  %2782 = vmatpush2.msra.mxu0 0.0
  %2783 = vmatprep.mubr.f32.mxu0 0.0
  %2784 = vmatmul.mubr.f32.gmra.mxu0 %v2715
  %v2785 = vpop.f32.mrf.mxu0
  %v2786 = vadd.f32 0.0, %v2785
  %v2787 = vpop.f32.mrf.mxu0
  %2788 = vdwg.mxu0
  %v2790 = vsel %vm43, %v2786, 0
  %2792 = vmatprep.subr.mxu0 0.0
  %2793 = vmatpush1.msra.mxu0 0.0
  %2794 = vmatprep.subr.mxu0 0.0
  %2795 = vmatpush1.msra.mxu0 0.0
  %2796 = vmatprep.subr.mxu0 0.0
  %2797 = vmatpush1.msra.mxu0 0.0
  %2798 = vmatprep.subr.mxu0 0.0
  %2799 = vmatpush1.msra.mxu0 0.0
  %2800 = vmatprep.subr.mxu0 0.0
  %2801 = vmatpush1.msra.mxu0 0.0
  %2802 = vmatprep.subr.mxu0 0.0
  %2803 = vmatpush1.msra.mxu0 0.0
  %2804 = vmatprep.subr.mxu0 0.0
  %2805 = vmatpush1.msra.mxu0 0.0
  %2806 = vmatprep.subr.mxu0 0.0
  %2807 = vmatpush1.msra.mxu0 0.0
  %2808 = vmatprep.subr.mxu0 0.0
  %2809 = vmatpush1.msra.mxu0 0.0
  %2810 = vmatprep.subr.mxu0 0.0
  %2811 = vmatpush1.msra.mxu0 0.0
  %2812 = vmatprep.subr.mxu0 0.0
  %2813 = vmatpush1.msra.mxu0 0.0
  %2814 = vmatprep.subr.mxu0 0.0
  %2815 = vmatpush1.msra.mxu0 0.0
  %2816 = vmatprep.subr.mxu0 0.0
  %2817 = vmatpush1.msra.mxu0 0.0
  %2818 = vmatprep.subr.mxu0 0.0
  %2819 = vmatpush1.msra.mxu0 0.0
  %2820 = vmatprep.subr.mxu0 0.0
  %2821 = vmatpush1.msra.mxu0 0.0
  %2822 = vmatprep.subr.mxu0 0.0
  %2823 = vmatpush1.msra.mxu0 %v2790
  %2824 = vmatprep.subr.mxu0 0.0
  %2825 = vmatpush2.msra.mxu0 0.0
  %2826 = vmatprep.subr.mxu0 0.0
  %2827 = vmatpush2.msra.mxu0 0.0
  %2828 = vmatprep.subr.mxu0 0.0
  %2829 = vmatpush2.msra.mxu0 0.0
  %2830 = vmatprep.subr.mxu0 0.0
  %2831 = vmatpush2.msra.mxu0 0.0
  %2832 = vmatprep.subr.mxu0 0.0
  %2833 = vmatpush2.msra.mxu0 0.0
  %2834 = vmatprep.subr.mxu0 0.0
  %2835 = vmatpush2.msra.mxu0 0.0
  %2836 = vmatprep.subr.mxu0 0.0
  %2837 = vmatpush2.msra.mxu0 0.0
  %2838 = vmatprep.subr.mxu0 0.0
  %2839 = vmatpush2.msra.mxu0 0.0
  %2840 = vmatprep.subr.mxu0 0.0
  %2841 = vmatpush2.msra.mxu0 0.0
  %2842 = vmatprep.subr.mxu0 0.0
  %2843 = vmatpush2.msra.mxu0 0.0
  %2844 = vmatprep.subr.mxu0 0.0
  %2845 = vmatpush2.msra.mxu0 0.0
  %2846 = vmatprep.subr.mxu0 0.0
  %2847 = vmatpush2.msra.mxu0 0.0
  %2848 = vmatprep.subr.mxu0 0.0
  %2849 = vmatpush2.msra.mxu0 0.0
  %2850 = vmatprep.subr.mxu0 0.0
  %2851 = vmatpush2.msra.mxu0 0.0
  %2852 = vmatprep.subr.mxu0 0.0
  %2853 = vmatpush2.msra.mxu0 0.0
  %2854 = vmatprep.subr.mxu0 0.0
  %2855 = vmatpush2.msra.mxu0 0.0
  %2856 = vmatprep.mubr.f32.mxu0 0.0
  %2857 = vmatmul.mubr.f32.gmra.mxu0 %v2715
  %v2858 = vpop.f32.mrf.mxu0
  %v2859 = vadd.f32 0.0, %v2858
  %v2860 = vpop.f32.mrf.mxu0
  %2861 = vdwg.mxu0
  %v2863 = vsel %vm198, %v356, 0
  %2865 = vmatprep.subr.mxu0 0.0
  %2866 = vmatpush1.msra.mxu0 0.0
  %2867 = vmatprep.subr.mxu0 0.0
  %2868 = vmatpush1.msra.mxu0 0.0
  %2869 = vmatprep.subr.mxu0 0.0
  %2870 = vmatpush1.msra.mxu0 0.0
  %2871 = vmatprep.subr.mxu0 0.0
  %2872 = vmatpush1.msra.mxu0 0.0
  %2873 = vmatprep.subr.mxu0 0.0
  %2874 = vmatpush1.msra.mxu0 0.0
  %2875 = vmatprep.subr.mxu0 0.0
  %2876 = vmatpush1.msra.mxu0 0.0
  %2877 = vmatprep.subr.mxu0 0.0
  %2878 = vmatpush1.msra.mxu0 0.0
  %2879 = vmatprep.subr.mxu0 0.0
  %2880 = vmatpush1.msra.mxu0 0.0
  %2881 = vmatprep.subr.mxu0 0.0
  %2882 = vmatpush1.msra.mxu0 0.0
  %2883 = vmatprep.subr.mxu0 0.0
  %2884 = vmatpush1.msra.mxu0 0.0
  %2885 = vmatprep.subr.mxu0 0.0
  %2886 = vmatpush1.msra.mxu0 0.0
  %2887 = vmatprep.subr.mxu0 0.0
  %2888 = vmatpush1.msra.mxu0 0.0
  %2889 = vmatprep.subr.mxu0 0.0
  %2890 = vmatpush1.msra.mxu0 0.0
  %2891 = vmatprep.subr.mxu0 0.0
  %2892 = vmatpush1.msra.mxu0 0.0
  %2893 = vmatprep.subr.mxu0 0.0
  %2894 = vmatpush1.msra.mxu0 0.0
  %2895 = vmatprep.subr.mxu0 0.0
  %2896 = vmatpush1.msra.mxu0 %v2569
  %2897 = vmatprep.subr.mxu0 0.0
  %2898 = vmatpush2.msra.mxu0 0.0
  %2899 = vmatprep.subr.mxu0 0.0
  %2900 = vmatpush2.msra.mxu0 0.0
  %2901 = vmatprep.subr.mxu0 0.0
  %2902 = vmatpush2.msra.mxu0 0.0
  %2903 = vmatprep.subr.mxu0 0.0
  %2904 = vmatpush2.msra.mxu0 0.0
  %2905 = vmatprep.subr.mxu0 0.0
  %2906 = vmatpush2.msra.mxu0 0.0
  %2907 = vmatprep.subr.mxu0 0.0
  %2908 = vmatpush2.msra.mxu0 0.0
  %2909 = vmatprep.subr.mxu0 0.0
  %2910 = vmatpush2.msra.mxu0 0.0
  %2911 = vmatprep.subr.mxu0 0.0
  %2912 = vmatpush2.msra.mxu0 0.0
  %2913 = vmatprep.subr.mxu0 0.0
  %2914 = vmatpush2.msra.mxu0 0.0
  %2915 = vmatprep.subr.mxu0 0.0
  %2916 = vmatpush2.msra.mxu0 0.0
  %2917 = vmatprep.subr.mxu0 0.0
  %2918 = vmatpush2.msra.mxu0 0.0
  %2919 = vmatprep.subr.mxu0 0.0
  %2920 = vmatpush2.msra.mxu0 0.0
  %2921 = vmatprep.subr.mxu0 0.0
  %2922 = vmatpush2.msra.mxu0 0.0
  %2923 = vmatprep.subr.mxu0 0.0
  %2924 = vmatpush2.msra.mxu0 0.0
  %2925 = vmatprep.subr.mxu0 0.0
  %2926 = vmatpush2.msra.mxu0 0.0
  %2927 = vmatprep.subr.mxu0 0.0
  %2928 = vmatpush2.msra.mxu0 0.0
  %2929 = vmatprep.mubr.f32.mxu0 0.0
  %2930 = vmatmul.mubr.f32.gmra.mxu0 %v2863
  %v2931 = vpop.f32.mrf.mxu0
  %v2932 = vadd.f32 0.0, %v2931
  %v2933 = vpop.f32.mrf.mxu0
  %2934 = vdwg.mxu0
  %v2935 = vmul.f32 %v2932, 0.1
  %v2936 = vsub.f32 %v20, %v2935
  %v2938 = vsel %vm43, %v2936, 0
  %2940 = vmatprep.subr.mxu0 0.0
  %2941 = vmatpush1.msra.mxu0 0.0
  %2942 = vmatprep.subr.mxu0 0.0
  %2943 = vmatpush1.msra.mxu0 0.0
  %2944 = vmatprep.subr.mxu0 0.0
  %2945 = vmatpush1.msra.mxu0 0.0
  %2946 = vmatprep.subr.mxu0 0.0
  %2947 = vmatpush1.msra.mxu0 0.0
  %2948 = vmatprep.subr.mxu0 0.0
  %2949 = vmatpush1.msra.mxu0 0.0
  %2950 = vmatprep.subr.mxu0 0.0
  %2951 = vmatpush1.msra.mxu0 0.0
  %2952 = vmatprep.subr.mxu0 0.0
  %2953 = vmatpush1.msra.mxu0 0.0
  %2954 = vmatprep.subr.mxu0 0.0
  %2955 = vmatpush1.msra.mxu0 0.0
  %2956 = vmatprep.subr.mxu0 0.0
  %2957 = vmatpush1.msra.mxu0 0.0
  %2958 = vmatprep.subr.mxu0 0.0
  %2959 = vmatpush1.msra.mxu0 0.0
  %2960 = vmatprep.subr.mxu0 0.0
  %2961 = vmatpush1.msra.mxu0 0.0
  %2962 = vmatprep.subr.mxu0 0.0
  %2963 = vmatpush1.msra.mxu0 0.0
  %2964 = vmatprep.subr.mxu0 0.0
  %2965 = vmatpush1.msra.mxu0 0.0
  %2966 = vmatprep.subr.mxu0 0.0
  %2967 = vmatpush1.msra.mxu0 0.0
  %2968 = vmatprep.subr.mxu0 0.0
  %2969 = vmatpush1.msra.mxu0 0.0
  %2970 = vmatprep.subr.mxu0 0.0
  %2971 = vmatpush1.msra.mxu0 %v2938
  %2972 = vmatprep.subr.mxu0 0.0
  %2973 = vmatpush2.msra.mxu0 0.0
  %2974 = vmatprep.subr.mxu0 0.0
  %2975 = vmatpush2.msra.mxu0 0.0
  %2976 = vmatprep.subr.mxu0 0.0
  %2977 = vmatpush2.msra.mxu0 0.0
  %2978 = vmatprep.subr.mxu0 0.0
  %2979 = vmatpush2.msra.mxu0 0.0
  %2980 = vmatprep.subr.mxu0 0.0
  %2981 = vmatpush2.msra.mxu0 0.0
  %2982 = vmatprep.subr.mxu0 0.0
  %2983 = vmatpush2.msra.mxu0 0.0
  %2984 = vmatprep.subr.mxu0 0.0
  %2985 = vmatpush2.msra.mxu0 0.0
  %2986 = vmatprep.subr.mxu0 0.0
  %2987 = vmatpush2.msra.mxu0 0.0
  %2988 = vmatprep.subr.mxu0 0.0
  %2989 = vmatpush2.msra.mxu0 0.0
  %2990 = vmatprep.subr.mxu0 0.0
  %2991 = vmatpush2.msra.mxu0 0.0
  %2992 = vmatprep.subr.mxu0 0.0
  %2993 = vmatpush2.msra.mxu0 0.0
  %2994 = vmatprep.subr.mxu0 0.0
  %2995 = vmatpush2.msra.mxu0 0.0
  %2996 = vmatprep.subr.mxu0 0.0
  %2997 = vmatpush2.msra.mxu0 0.0
  %2998 = vmatprep.subr.mxu0 0.0
  %2999 = vmatpush2.msra.mxu0 0.0
  %3000 = vmatprep.subr.mxu0 0.0
  %3001 = vmatpush2.msra.mxu0 0.0
  %3002 = vmatprep.subr.mxu0 0.0
  %3003 = vmatpush2.msra.mxu0 0.0
  %3004 = vmatprep.mubr.f32.mxu0 0.0
  %3005 = vmatmul.mubr.f32.gmra.mxu0 %v2863
  %v3006 = vpop.f32.mrf.mxu0
  %v3007 = vadd.f32 0.0, %v3006
  %v3008 = vpop.f32.mrf.mxu0
  %3009 = vdwg.mxu0
  %v3010 = vmul.f32 %v3007, 0.1
  %v3011 = vsub.f32 %v2936, %v3010
  %3013 = vrot.lane.b32.xlu0 %v2711, 4
  %v3014 = vpop.permute.xlu0 %3013
  %3016 = vrot.lane.b32.xlu0 %v2786, 8
  %v3017 = vpop.permute.xlu0 %3016
  %3020 = vrot.lane.b32.xlu0 %v2859, 12
  %v3021 = vpop.permute.xlu0 %3020
  %3024 = vrot.lane.b32.xlu0 %v3011, 16
  %v3025 = vpop.permute.xlu0 %3024
  %v3027 = vsel %vm198, %v2638, %v3014
  %v3028 = vsel %vm117, %v3027, %v3017
  %v3029 = vsel %vm39, %v3028, %v3021
  %v3030 = vsel %vm1685, %v3029, %v3025
  %v3032 = vsel %vm1687, %v3030, 0
  %v3035 = vsel %vm43, %v36, 0
  %3037 = vmatprep.subr.mxu0 0.0
  %3038 = vmatpush1.msra.mxu0 0.0
  %3039 = vmatprep.subr.mxu0 0.0
  %3040 = vmatpush1.msra.mxu0 0.0
  %3041 = vmatprep.subr.mxu0 0.0
  %3042 = vmatpush1.msra.mxu0 0.0
  %3043 = vmatprep.subr.mxu0 0.0
  %3044 = vmatpush1.msra.mxu0 0.0
  %3045 = vmatprep.subr.mxu0 0.0
  %3046 = vmatpush1.msra.mxu0 0.0
  %3047 = vmatprep.subr.mxu0 0.0
  %3048 = vmatpush1.msra.mxu0 0.0
  %3049 = vmatprep.subr.mxu0 0.0
  %3050 = vmatpush1.msra.mxu0 0.0
  %3051 = vmatprep.subr.mxu0 0.0
  %3052 = vmatpush1.msra.mxu0 0.0
  %3053 = vmatprep.subr.mxu0 0.0
  %3054 = vmatpush1.msra.mxu0 0.0
  %3055 = vmatprep.subr.mxu0 0.0
  %3056 = vmatpush1.msra.mxu0 0.0
  %3057 = vmatprep.subr.mxu0 0.0
  %3058 = vmatpush1.msra.mxu0 0.0
  %3059 = vmatprep.subr.mxu0 0.0
  %3060 = vmatpush1.msra.mxu0 0.0
  %3061 = vmatprep.subr.mxu0 0.0
  %3062 = vmatpush1.msra.mxu0 0.0
  %3063 = vmatprep.subr.mxu0 0.0
  %3064 = vmatpush1.msra.mxu0 %v3035
  %3065 = vmatprep.subr.mxu0 0.0
  %3066 = vmatpush1.msra.mxu0 %v35
  %3067 = vmatprep.subr.mxu0 0.0
  %3068 = vmatpush1.msra.mxu0 %v34
  %3069 = vmatprep.subr.mxu0 0.0
  %3070 = vmatpush2.msra.mxu0 0.0
  %3071 = vmatprep.subr.mxu0 0.0
  %3072 = vmatpush2.msra.mxu0 0.0
  %3073 = vmatprep.subr.mxu0 0.0
  %3074 = vmatpush2.msra.mxu0 0.0
  %3075 = vmatprep.subr.mxu0 0.0
  %3076 = vmatpush2.msra.mxu0 0.0
  %3077 = vmatprep.subr.mxu0 0.0
  %3078 = vmatpush2.msra.mxu0 0.0
  %3079 = vmatprep.subr.mxu0 0.0
  %3080 = vmatpush2.msra.mxu0 0.0
  %3081 = vmatprep.subr.mxu0 0.0
  %3082 = vmatpush2.msra.mxu0 0.0
  %3083 = vmatprep.subr.mxu0 0.0
  %3084 = vmatpush2.msra.mxu0 0.0
  %3085 = vmatprep.subr.mxu0 0.0
  %3086 = vmatpush2.msra.mxu0 0.0
  %3087 = vmatprep.subr.mxu0 0.0
  %3088 = vmatpush2.msra.mxu0 0.0
  %3089 = vmatprep.subr.mxu0 0.0
  %3090 = vmatpush2.msra.mxu0 0.0
  %3091 = vmatprep.subr.mxu0 0.0
  %3092 = vmatpush2.msra.mxu0 0.0
  %3093 = vmatprep.subr.mxu0 0.0
  %3094 = vmatpush2.msra.mxu0 0.0
  %3095 = vmatprep.subr.mxu0 0.0
  %3096 = vmatpush2.msra.mxu0 0.0
  %3097 = vmatprep.subr.mxu0 0.0
  %3098 = vmatpush2.msra.mxu0 0.0
  %3099 = vmatprep.subr.mxu0 0.0
  %3100 = vmatpush2.msra.mxu0 0.0
  %3101 = vmatprep.mubr.f32.mxu0 0.0
  %3102 = vmatmul.mubr.f32.gmra.mxu0 %v3032
  %v3103 = vpop.f32.mrf.mxu0
  %v3104 = vadd.f32 0.0, %v3103
  %v3105 = vpop.f32.mrf.mxu0
  %3106 = vdwg.mxu0
  %v3107 = vmul.f32 %v3104, 0.5
  %v3108 = vtanh.pop %v3107
  %v3109 = vadd.f32 %v3108, 1.0
  %v3110 = vmul.f32 %v3109, 0.5
  %3111 = vst.msk [vmem:[%s4] sm:$0xff] %vm198, %v1767
  %3112 = vst.msk [vmem:[%s4 + $0x8] sm:$0xff] %vm198, %v2564
  %3113 = vst.msk [vmem:[%s4 + $0x10] sm:$0xf] %vm723, %v2565
  %3114 = vst.msk [vmem:[%s4 + $0x18] sm:$0xf] %vm723, %v3110
  // Predicated region
  $region18: #{san_forward.1} parent=0 // pred_check
    _
  $region19: #{san_forward.1} parent=0 // pred_check_branch
    %3116 = sbr.rel (0) target = $region21
  $region20: #{san_forward.1} parent=0 // pred_region
    _
  $region21: #{san_forward.1} parent=0 // pred_fallthru
    _
  // Predicated region
  $region22: #{san_forward.1} parent=0 // pred_check
    _
  $region23: #{san_forward.1} parent=0 // pred_check_branch
    %3118 = sbr.rel (0) target = $region25
  $region24: #{san_forward.1} parent=0 // pred_region
    _
  $region25: #{san_forward.1} parent=0 // pred_fallthru
    _

</llo_original>
